<compile_context>
chip_gen: v7x
topology: tpu7x:2x2x1
jax: 0.10.0
libtpu: 0.0.40
codegen_flags: <defaults>
</compile_context>

<pallas_src>
import math
import functools

import jax
import jax.numpy as jnp
from jax import lax
from jax.experimental import pallas as pl
from jax.experimental.pallas import tpu as pltpu

_VMEM_LIMIT = 64 * 1024 * 1024


# ---------------------------------------------------------------------------
# Fused CBAM:  x1 = CA(x)*x ;  out = SA(x1)*x1    (single HBM round trip)
# Layout: big data is (C, HW) with HW on lanes; bf16 in / bf16 out, f32 math.
# ---------------------------------------------------------------------------
def _cbam_kernel(x_ref, w1_ref, w2_ref, wsa_ref, o_ref, *, C, H, W, K):
    P = K // 2
    HW = H * W
    x = x_ref[0].astype(jnp.float32)                               # (C, HW)

    # ---- ChannelAttention: sigmoid(fc(avg_pool(x)) + fc(max_pool(x))) ----
    ones_hw = jnp.ones((HW, 1), jnp.float32)
    avg = jnp.dot(x, ones_hw, preferred_element_type=jnp.float32) * (1.0 / HW)  # (C,1) MXU
    mx = jnp.max(x, axis=1, keepdims=True)                                      # (C,1) XLU
    pooled = jnp.concatenate([avg, mx], axis=1)                                 # (C,2)
    # fc: Conv1x1(C->Cr, no bias) -> ReLU -> Conv1x1(Cr->C, no bias), both pooled vecs at once
    h = jnp.maximum(jnp.dot(w1_ref[...], pooled,
                            preferred_element_type=jnp.float32), 0.0)           # (Cr,2) MXU
    f = jnp.dot(w2_ref[...], h, preferred_element_type=jnp.float32)             # (C,2)  MXU
    att_c = jax.nn.sigmoid(f[:, 0:1] + f[:, 1:2])                               # (C,1)
    x1 = x * att_c                                                  # CA(x)*x, stays on-chip

    # ---- SpatialAttention: sigmoid(conv7x7(cat([mean_c(x1), max_c(x1)]))) ----
    ones_c = jnp.ones((1, C), jnp.float32)
    avg_s = jnp.dot(ones_c, x1, preferred_element_type=jnp.float32) * (1.0 / C)  # (1,HW) MXU
    max_s = jnp.max(x1, axis=0, keepdims=True)                                   # (1,HW) XLU

    def unflat_pad(m):                    # (1, HW) -> zero padded (H+2P, W+2P)
        zc = jnp.zeros((1, P), jnp.float32)
        zr = jnp.zeros((P, W + 2 * P), jnp.float32)
        rows = [jnp.concatenate([zc, m[:, y * W:(y + 1) * W], zc], axis=1)
                for y in range(H)]
        return jnp.concatenate([zr] + rows + [zr], axis=0)

    acc = jnp.zeros((H, W), jnp.float32)
    for c, pm in enumerate((unflat_pad(avg_s), unflat_pad(max_s))):
        for dy in range(K):                       # hoisted row (sublane) shift
            slab = pm[dy:dy + H, :]               # (H, W+2P)
            for dx in range(K):                   # cheap lane slice per tap
                acc = acc + wsa_ref[(c * K + dy) * K + dx] * slab[:, dx:dx + W]
    att_s = jax.nn.sigmoid(acc)                   # (H, W)

    # flatten back to a (1, HW) row for the lane-dense broadcast multiply/store
    att_row = jnp.concatenate([att_s[y:y + 1, :] for y in range(H)], axis=1)     # (1,HW)
    o_ref[0] = (x1 * att_row).astype(o_ref.dtype)


def cbam_apply(x, w1, w2, w_sa):
    """x: (N,C,H,W); w1: (C//16,C); w2: (C,C//16); w_sa: (1,2,K,K).
    Returns SA(CA(x)*x) * (CA(x)*x) as bf16 (model runs .half())."""
    N, C, H, W = x.shape
    Cr = w1.shape[0]
    K = w_sa.shape[-1]
    HW = H * W
    xf = x.astype(jnp.bfloat16).reshape(N, C, HW)          # bf16 I/O, lane-dense HW
    wf = w_sa.reshape(-1).astype(jnp.float32)              # 2*K*K scalars -> SMEM
    kern = functools.partial(_cbam_kernel, C=C, H=H, W=W, K=K)
    out = pl.pallas_call(
        kern,
        out_shape=jax.ShapeDtypeStruct((N, C, HW), jnp.bfloat16),
        grid_spec=pltpu.PrefetchScalarGridSpec(
            num_scalar_prefetch=0, grid=(N,),
            in_specs=[pl.BlockSpec((1, C, HW), lambda n: (n, 0, 0)),
                      pl.BlockSpec((Cr, C), lambda n: (0, 0)),
                      pl.BlockSpec((C, Cr), lambda n: (0, 0)),
                      pl.BlockSpec(memory_space=pltpu.MemorySpace.SMEM)],
            out_specs=pl.BlockSpec((1, C, HW), lambda n: (n, 0, 0))),
        compiler_params=pltpu.CompilerParams(
            dimension_semantics=("parallel",),
            vmem_limit_bytes=_VMEM_LIMIT),
    )(xf, w1.astype(jnp.float32), w2.astype(jnp.float32), wf)
    return out.reshape(N, C, H, W)


# ---------------------------------------------------------------------------
# Detect head (one pyramid level):  w(M,C) @ x(C,HW)  + sigmoid + box decode
# Lane-dense HW last dim; decode indices built from reduced (M,1)/(1,T) iotas.
# ---------------------------------------------------------------------------
def _detect_kernel(x_ref, w_ref, b_ref, a_ref, raw_ref, dec_ref, *, no, W, stride):
    # x_ref: (1, C, T) bf16 ; w_ref: (M, C) bf16 ; b_ref/a_ref: (M, 1) f32
    z = jnp.dot(w_ref[...], x_ref[0],
                preferred_element_type=jnp.float32) + b_ref[...]        # (M, T) f32
    raw_ref[0] = z.astype(raw_ref.dtype)                                # pre-sigmoid logits

    y = jax.nn.sigmoid(z)
    M, T = z.shape
    o = lax.broadcasted_iota(jnp.int32, (M, 1), 0) % no                 # (M,1) output index
    hw = pl.program_id(1) * T + lax.broadcasted_iota(jnp.int32, (1, T), 1)  # (1,T)
    gx = (hw % W).astype(jnp.float32)
    gy = (hw // W).astype(jnp.float32)
    g = jnp.where(o == 0, gx, jnp.where(o == 1, gy, 0.0))               # broadcast -> (M,T)

    xy = (y * 2.0 - 0.5 + g) * stride              # (y[...,0:2]*2 - 0.5 + grid)*stride
    wh = (y * 2.0) ** 2 * a_ref[...]               # (y[...,2:4]*2)^2 * anchor_grid
    dec_ref[0] = jnp.where(o < 2, xy, jnp.where(o < 4, wh, y))


def _pick_hw_tile(HW, cap=2048):
    """Largest multiple of 128 <= cap that divides HW, else the full extent.
    (Both choices satisfy the (8,128) block constraint.)"""
    if HW <= cap:
        return HW
    start = (cap // 128) * 128
    for t in range(start, 127, -128):
        if HW % t == 0:
            return t
    return HW
    # TODO(synk): raise `cap` on v5e/v6e (128 MiB VMEM) to cover a whole level;
    # keep ~2048-3200 on v7x (64 MiB VMEM).


def detect_level(feat, w, b, anchors_px, stride, nc, hw_tile_cap=2048):
    """feat: (N,C,H,W); w: (na*no, C); b: (na*no,); anchors_px: (na, 2)."""
    N, C, H, W = feat.shape
    na = anchors_px.shape[0]
    no = nc + 5
    M = na * no
    HW = H * W
    THW = _pick_hw_tile(HW, hw_tile_cap)

    xf = feat.reshape(N, C, HW).astype(jnp.bfloat16)          # NCHW consumed directly
    wb = w.astype(jnp.bfloat16)                               # (M, C)
    bcol = b.reshape(M, 1).astype(jnp.float32)
    col = jnp.arange(M)
    o = col % no
    a_idx = col // no
    acol = jnp.where(o == 2, anchors_px[a_idx, 0],
                     jnp.where(o == 3, anchors_px[a_idx, 1], 1.0)
                     ).astype(jnp.float32).reshape(M, 1)      # tiny (M,1) anchor column

    kern = functools.partial(_detect_kernel, no=no, W=W, stride=float(stride))
    raw, dec = pl.pallas_call(
        kern,
        out_shape=(jax.ShapeDtypeStruct((N, M, HW), jnp.bfloat16),   # raw logits (half-ish)
                   jax.ShapeDtypeStruct((N, M, HW), jnp.float32)),   # decoded boxes
        grid_spec=pltpu.PrefetchScalarGridSpec(
            num_scalar_prefetch=0, grid=(N, HW // THW),
            in_specs=[pl.BlockSpec((1, C, THW), lambda n, t: (n, 0, t)),
                      pl.BlockSpec((M, C), lambda n, t: (0, 0)),
                      pl.BlockSpec((M, 1), lambda n, t: (0, 0)),
                      pl.BlockSpec((M, 1), lambda n, t: (0, 0))],
            out_specs=(pl.BlockSpec((1, M, THW), lambda n, t: (n, 0, t)),
                       pl.BlockSpec((1, M, THW), lambda n, t: (n, 0, t)))),
        compiler_params=pltpu.CompilerParams(
            dimension_semantics=("parallel", "parallel"),
            vmem_limit_bytes=_VMEM_LIMIT),
    )(xf, wb, bcol, acol)

    # Exactly the module's own  .view(bs, na, no, ny, nx).permute(0, 1, 3, 4, 2)
    raw5 = raw.reshape(N, na, no, H, W).transpose(0, 1, 3, 4, 2)   # stays bf16
    dec5 = dec.reshape(N, na, no, H, W).transpose(0, 1, 3, 4, 2)
    z = dec5.reshape(N, na * HW, no)                               # y.view(bs, -1, no)
    return raw5, z


# ---------------------------------------------------------------------------
# Pure-JAX references (for validation only)
# ---------------------------------------------------------------------------
def _cbam_ref(x, w1, w2, w_sa):
    avg = x.mean(axis=(2, 3), keepdims=True)
    mx = x.max(axis=(2, 3), keepdims=True)

    def fc(v):
        h = jnp.maximum(jnp.einsum('rc,ncij->nrij', w1, v), 0.0)
        return jnp.einsum('cr,nrij->ncij', w2, h)

    x1 = x * jax.nn.sigmoid(fc(avg) + fc(mx))
    s = jnp.concatenate([x1.mean(axis=1, keepdims=True),
                         x1.max(axis=1, keepdims=True)], axis=1)
    P = w_sa.shape[-1] // 2
    conv = lax.conv_general_dilated(s, w_sa, (1, 1), [(P, P), (P, P)],
                                    dimension_numbers=('NCHW', 'OIHW', 'NCHW'))
    return x1 * jax.nn.sigmoid(conv)


def _detect_ref(feat, w, b, anchors_px, stride, nc):
    N, C, H, W = feat.shape
    na = anchors_px.shape[0]
    no = nc + 5
    z = jnp.einsum('nchw,mc->nmhw', feat.astype(jnp.bfloat16), w.astype(jnp.bfloat16),
                   preferred_element_type=jnp.float32) + b[None, :, None, None]
    z = z.reshape(N, na, no, H, W).transpose(0, 1, 3, 4, 2)
    y = jax.nn.sigmoid(z)
    ys, xs = jnp.meshgrid(jnp.arange(H), jnp.arange(W), indexing='ij')
    grid = jnp.stack([xs, ys], -1).astype(jnp.float32)
    xy = (y[..., 0:2] * 2.0 - 0.5 + grid) * stride
    wh = (y[..., 2:4] * 2.0) ** 2 * anchors_px[None, :, None, None, :]
    dec = jnp.concatenate([xy, wh, y[..., 4:]], -1)
    return z, dec.reshape(N, -1, no)


# ---------------------------------------------------------------------------
if __name__ == "__main__":
    key = jax.random.PRNGKey(0)
    keys = jax.random.split(key, 10)

    N, C, H, W = 2, 32, 16, 16
    nc, na = 3, 3
    no = nc + 5
    strides = [8.0, 16.0, 32.0]
    # YOLOv5 default anchors in pixel units (== Detect.anchor_grid, cloned before /stride)
    anchors = jnp.array([[10, 13, 16, 30, 33, 23],
                         [30, 61, 62, 45, 59, 119],
                         [116, 90, 156, 198, 373, 326]], jnp.float32).reshape(3, 3, 2)

    x = jax.random.normal(keys[0], (N, C, H, W), jnp.float32)

    # CBAM parameters (ChannelAttention ratio=16, SpatialAttention kernel 7)
    Cr = C // 16
    w1 = jax.random.normal(keys[1], (Cr, C), jnp.float32) * 0.1
    w2 = jax.random.normal(keys[2], (C, Cr), jnp.float32) * 0.1
    w_sa = jax.random.normal(keys[3], (1, 2, 7, 7), jnp.float32) * 0.1

    x_cbam = cbam_apply(x, w1, w2, w_sa)                      # fused CA + SA, one kernel

    # Detect over 3 pyramid levels; level 0 uses the CBAM output, levels 1-2 use
    # synthetic feature maps standing in for the (undefined) backbone outputs.
    ch = [C, 2 * C, 4 * C]
    feats = [x_cbam,
             jax.random.normal(keys[4], (N, ch[1], H // 2, W // 2), jnp.float32),
             jax.random.normal(keys[5], (N, ch[2], H // 4, W // 4), jnp.float32)]

    det_w, det_b = [], []
    col = jnp.arange(na * no)
    o = col % no
    for l in range(3):
        det_w.append(jax.random.normal(keys[6 + l], (na * no, ch[l]), jnp.float32) * 0.01)
        # Model._initialize_biases
        det_b.append(jnp.where(o == 4, math.log(8.0 / (640.0 / strides[l]) ** 2),
                               jnp.where(o >= 5, math.log(0.6 / (nc - 0.99)), 0.0)
                               ).astype(jnp.float32))

    raws, zs = [], []
    for l in range(3):
        raw5, z = detect_level(feats[l], det_w[l], det_b[l], anchors[l], strides[l], nc)
        raws.append(raw5)
        zs.append(z)
    z_all = jnp.concatenate(zs, axis=1)        # Detect inference output: cat(z, 1)
    jax.block_until_ready((x_cbam, z_all, raws[0]))

    # validate against pure-JAX references (refs see the same bf16-quantized inputs)
    x_q = x.astype(jnp.bfloat16).astype(jnp.float32)
    ref_cbam = _cbam_ref(x_q, w1, w2, w_sa)
    assert jnp.allclose(x_cbam.astype(jnp.float32), ref_cbam, rtol=2e-2, atol=2e-2)

    ref_zs = []
    for l in range(3):
        ref_raw, ref_z = _detect_ref(feats[l], det_w[l], det_b[l], anchors[l], strides[l], nc)
        # raw logits stay in bf16 through the epilogue -> looser tolerance
        assert jnp.allclose(raws[l].astype(jnp.float32), ref_raw, rtol=2e-2, atol=2e-2)
        ref_zs.append(ref_z)
    assert jnp.allclose(z_all, jnp.concatenate(ref_zs, axis=1), rtol=1e-2, atol=1e-2)

    print("KERNEL_OK")
</pallas_src>

<mosaic_0001>
module attributes {stable_mosaic.version = 11 : i64} {
  func.func @_cbam_kernel(%arg0: i32, %arg1: memref<1x32x256xbf16, #tpu.memory_space<vmem>>, %arg2: memref<2x32xf32, #tpu.memory_space<vmem>>, %arg3: memref<32x2xf32, #tpu.memory_space<vmem>>, %arg4: memref<98xf32, #tpu.memory_space<smem>>, %arg5: memref<1x32x256xbf16, #tpu.memory_space<vmem>>) attributes {dimension_semantics = [#tpu.dimension_semantics<parallel>], iteration_bounds = array<i64: 2>, scalar_prefetch = 0 : i64, scratch_operands = 0 : i64, tpu.core_type = #tpu.core_type<tc>, window_params = [{transform_indices = @transform_0, window_bounds = array<i64: 1, 32, 256>}, {pipeline_mode = #tpu.pipeline_mode<synchronous>, transform_indices = @transform_1, window_bounds = array<i64: 2, 32>}, {pipeline_mode = #tpu.pipeline_mode<synchronous>, transform_indices = @transform_2, window_bounds = array<i64: 32, 2>}, {transform_indices = @transform_3, window_bounds = array<i64: 98>}, {transform_indices = @transform_4, window_bounds = array<i64: 1, 32, 256>}]} {
    %c0 = arith.constant 0 : index
    %c0_0 = arith.constant 0 : index
    %c0_1 = arith.constant 0 : index
    %0 = vector.load %arg1[%c0, %c0_0, %c0_1] : memref<1x32x256xbf16, #tpu.memory_space<vmem>>, vector<1x32x256xbf16>
    %1 = vector.shape_cast %0 : vector<1x32x256xbf16> to vector<32x256xbf16>
    %2 = arith.extf %1 : vector<32x256xbf16> to vector<32x256xf32>
    %cst = arith.constant 1.000000e+00 : f32
    %3 = vector.broadcast %cst : f32 to vector<256x1xf32>
    %cst_2 = arith.constant dense<0.000000e+00> : vector<32x1xf32>
    %4 = tpu.matmul %2, %3, %cst_2 {dimension_numbers = #tpu.dot_dimension_numbers<[1], [0], [0], [1], [0, 0, 1, 1], [], []>} : vector<32x256xf32>, vector<256x1xf32>, vector<32x1xf32> -> vector<32x1xf32>
    %cst_3 = arith.constant 3.906250e-03 : f32
    %5 = vector.broadcast %cst_3 : f32 to vector<32x1xf32>
    %6 = arith.mulf %4, %5 : vector<32x1xf32>
    %cst_4 = arith.constant dense<0xFF800000> : vector<32xf32>
    %7 = vector.multi_reduction <maximumf>, %2, %cst_4 [1] : vector<32x256xf32> to vector<32xf32>
    %8 = vector.shape_cast %7 : vector<32xf32> to vector<32x1xf32>
    %9 = tpu.concatenate %6, %8 in 1 : vector<32x1xf32>, vector<32x1xf32> -> vector<32x2xf32>
    %c0_5 = arith.constant 0 : index
    %c0_6 = arith.constant 0 : index
    %10 = vector.load %arg2[%c0_5, %c0_6] : memref<2x32xf32, #tpu.memory_space<vmem>>, vector<2x32xf32>
    %cst_7 = arith.constant dense<0.000000e+00> : vector<2x2xf32>
    %11 = tpu.matmul %10, %9, %cst_7 {dimension_numbers = #tpu.dot_dimension_numbers<[1], [0], [0], [1], [0, 0, 1, 1], [], []>} : vector<2x32xf32>, vector<32x2xf32>, vector<2x2xf32> -> vector<2x2xf32>
    %cst_8 = arith.constant 0.000000e+00 : f32
    %12 = vector.broadcast %cst_8 : f32 to vector<2x2xf32>
    %13 = arith.maximumf %11, %12 : vector<2x2xf32>
    %c0_9 = arith.constant 0 : index
    %c0_10 = arith.constant 0 : index
    %14 = vector.load %arg3[%c0_9, %c0_10] : memref<32x2xf32, #tpu.memory_space<vmem>>, vector<32x2xf32>
    %cst_11 = arith.constant dense<0.000000e+00> : vector<32x2xf32>
    %15 = tpu.matmul %14, %13, %cst_11 {dimension_numbers = #tpu.dot_dimension_numbers<[1], [0], [0], [1], [0, 0, 1, 1], [], []>} : vector<32x2xf32>, vector<2x2xf32>, vector<32x2xf32> -> vector<32x2xf32>
    %16 = vector.extract_strided_slice %15 {offsets = [0, 0], sizes = [32, 1], strides = [1, 1]} : vector<32x2xf32> to vector<32x1xf32>
    %17 = vector.extract_strided_slice %15 {offsets = [0, 1], sizes = [32, 1], strides = [1, 1]} : vector<32x2xf32> to vector<32x1xf32>
    %18 = arith.addf %16, %17 : vector<32x1xf32>
    %19 = arith.negf %18 : vector<32x1xf32>
    %20 = math.exp %19 : vector<32x1xf32>
    %cst_12 = arith.constant 1.000000e+00 : f32
    %21 = vector.broadcast %cst_12 : f32 to vector<32x1xf32>
    %22 = arith.addf %21, %20 : vector<32x1xf32>
    %23 = arith.divf %21, %22 : vector<32x1xf32>
    %24 = vector.broadcast %23 : vector<32x1xf32> to vector<32x256xf32>
    %25 = arith.mulf %2, %24 : vector<32x256xf32>
    %cst_13 = arith.constant 1.000000e+00 : f32
    %26 = vector.broadcast %cst_13 : f32 to vector<1x32xf32>
    %cst_14 = arith.constant dense<0.000000e+00> : vector<1x256xf32>
    %27 = tpu.matmul %26, %25, %cst_14 {dimension_numbers = #tpu.dot_dimension_numbers<[1], [0], [0], [1], [0, 0, 1, 1], [], []>} : vector<1x32xf32>, vector<32x256xf32>, vector<1x256xf32> -> vector<1x256xf32>
    %cst_15 = arith.constant 3.125000e-02 : f32
    %28 = vector.broadcast %cst_15 : f32 to vector<1x256xf32>
    %29 = arith.mulf %27, %28 : vector<1x256xf32>
    %cst_16 = arith.constant dense<0xFF800000> : vector<256xf32>
    %30 = vector.multi_reduction <maximumf>, %25, %cst_16 [0] : vector<32x256xf32> to vector<256xf32>
    %31 = vector.shape_cast %30 : vector<256xf32> to vector<1x256xf32>
    %cst_17 = arith.constant 0.000000e+00 : f32
    %32 = vector.broadcast %cst_17 : f32 to vector<16x16xf32>
    %cst_18 = arith.constant 0.000000e+00 : f32
    %33 = vector.broadcast %cst_18 : f32 to vector<1x3xf32>
    %cst_19 = arith.constant 0.000000e+00 : f32
    %34 = vector.broadcast %cst_19 : f32 to vector<3x22xf32>
    %35 = vector.extract_strided_slice %29 {offsets = [0, 0], sizes = [1, 16], strides = [1, 1]} : vector<1x256xf32> to vector<1x16xf32>
    %36 = tpu.concatenate %33, %35, %33 in 1 : vector<1x3xf32>, vector<1x16xf32>, vector<1x3xf32> -> vector<1x22xf32>
    %37 = vector.extract_strided_slice %29 {offsets = [0, 16], sizes = [1, 16], strides = [1, 1]} : vector<1x256xf32> to vector<1x16xf32>
    %38 = tpu.concatenate %33, %37, %33 in 1 : vector<1x3xf32>, vector<1x16xf32>, vector<1x3xf32> -> vector<1x22xf32>
    %39 = vector.extract_strided_slice %29 {offsets = [0, 32], sizes = [1, 16], strides = [1, 1]} : vector<1x256xf32> to vector<1x16xf32>
    %40 = tpu.concatenate %33, %39, %33 in 1 : vector<1x3xf32>, vector<1x16xf32>, vector<1x3xf32> -> vector<1x22xf32>
    %41 = vector.extract_strided_slice %29 {offsets = [0, 48], sizes = [1, 16], strides = [1, 1]} : vector<1x256xf32> to vector<1x16xf32>
    %42 = tpu.concatenate %33, %41, %33 in 1 : vector<1x3xf32>, vector<1x16xf32>, vector<1x3xf32> -> vector<1x22xf32>
    %43 = vector.extract_strided_slice %29 {offsets = [0, 64], sizes = [1, 16], strides = [1, 1]} : vector<1x256xf32> to vector<1x16xf32>
    %44 = tpu.concatenate %33, %43, %33 in 1 : vector<1x3xf32>, vector<1x16xf32>, vector<1x3xf32> -> vector<1x22xf32>
    %45 = vector.extract_strided_slice %29 {offsets = [0, 80], sizes = [1, 16], strides = [1, 1]} : vector<1x256xf32> to vector<1x16xf32>
    %46 = tpu.concatenate %33, %45, %33 in 1 : vector<1x3xf32>, vector<1x16xf32>, vector<1x3xf32> -> vector<1x22xf32>
    %47 = vector.extract_strided_slice %29 {offsets = [0, 96], sizes = [1, 16], strides = [1, 1]} : vector<1x256xf32> to vector<1x16xf32>
    %48 = tpu.concatenate %33, %47, %33 in 1 : vector<1x3xf32>, vector<1x16xf32>, vector<1x3xf32> -> vector<1x22xf32>
    %49 = vector.extract_strided_slice %29 {offsets = [0, 112], sizes = [1, 16], strides = [1, 1]} : vector<1x256xf32> to vector<1x16xf32>
    %50 = tpu.concatenate %33, %49, %33 in 1 : vector<1x3xf32>, vector<1x16xf32>, vector<1x3xf32> -> vector<1x22xf32>
    %51 = vector.extract_strided_slice %29 {offsets = [0, 128], sizes = [1, 16], strides = [1, 1]} : vector<1x256xf32> to vector<1x16xf32>
    %52 = tpu.concatenate %33, %51, %33 in 1 : vector<1x3xf32>, vector<1x16xf32>, vector<1x3xf32> -> vector<1x22xf32>
    %53 = vector.extract_strided_slice %29 {offsets = [0, 144], sizes = [1, 16], strides = [1, 1]} : vector<1x256xf32> to vector<1x16xf32>
    %54 = tpu.concatenate %33, %53, %33 in 1 : vector<1x3xf32>, vector<1x16xf32>, vector<1x3xf32> -> vector<1x22xf32>
    %55 = vector.extract_strided_slice %29 {offsets = [0, 160], sizes = [1, 16], strides = [1, 1]} : vector<1x256xf32> to vector<1x16xf32>
    %56 = tpu.concatenate %33, %55, %33 in 1 : vector<1x3xf32>, vector<1x16xf32>, vector<1x3xf32> -> vector<1x22xf32>
    %57 = vector.extract_strided_slice %29 {offsets = [0, 176], sizes = [1, 16], strides = [1, 1]} : vector<1x256xf32> to vector<1x16xf32>
    %58 = tpu.concatenate %33, %57, %33 in 1 : vector<1x3xf32>, vector<1x16xf32>, vector<1x3xf32> -> vector<1x22xf32>
    %59 = vector.extract_strided_slice %29 {offsets = [0, 192], sizes = [1, 16], strides = [1, 1]} : vector<1x256xf32> to vector<1x16xf32>
    %60 = tpu.concatenate %33, %59, %33 in 1 : vector<1x3xf32>, vector<1x16xf32>, vector<1x3xf32> -> vector<1x22xf32>
    %61 = vector.extract_strided_slice %29 {offsets = [0, 208], sizes = [1, 16], strides = [1, 1]} : vector<1x256xf32> to vector<1x16xf32>
    %62 = tpu.concatenate %33, %61, %33 in 1 : vector<1x3xf32>, vector<1x16xf32>, vector<1x3xf32> -> vector<1x22xf32>
    %63 = vector.extract_strided_slice %29 {offsets = [0, 224], sizes = [1, 16], strides = [1, 1]} : vector<1x256xf32> to vector<1x16xf32>
    %64 = tpu.concatenate %33, %63, %33 in 1 : vector<1x3xf32>, vector<1x16xf32>, vector<1x3xf32> -> vector<1x22xf32>
    %65 = vector.extract_strided_slice %29 {offsets = [0, 240], sizes = [1, 16], strides = [1, 1]} : vector<1x256xf32> to vector<1x16xf32>
    %66 = tpu.concatenate %33, %65, %33 in 1 : vector<1x3xf32>, vector<1x16xf32>, vector<1x3xf32> -> vector<1x22xf32>
    %67 = tpu.concatenate %34, %36, %38, %40, %42, %44, %46, %48, %50, %52, %54, %56, %58, %60, %62, %64 in 0 : vector<3x22xf32>, vector<1x22xf32>, vector<1x22xf32>, vector<1x22xf32>, vector<1x22xf32>, vector<1x22xf32>, vector<1x22xf32>, vector<1x22xf32>, vector<1x22xf32>, vector<1x22xf32>, vector<1x22xf32>, vector<1x22xf32>, vector<1x22xf32>, vector<1x22xf32>, vector<1x22xf32>, vector<1x22xf32> -> vector<18x22xf32>
    %68 = tpu.concatenate %66, %34 in 0 : vector<1x22xf32>, vector<3x22xf32> -> vector<4x22xf32>
    %69 = tpu.concatenate %67, %68 in 0 : vector<18x22xf32>, vector<4x22xf32> -> vector<22x22xf32>
    %cst_20 = arith.constant 0.000000e+00 : f32
    %70 = vector.broadcast %cst_20 : f32 to vector<1x3xf32>
    %cst_21 = arith.constant 0.000000e+00 : f32
    %71 = vector.broadcast %cst_21 : f32 to vector<3x22xf32>
    %72 = vector.extract_strided_slice %31 {offsets = [0, 0], sizes = [1, 16], strides = [1, 1]} : vector<1x256xf32> to vector<1x16xf32>
    %73 = tpu.concatenate %70, %72, %70 in 1 : vector<1x3xf32>, vector<1x16xf32>, vector<1x3xf32> -> vector<1x22xf32>
    %74 = vector.extract_strided_slice %31 {offsets = [0, 16], sizes = [1, 16], strides = [1, 1]} : vector<1x256xf32> to vector<1x16xf32>
    %75 = tpu.concatenate %70, %74, %70 in 1 : vector<1x3xf32>, vector<1x16xf32>, vector<1x3xf32> -> vector<1x22xf32>
    %76 = vector.extract_strided_slice %31 {offsets = [0, 32], sizes = [1, 16], strides = [1, 1]} : vector<1x256xf32> to vector<1x16xf32>
    %77 = tpu.concatenate %70, %76, %70 in 1 : vector<1x3xf32>, vector<1x16xf32>, vector<1x3xf32> -> vector<1x22xf32>
    %78 = vector.extract_strided_slice %31 {offsets = [0, 48], sizes = [1, 16], strides = [1, 1]} : vector<1x256xf32> to vector<1x16xf32>
    %79 = tpu.concatenate %70, %78, %70 in 1 : vector<1x3xf32>, vector<1x16xf32>, vector<1x3xf32> -> vector<1x22xf32>
    %80 = vector.extract_strided_slice %31 {offsets = [0, 64], sizes = [1, 16], strides = [1, 1]} : vector<1x256xf32> to vector<1x16xf32>
    %81 = tpu.concatenate %70, %80, %70 in 1 : vector<1x3xf32>, vector<1x16xf32>, vector<1x3xf32> -> vector<1x22xf32>
    %82 = vector.extract_strided_slice %31 {offsets = [0, 80], sizes = [1, 16], strides = [1, 1]} : vector<1x256xf32> to vector<1x16xf32>
    %83 = tpu.concatenate %70, %82, %70 in 1 : vector<1x3xf32>, vector<1x16xf32>, vector<1x3xf32> -> vector<1x22xf32>
    %84 = vector.extract_strided_slice %31 {offsets = [0, 96], sizes = [1, 16], strides = [1, 1]} : vector<1x256xf32> to vector<1x16xf32>
    %85 = tpu.concatenate %70, %84, %70 in 1 : vector<1x3xf32>, vector<1x16xf32>, vector<1x3xf32> -> vector<1x22xf32>
    %86 = vector.extract_strided_slice %31 {offsets = [0, 112], sizes = [1, 16], strides = [1, 1]} : vector<1x256xf32> to vector<1x16xf32>
    %87 = tpu.concatenate %70, %86, %70 in 1 : vector<1x3xf32>, vector<1x16xf32>, vector<1x3xf32> -> vector<1x22xf32>
    %88 = vector.extract_strided_slice %31 {offsets = [0, 128], sizes = [1, 16], strides = [1, 1]} : vector<1x256xf32> to vector<1x16xf32>
    %89 = tpu.concatenate %70, %88, %70 in 1 : vector<1x3xf32>, vector<1x16xf32>, vector<1x3xf32> -> vector<1x22xf32>
    %90 = vector.extract_strided_slice %31 {offsets = [0, 144], sizes = [1, 16], strides = [1, 1]} : vector<1x256xf32> to vector<1x16xf32>
    %91 = tpu.concatenate %70, %90, %70 in 1 : vector<1x3xf32>, vector<1x16xf32>, vector<1x3xf32> -> vector<1x22xf32>
    %92 = vector.extract_strided_slice %31 {offsets = [0, 160], sizes = [1, 16], strides = [1, 1]} : vector<1x256xf32> to vector<1x16xf32>
    %93 = tpu.concatenate %70, %92, %70 in 1 : vector<1x3xf32>, vector<1x16xf32>, vector<1x3xf32> -> vector<1x22xf32>
    %94 = vector.extract_strided_slice %31 {offsets = [0, 176], sizes = [1, 16], strides = [1, 1]} : vector<1x256xf32> to vector<1x16xf32>
    %95 = tpu.concatenate %70, %94, %70 in 1 : vector<1x3xf32>, vector<1x16xf32>, vector<1x3xf32> -> vector<1x22xf32>
    %96 = vector.extract_strided_slice %31 {offsets = [0, 192], sizes = [1, 16], strides = [1, 1]} : vector<1x256xf32> to vector<1x16xf32>
    %97 = tpu.concatenate %70, %96, %70 in 1 : vector<1x3xf32>, vector<1x16xf32>, vector<1x3xf32> -> vector<1x22xf32>
    %98 = vector.extract_strided_slice %31 {offsets = [0, 208], sizes = [1, 16], strides = [1, 1]} : vector<1x256xf32> to vector<1x16xf32>
    %99 = tpu.concatenate %70, %98, %70 in 1 : vector<1x3xf32>, vector<1x16xf32>, vector<1x3xf32> -> vector<1x22xf32>
    %100 = vector.extract_strided_slice %31 {offsets = [0, 224], sizes = [1, 16], strides = [1, 1]} : vector<1x256xf32> to vector<1x16xf32>
    %101 = tpu.concatenate %70, %100, %70 in 1 : vector<1x3xf32>, vector<1x16xf32>, vector<1x3xf32> -> vector<1x22xf32>
    %102 = vector.extract_strided_slice %31 {offsets = [0, 240], sizes = [1, 16], strides = [1, 1]} : vector<1x256xf32> to vector<1x16xf32>
    %103 = tpu.concatenate %70, %102, %70 in 1 : vector<1x3xf32>, vector<1x16xf32>, vector<1x3xf32> -> vector<1x22xf32>
    %104 = tpu.concatenate %71, %73, %75, %77, %79, %81, %83, %85, %87, %89, %91, %93, %95, %97, %99, %101 in 0 : vector<3x22xf32>, vector<1x22xf32>, vector<1x22xf32>, vector<1x22xf32>, vector<1x22xf32>, vector<1x22xf32>, vector<1x22xf32>, vector<1x22xf32>, vector<1x22xf32>, vector<1x22xf32>, vector<1x22xf32>, vector<1x22xf32>, vector<1x22xf32>, vector<1x22xf32>, vector<1x22xf32>, vector<1x22xf32> -> vector<18x22xf32>
    %105 = tpu.concatenate %103, %71 in 0 : vector<1x22xf32>, vector<3x22xf32> -> vector<4x22xf32>
    %106 = tpu.concatenate %104, %105 in 0 : vector<18x22xf32>, vector<4x22xf32> -> vector<22x22xf32>
    %107 = vector.extract_strided_slice %69 {offsets = [0, 0], sizes = [16, 22], strides = [1, 1]} : vector<22x22xf32> to vector<16x22xf32>
    %c0_22 = arith.constant 0 : index
    %108 = memref.load %arg4[%c0_22] : memref<98xf32, #tpu.memory_space<smem>>
    %109 = vector.extract_strided_slice %107 {offsets = [0, 0], sizes = [16, 16], strides = [1, 1]} : vector<16x22xf32> to vector<16x16xf32>
    %110 = vector.broadcast %108 : f32 to vector<16x16xf32>
    %111 = arith.mulf %110, %109 : vector<16x16xf32>
    %112 = arith.addf %32, %111 : vector<16x16xf32>
    %c1 = arith.constant 1 : index
    %113 = memref.load %arg4[%c1] : memref<98xf32, #tpu.memory_space<smem>>
    %114 = vector.extract_strided_slice %107 {offsets = [0, 1], sizes = [16, 16], strides = [1, 1]} : vector<16x22xf32> to vector<16x16xf32>
    %115 = vector.broadcast %113 : f32 to vector<16x16xf32>
    %116 = arith.mulf %115, %114 : vector<16x16xf32>
    %117 = arith.addf %112, %116 : vector<16x16xf32>
    %c2 = arith.constant 2 : index
    %118 = memref.load %arg4[%c2] : memref<98xf32, #tpu.memory_space<smem>>
    %119 = vector.extract_strided_slice %107 {offsets = [0, 2], sizes = [16, 16], strides = [1, 1]} : vector<16x22xf32> to vector<16x16xf32>
    %120 = vector.broadcast %118 : f32 to vector<16x16xf32>
    %121 = arith.mulf %120, %119 : vector<16x16xf32>
    %122 = arith.addf %117, %121 : vector<16x16xf32>
    %c3 = arith.constant 3 : index
    %123 = memref.load %arg4[%c3] : memref<98xf32, #tpu.memory_space<smem>>
    %124 = vector.extract_strided_slice %107 {offsets = [0, 3], sizes = [16, 16], strides = [1, 1]} : vector<16x22xf32> to vector<16x16xf32>
    %125 = vector.broadcast %123 : f32 to vector<16x16xf32>
    %126 = arith.mulf %125, %124 : vector<16x16xf32>
    %127 = arith.addf %122, %126 : vector<16x16xf32>
    %c4 = arith.constant 4 : index
    %128 = memref.load %arg4[%c4] : memref<98xf32, #tpu.memory_space<smem>>
    %129 = vector.extract_strided_slice %107 {offsets = [0, 4], sizes = [16, 16], strides = [1, 1]} : vector<16x22xf32> to vector<16x16xf32>
    %130 = vector.broadcast %128 : f32 to vector<16x16xf32>
    %131 = arith.mulf %130, %129 : vector<16x16xf32>
    %132 = arith.addf %127, %131 : vector<16x16xf32>
    %c5 = arith.constant 5 : index
    %133 = memref.load %arg4[%c5] : memref<98xf32, #tpu.memory_space<smem>>
    %134 = vector.extract_strided_slice %107 {offsets = [0, 5], sizes = [16, 16], strides = [1, 1]} : vector<16x22xf32> to vector<16x16xf32>
    %135 = vector.broadcast %133 : f32 to vector<16x16xf32>
    %136 = arith.mulf %135, %134 : vector<16x16xf32>
    %137 = arith.addf %132, %136 : vector<16x16xf32>
    %c6 = arith.constant 6 : index
    %138 = memref.load %arg4[%c6] : memref<98xf32, #tpu.memory_space<smem>>
    %139 = vector.extract_strided_slice %107 {offsets = [0, 6], sizes = [16, 16], strides = [1, 1]} : vector<16x22xf32> to vector<16x16xf32>
    %140 = vector.broadcast %138 : f32 to vector<16x16xf32>
    %141 = arith.mulf %140, %139 : vector<16x16xf32>
    %142 = arith.addf %137, %141 : vector<16x16xf32>
    %143 = vector.extract_strided_slice %69 {offsets = [1, 0], sizes = [16, 22], strides = [1, 1]} : vector<22x22xf32> to vector<16x22xf32>
    %c7 = arith.constant 7 : index
    %144 = memref.load %arg4[%c7] : memref<98xf32, #tpu.memory_space<smem>>
    %145 = vector.extract_strided_slice %143 {offsets = [0, 0], sizes = [16, 16], strides = [1, 1]} : vector<16x22xf32> to vector<16x16xf32>
    %146 = vector.broadcast %144 : f32 to vector<16x16xf32>
    %147 = arith.mulf %146, %145 : vector<16x16xf32>
    %148 = arith.addf %142, %147 : vector<16x16xf32>
    %c8 = arith.constant 8 : index
    %149 = memref.load %arg4[%c8] : memref<98xf32, #tpu.memory_space<smem>>
    %150 = vector.extract_strided_slice %143 {offsets = [0, 1], sizes = [16, 16], strides = [1, 1]} : vector<16x22xf32> to vector<16x16xf32>
    %151 = vector.broadcast %149 : f32 to vector<16x16xf32>
    %152 = arith.mulf %151, %150 : vector<16x16xf32>
    %153 = arith.addf %148, %152 : vector<16x16xf32>
    %c9 = arith.constant 9 : index
    %154 = memref.load %arg4[%c9] : memref<98xf32, #tpu.memory_space<smem>>
    %155 = vector.extract_strided_slice %143 {offsets = [0, 2], sizes = [16, 16], strides = [1, 1]} : vector<16x22xf32> to vector<16x16xf32>
    %156 = vector.broadcast %154 : f32 to vector<16x16xf32>
    %157 = arith.mulf %156, %155 : vector<16x16xf32>
    %158 = arith.addf %153, %157 : vector<16x16xf32>
    %c10 = arith.constant 10 : index
    %159 = memref.load %arg4[%c10] : memref<98xf32, #tpu.memory_space<smem>>
    %160 = vector.extract_strided_slice %143 {offsets = [0, 3], sizes = [16, 16], strides = [1, 1]} : vector<16x22xf32> to vector<16x16xf32>
    %161 = vector.broadcast %159 : f32 to vector<16x16xf32>
    %162 = arith.mulf %161, %160 : vector<16x16xf32>
    %163 = arith.addf %158, %162 : vector<16x16xf32>
    %c11 = arith.constant 11 : index
    %164 = memref.load %arg4[%c11] : memref<98xf32, #tpu.memory_space<smem>>
    %165 = vector.extract_strided_slice %143 {offsets = [0, 4], sizes = [16, 16], strides = [1, 1]} : vector<16x22xf32> to vector<16x16xf32>
    %166 = vector.broadcast %164 : f32 to vector<16x16xf32>
    %167 = arith.mulf %166, %165 : vector<16x16xf32>
    %168 = arith.addf %163, %167 : vector<16x16xf32>
    %c12 = arith.constant 12 : index
    %169 = memref.load %arg4[%c12] : memref<98xf32, #tpu.memory_space<smem>>
    %170 = vector.extract_strided_slice %143 {offsets = [0, 5], sizes = [16, 16], strides = [1, 1]} : vector<16x22xf32> to vector<16x16xf32>
    %171 = vector.broadcast %169 : f32 to vector<16x16xf32>
    %172 = arith.mulf %171, %170 : vector<16x16xf32>
    %173 = arith.addf %168, %172 : vector<16x16xf32>
    %c13 = arith.constant 13 : index
    %174 = memref.load %arg4[%c13] : memref<98xf32, #tpu.memory_space<smem>>
    %175 = vector.extract_strided_slice %143 {offsets = [0, 6], sizes = [16, 16], strides = [1, 1]} : vector<16x22xf32> to vector<16x16xf32>
    %176 = vector.broadcast %174 : f32 to vector<16x16xf32>
    %177 = arith.mulf %176, %175 : vector<16x16xf32>
    %178 = arith.addf %173, %177 : vector<16x16xf32>
    %179 = vector.extract_strided_slice %69 {offsets = [2, 0], sizes = [16, 22], strides = [1, 1]} : vector<22x22xf32> to vector<16x22xf32>
    %c14 = arith.constant 14 : index
    %180 = memref.load %arg4[%c14] : memref<98xf32, #tpu.memory_space<smem>>
    %181 = vector.extract_strided_slice %179 {offsets = [0, 0], sizes = [16, 16], strides = [1, 1]} : vector<16x22xf32> to vector<16x16xf32>
    %182 = vector.broadcast %180 : f32 to vector<16x16xf32>
    %183 = arith.mulf %182, %181 : vector<16x16xf32>
    %184 = arith.addf %178, %183 : vector<16x16xf32>
    %c15 = arith.constant 15 : index
    %185 = memref.load %arg4[%c15] : memref<98xf32, #tpu.memory_space<smem>>
    %186 = vector.extract_strided_slice %179 {offsets = [0, 1], sizes = [16, 16], strides = [1, 1]} : vector<16x22xf32> to vector<16x16xf32>
    %187 = vector.broadcast %185 : f32 to vector<16x16xf32>
    %188 = arith.mulf %187, %186 : vector<16x16xf32>
    %189 = arith.addf %184, %188 : vector<16x16xf32>
    %c16 = arith.constant 16 : index
    %190 = memref.load %arg4[%c16] : memref<98xf32, #tpu.memory_space<smem>>
    %191 = vector.extract_strided_slice %179 {offsets = [0, 2], sizes = [16, 16], strides = [1, 1]} : vector<16x22xf32> to vector<16x16xf32>
    %192 = vector.broadcast %190 : f32 to vector<16x16xf32>
    %193 = arith.mulf %192, %191 : vector<16x16xf32>
    %194 = arith.addf %189, %193 : vector<16x16xf32>
    %c17 = arith.constant 17 : index
    %195 = memref.load %arg4[%c17] : memref<98xf32, #tpu.memory_space<smem>>
    %196 = vector.extract_strided_slice %179 {offsets = [0, 3], sizes = [16, 16], strides = [1, 1]} : vector<16x22xf32> to vector<16x16xf32>
    %197 = vector.broadcast %195 : f32 to vector<16x16xf32>
    %198 = arith.mulf %197, %196 : vector<16x16xf32>
    %199 = arith.addf %194, %198 : vector<16x16xf32>
    %c18 = arith.constant 18 : index
    %200 = memref.load %arg4[%c18] : memref<98xf32, #tpu.memory_space<smem>>
    %201 = vector.extract_strided_slice %179 {offsets = [0, 4], sizes = [16, 16], strides = [1, 1]} : vector<16x22xf32> to vector<16x16xf32>
    %202 = vector.broadcast %200 : f32 to vector<16x16xf32>
    %203 = arith.mulf %202, %201 : vector<16x16xf32>
    %204 = arith.addf %199, %203 : vector<16x16xf32>
    %c19 = arith.constant 19 : index
    %205 = memref.load %arg4[%c19] : memref<98xf32, #tpu.memory_space<smem>>
    %206 = vector.extract_strided_slice %179 {offsets = [0, 5], sizes = [16, 16], strides = [1, 1]} : vector<16x22xf32> to vector<16x16xf32>
    %207 = vector.broadcast %205 : f32 to vector<16x16xf32>
    %208 = arith.mulf %207, %206 : vector<16x16xf32>
    %209 = arith.addf %204, %208 : vector<16x16xf32>
    %c20 = arith.constant 20 : index
    %210 = memref.load %arg4[%c20] : memref<98xf32, #tpu.memory_space<smem>>
    %211 = vector.extract_strided_slice %179 {offsets = [0, 6], sizes = [16, 16], strides = [1, 1]} : vector<16x22xf32> to vector<16x16xf32>
    %212 = vector.broadcast %210 : f32 to vector<16x16xf32>
    %213 = arith.mulf %212, %211 : vector<16x16xf32>
    %214 = arith.addf %209, %213 : vector<16x16xf32>
    %215 = vector.extract_strided_slice %69 {offsets = [3, 0], sizes = [16, 22], strides = [1, 1]} : vector<22x22xf32> to vector<16x22xf32>
    %c21 = arith.constant 21 : index
    %216 = memref.load %arg4[%c21] : memref<98xf32, #tpu.memory_space<smem>>
    %217 = vector.extract_strided_slice %215 {offsets = [0, 0], sizes = [16, 16], strides = [1, 1]} : vector<16x22xf32> to vector<16x16xf32>
    %218 = vector.broadcast %216 : f32 to vector<16x16xf32>
    %219 = arith.mulf %218, %217 : vector<16x16xf32>
    %220 = arith.addf %214, %219 : vector<16x16xf32>
    %c22 = arith.constant 22 : index
    %221 = memref.load %arg4[%c22] : memref<98xf32, #tpu.memory_space<smem>>
    %222 = vector.extract_strided_slice %215 {offsets = [0, 1], sizes = [16, 16], strides = [1, 1]} : vector<16x22xf32> to vector<16x16xf32>
    %223 = vector.broadcast %221 : f32 to vector<16x16xf32>
    %224 = arith.mulf %223, %222 : vector<16x16xf32>
    %225 = arith.addf %220, %224 : vector<16x16xf32>
    %c23 = arith.constant 23 : index
    %226 = memref.load %arg4[%c23] : memref<98xf32, #tpu.memory_space<smem>>
    %227 = vector.extract_strided_slice %215 {offsets = [0, 2], sizes = [16, 16], strides = [1, 1]} : vector<16x22xf32> to vector<16x16xf32>
    %228 = vector.broadcast %226 : f32 to vector<16x16xf32>
    %229 = arith.mulf %228, %227 : vector<16x16xf32>
    %230 = arith.addf %225, %229 : vector<16x16xf32>
    %c24 = arith.constant 24 : index
    %231 = memref.load %arg4[%c24] : memref<98xf32, #tpu.memory_space<smem>>
    %232 = vector.extract_strided_slice %215 {offsets = [0, 3], sizes = [16, 16], strides = [1, 1]} : vector<16x22xf32> to vector<16x16xf32>
    %233 = vector.broadcast %231 : f32 to vector<16x16xf32>
    %234 = arith.mulf %233, %232 : vector<16x16xf32>
    %235 = arith.addf %230, %234 : vector<16x16xf32>
    %c25 = arith.constant 25 : index
    %236 = memref.load %arg4[%c25] : memref<98xf32, #tpu.memory_space<smem>>
    %237 = vector.extract_strided_slice %215 {offsets = [0, 4], sizes = [16, 16], strides = [1, 1]} : vector<16x22xf32> to vector<16x16xf32>
    %238 = vector.broadcast %236 : f32 to vector<16x16xf32>
    %239 = arith.mulf %238, %237 : vector<16x16xf32>
    %240 = arith.addf %235, %239 : vector<16x16xf32>
    %c26 = arith.constant 26 : index
    %241 = memref.load %arg4[%c26] : memref<98xf32, #tpu.memory_space<smem>>
    %242 = vector.extract_strided_slice %215 {offsets = [0, 5], sizes = [16, 16], strides = [1, 1]} : vector<16x22xf32> to vector<16x16xf32>
    %243 = vector.broadcast %241 : f32 to vector<16x16xf32>
    %244 = arith.mulf %243, %242 : vector<16x16xf32>
    %245 = arith.addf %240, %244 : vector<16x16xf32>
    %c27 = arith.constant 27 : index
    %246 = memref.load %arg4[%c27] : memref<98xf32, #tpu.memory_space<smem>>
    %247 = vector.extract_strided_slice %215 {offsets = [0, 6], sizes = [16, 16], strides = [1, 1]} : vector<16x22xf32> to vector<16x16xf32>
    %248 = vector.broadcast %246 : f32 to vector<16x16xf32>
    %249 = arith.mulf %248, %247 : vector<16x16xf32>
    %250 = arith.addf %245, %249 : vector<16x16xf32>
    %251 = vector.extract_strided_slice %69 {offsets = [4, 0], sizes = [16, 22], strides = [1, 1]} : vector<22x22xf32> to vector<16x22xf32>
    %c28 = arith.constant 28 : index
    %252 = memref.load %arg4[%c28] : memref<98xf32, #tpu.memory_space<smem>>
    %253 = vector.extract_strided_slice %251 {offsets = [0, 0], sizes = [16, 16], strides = [1, 1]} : vector<16x22xf32> to vector<16x16xf32>
    %254 = vector.broadcast %252 : f32 to vector<16x16xf32>
    %255 = arith.mulf %254, %253 : vector<16x16xf32>
    %256 = arith.addf %250, %255 : vector<16x16xf32>
    %c29 = arith.constant 29 : index
    %257 = memref.load %arg4[%c29] : memref<98xf32, #tpu.memory_space<smem>>
    %258 = vector.extract_strided_slice %251 {offsets = [0, 1], sizes = [16, 16], strides = [1, 1]} : vector<16x22xf32> to vector<16x16xf32>
    %259 = vector.broadcast %257 : f32 to vector<16x16xf32>
    %260 = arith.mulf %259, %258 : vector<16x16xf32>
    %261 = arith.addf %256, %260 : vector<16x16xf32>
    %c30 = arith.constant 30 : index
    %262 = memref.load %arg4[%c30] : memref<98xf32, #tpu.memory_space<smem>>
    %263 = vector.extract_strided_slice %251 {offsets = [0, 2], sizes = [16, 16], strides = [1, 1]} : vector<16x22xf32> to vector<16x16xf32>
    %264 = vector.broadcast %262 : f32 to vector<16x16xf32>
    %265 = arith.mulf %264, %263 : vector<16x16xf32>
    %266 = arith.addf %261, %265 : vector<16x16xf32>
    %c31 = arith.constant 31 : index
    %267 = memref.load %arg4[%c31] : memref<98xf32, #tpu.memory_space<smem>>
    %268 = vector.extract_strided_slice %251 {offsets = [0, 3], sizes = [16, 16], strides = [1, 1]} : vector<16x22xf32> to vector<16x16xf32>
    %269 = vector.broadcast %267 : f32 to vector<16x16xf32>
    %270 = arith.mulf %269, %268 : vector<16x16xf32>
    %271 = arith.addf %266, %270 : vector<16x16xf32>
    %c32 = arith.constant 32 : index
    %272 = memref.load %arg4[%c32] : memref<98xf32, #tpu.memory_space<smem>>
    %273 = vector.extract_strided_slice %251 {offsets = [0, 4], sizes = [16, 16], strides = [1, 1]} : vector<16x22xf32> to vector<16x16xf32>
    %274 = vector.broadcast %272 : f32 to vector<16x16xf32>
    %275 = arith.mulf %274, %273 : vector<16x16xf32>
    %276 = arith.addf %271, %275 : vector<16x16xf32>
    %c33 = arith.constant 33 : index
    %277 = memref.load %arg4[%c33] : memref<98xf32, #tpu.memory_space<smem>>
    %278 = vector.extract_strided_slice %251 {offsets = [0, 5], sizes = [16, 16], strides = [1, 1]} : vector<16x22xf32> to vector<16x16xf32>
    %279 = vector.broadcast %277 : f32 to vector<16x16xf32>
    %280 = arith.mulf %279, %278 : vector<16x16xf32>
    %281 = arith.addf %276, %280 : vector<16x16xf32>
    %c34 = arith.constant 34 : index
    %282 = memref.load %arg4[%c34] : memref<98xf32, #tpu.memory_space<smem>>
    %283 = vector.extract_strided_slice %251 {offsets = [0, 6], sizes = [16, 16], strides = [1, 1]} : vector<16x22xf32> to vector<16x16xf32>
    %284 = vector.broadcast %282 : f32 to vector<16x16xf32>
    %285 = arith.mulf %284, %283 : vector<16x16xf32>
    %286 = arith.addf %281, %285 : vector<16x16xf32>
    %287 = vector.extract_strided_slice %69 {offsets = [5, 0], sizes = [16, 22], strides = [1, 1]} : vector<22x22xf32> to vector<16x22xf32>
    %c35 = arith.constant 35 : index
    %288 = memref.load %arg4[%c35] : memref<98xf32, #tpu.memory_space<smem>>
    %289 = vector.extract_strided_slice %287 {offsets = [0, 0], sizes = [16, 16], strides = [1, 1]} : vector<16x22xf32> to vector<16x16xf32>
    %290 = vector.broadcast %288 : f32 to vector<16x16xf32>
    %291 = arith.mulf %290, %289 : vector<16x16xf32>
    %292 = arith.addf %286, %291 : vector<16x16xf32>
    %c36 = arith.constant 36 : index
    %293 = memref.load %arg4[%c36] : memref<98xf32, #tpu.memory_space<smem>>
    %294 = vector.extract_strided_slice %287 {offsets = [0, 1], sizes = [16, 16], strides = [1, 1]} : vector<16x22xf32> to vector<16x16xf32>
    %295 = vector.broadcast %293 : f32 to vector<16x16xf32>
    %296 = arith.mulf %295, %294 : vector<16x16xf32>
    %297 = arith.addf %292, %296 : vector<16x16xf32>
    %c37 = arith.constant 37 : index
    %298 = memref.load %arg4[%c37] : memref<98xf32, #tpu.memory_space<smem>>
    %299 = vector.extract_strided_slice %287 {offsets = [0, 2], sizes = [16, 16], strides = [1, 1]} : vector<16x22xf32> to vector<16x16xf32>
    %300 = vector.broadcast %298 : f32 to vector<16x16xf32>
    %301 = arith.mulf %300, %299 : vector<16x16xf32>
    %302 = arith.addf %297, %301 : vector<16x16xf32>
    %c38 = arith.constant 38 : index
    %303 = memref.load %arg4[%c38] : memref<98xf32, #tpu.memory_space<smem>>
    %304 = vector.extract_strided_slice %287 {offsets = [0, 3], sizes = [16, 16], strides = [1, 1]} : vector<16x22xf32> to vector<16x16xf32>
    %305 = vector.broadcast %303 : f32 to vector<16x16xf32>
    %306 = arith.mulf %305, %304 : vector<16x16xf32>
    %307 = arith.addf %302, %306 : vector<16x16xf32>
    %c39 = arith.constant 39 : index
    %308 = memref.load %arg4[%c39] : memref<98xf32, #tpu.memory_space<smem>>
    %309 = vector.extract_strided_slice %287 {offsets = [0, 4], sizes = [16, 16], strides = [1, 1]} : vector<16x22xf32> to vector<16x16xf32>
    %310 = vector.broadcast %308 : f32 to vector<16x16xf32>
    %311 = arith.mulf %310, %309 : vector<16x16xf32>
    %312 = arith.addf %307, %311 : vector<16x16xf32>
    %c40 = arith.constant 40 : index
    %313 = memref.load %arg4[%c40] : memref<98xf32, #tpu.memory_space<smem>>
    %314 = vector.extract_strided_slice %287 {offsets = [0, 5], sizes = [16, 16], strides = [1, 1]} : vector<16x22xf32> to vector<16x16xf32>
    %315 = vector.broadcast %313 : f32 to vector<16x16xf32>
    %316 = arith.mulf %315, %314 : vector<16x16xf32>
    %317 = arith.addf %312, %316 : vector<16x16xf32>
    %c41 = arith.constant 41 : index
    %318 = memref.load %arg4[%c41] : memref<98xf32, #tpu.memory_space<smem>>
    %319 = vector.extract_strided_slice %287 {offsets = [0, 6], sizes = [16, 16], strides = [1, 1]} : vector<16x22xf32> to vector<16x16xf32>
    %320 = vector.broadcast %318 : f32 to vector<16x16xf32>
    %321 = arith.mulf %320, %319 : vector<16x16xf32>
    %322 = arith.addf %317, %321 : vector<16x16xf32>
    %323 = vector.extract_strided_slice %69 {offsets = [6, 0], sizes = [16, 22], strides = [1, 1]} : vector<22x22xf32> to vector<16x22xf32>
    %c42 = arith.constant 42 : index
    %324 = memref.load %arg4[%c42] : memref<98xf32, #tpu.memory_space<smem>>
    %325 = vector.extract_strided_slice %323 {offsets = [0, 0], sizes = [16, 16], strides = [1, 1]} : vector<16x22xf32> to vector<16x16xf32>
    %326 = vector.broadcast %324 : f32 to vector<16x16xf32>
    %327 = arith.mulf %326, %325 : vector<16x16xf32>
    %328 = arith.addf %322, %327 : vector<16x16xf32>
    %c43 = arith.constant 43 : index
    %329 = memref.load %arg4[%c43] : memref<98xf32, #tpu.memory_space<smem>>
    %330 = vector.extract_strided_slice %323 {offsets = [0, 1], sizes = [16, 16], strides = [1, 1]} : vector<16x22xf32> to vector<16x16xf32>
    %331 = vector.broadcast %329 : f32 to vector<16x16xf32>
    %332 = arith.mulf %331, %330 : vector<16x16xf32>
    %333 = arith.addf %328, %332 : vector<16x16xf32>
    %c44 = arith.constant 44 : index
    %334 = memref.load %arg4[%c44] : memref<98xf32, #tpu.memory_space<smem>>
    %335 = vector.extract_strided_slice %323 {offsets = [0, 2], sizes = [16, 16], strides = [1, 1]} : vector<16x22xf32> to vector<16x16xf32>
    %336 = vector.broadcast %334 : f32 to vector<16x16xf32>
    %337 = arith.mulf %336, %335 : vector<16x16xf32>
    %338 = arith.addf %333, %337 : vector<16x16xf32>
    %c45 = arith.constant 45 : index
    %339 = memref.load %arg4[%c45] : memref<98xf32, #tpu.memory_space<smem>>
    %340 = vector.extract_strided_slice %323 {offsets = [0, 3], sizes = [16, 16], strides = [1, 1]} : vector<16x22xf32> to vector<16x16xf32>
    %341 = vector.broadcast %339 : f32 to vector<16x16xf32>
    %342 = arith.mulf %341, %340 : vector<16x16xf32>
    %343 = arith.addf %338, %342 : vector<16x16xf32>
    %c46 = arith.constant 46 : index
    %344 = memref.load %arg4[%c46] : memref<98xf32, #tpu.memory_space<smem>>
    %345 = vector.extract_strided_slice %323 {offsets = [0, 4], sizes = [16, 16], strides = [1, 1]} : vector<16x22xf32> to vector<16x16xf32>
    %346 = vector.broadcast %344 : f32 to vector<16x16xf32>
    %347 = arith.mulf %346, %345 : vector<16x16xf32>
    %348 = arith.addf %343, %347 : vector<16x16xf32>
    %c47 = arith.constant 47 : index
    %349 = memref.load %arg4[%c47] : memref<98xf32, #tpu.memory_space<smem>>
    %350 = vector.extract_strided_slice %323 {offsets = [0, 5], sizes = [16, 16], strides = [1, 1]} : vector<16x22xf32> to vector<16x16xf32>
    %351 = vector.broadcast %349 : f32 to vector<16x16xf32>
    %352 = arith.mulf %351, %350 : vector<16x16xf32>
    %353 = arith.addf %348, %352 : vector<16x16xf32>
    %c48 = arith.constant 48 : index
    %354 = memref.load %arg4[%c48] : memref<98xf32, #tpu.memory_space<smem>>
    %355 = vector.extract_strided_slice %323 {offsets = [0, 6], sizes = [16, 16], strides = [1, 1]} : vector<16x22xf32> to vector<16x16xf32>
    %356 = vector.broadcast %354 : f32 to vector<16x16xf32>
    %357 = arith.mulf %356, %355 : vector<16x16xf32>
    %358 = arith.addf %353, %357 : vector<16x16xf32>
    %359 = vector.extract_strided_slice %106 {offsets = [0, 0], sizes = [16, 22], strides = [1, 1]} : vector<22x22xf32> to vector<16x22xf32>
    %c49 = arith.constant 49 : index
    %360 = memref.load %arg4[%c49] : memref<98xf32, #tpu.memory_space<smem>>
    %361 = vector.extract_strided_slice %359 {offsets = [0, 0], sizes = [16, 16], strides = [1, 1]} : vector<16x22xf32> to vector<16x16xf32>
    %362 = vector.broadcast %360 : f32 to vector<16x16xf32>
    %363 = arith.mulf %362, %361 : vector<16x16xf32>
    %364 = arith.addf %358, %363 : vector<16x16xf32>
    %c50 = arith.constant 50 : index
    %365 = memref.load %arg4[%c50] : memref<98xf32, #tpu.memory_space<smem>>
    %366 = vector.extract_strided_slice %359 {offsets = [0, 1], sizes = [16, 16], strides = [1, 1]} : vector<16x22xf32> to vector<16x16xf32>
    %367 = vector.broadcast %365 : f32 to vector<16x16xf32>
    %368 = arith.mulf %367, %366 : vector<16x16xf32>
    %369 = arith.addf %364, %368 : vector<16x16xf32>
    %c51 = arith.constant 51 : index
    %370 = memref.load %arg4[%c51] : memref<98xf32, #tpu.memory_space<smem>>
    %371 = vector.extract_strided_slice %359 {offsets = [0, 2], sizes = [16, 16], strides = [1, 1]} : vector<16x22xf32> to vector<16x16xf32>
    %372 = vector.broadcast %370 : f32 to vector<16x16xf32>
    %373 = arith.mulf %372, %371 : vector<16x16xf32>
    %374 = arith.addf %369, %373 : vector<16x16xf32>
    %c52 = arith.constant 52 : index
    %375 = memref.load %arg4[%c52] : memref<98xf32, #tpu.memory_space<smem>>
    %376 = vector.extract_strided_slice %359 {offsets = [0, 3], sizes = [16, 16], strides = [1, 1]} : vector<16x22xf32> to vector<16x16xf32>
    %377 = vector.broadcast %375 : f32 to vector<16x16xf32>
    %378 = arith.mulf %377, %376 : vector<16x16xf32>
    %379 = arith.addf %374, %378 : vector<16x16xf32>
    %c53 = arith.constant 53 : index
    %380 = memref.load %arg4[%c53] : memref<98xf32, #tpu.memory_space<smem>>
    %381 = vector.extract_strided_slice %359 {offsets = [0, 4], sizes = [16, 16], strides = [1, 1]} : vector<16x22xf32> to vector<16x16xf32>
    %382 = vector.broadcast %380 : f32 to vector<16x16xf32>
    %383 = arith.mulf %382, %381 : vector<16x16xf32>
    %384 = arith.addf %379, %383 : vector<16x16xf32>
    %c54 = arith.constant 54 : index
    %385 = memref.load %arg4[%c54] : memref<98xf32, #tpu.memory_space<smem>>
    %386 = vector.extract_strided_slice %359 {offsets = [0, 5], sizes = [16, 16], strides = [1, 1]} : vector<16x22xf32> to vector<16x16xf32>
    %387 = vector.broadcast %385 : f32 to vector<16x16xf32>
    %388 = arith.mulf %387, %386 : vector<16x16xf32>
    %389 = arith.addf %384, %388 : vector<16x16xf32>
    %c55 = arith.constant 55 : index
    %390 = memref.load %arg4[%c55] : memref<98xf32, #tpu.memory_space<smem>>
    %391 = vector.extract_strided_slice %359 {offsets = [0, 6], sizes = [16, 16], strides = [1, 1]} : vector<16x22xf32> to vector<16x16xf32>
    %392 = vector.broadcast %390 : f32 to vector<16x16xf32>
    %393 = arith.mulf %392, %391 : vector<16x16xf32>
    %394 = arith.addf %389, %393 : vector<16x16xf32>
    %395 = vector.extract_strided_slice %106 {offsets = [1, 0], sizes = [16, 22], strides = [1, 1]} : vector<22x22xf32> to vector<16x22xf32>
    %c56 = arith.constant 56 : index
    %396 = memref.load %arg4[%c56] : memref<98xf32, #tpu.memory_space<smem>>
    %397 = vector.extract_strided_slice %395 {offsets = [0, 0], sizes = [16, 16], strides = [1, 1]} : vector<16x22xf32> to vector<16x16xf32>
    %398 = vector.broadcast %396 : f32 to vector<16x16xf32>
    %399 = arith.mulf %398, %397 : vector<16x16xf32>
    %400 = arith.addf %394, %399 : vector<16x16xf32>
    %c57 = arith.constant 57 : index
    %401 = memref.load %arg4[%c57] : memref<98xf32, #tpu.memory_space<smem>>
    %402 = vector.extract_strided_slice %395 {offsets = [0, 1], sizes = [16, 16], strides = [1, 1]} : vector<16x22xf32> to vector<16x16xf32>
    %403 = vector.broadcast %401 : f32 to vector<16x16xf32>
    %404 = arith.mulf %403, %402 : vector<16x16xf32>
    %405 = arith.addf %400, %404 : vector<16x16xf32>
    %c58 = arith.constant 58 : index
    %406 = memref.load %arg4[%c58] : memref<98xf32, #tpu.memory_space<smem>>
    %407 = vector.extract_strided_slice %395 {offsets = [0, 2], sizes = [16, 16], strides = [1, 1]} : vector<16x22xf32> to vector<16x16xf32>
    %408 = vector.broadcast %406 : f32 to vector<16x16xf32>
    %409 = arith.mulf %408, %407 : vector<16x16xf32>
    %410 = arith.addf %405, %409 : vector<16x16xf32>
    %c59 = arith.constant 59 : index
    %411 = memref.load %arg4[%c59] : memref<98xf32, #tpu.memory_space<smem>>
    %412 = vector.extract_strided_slice %395 {offsets = [0, 3], sizes = [16, 16], strides = [1, 1]} : vector<16x22xf32> to vector<16x16xf32>
    %413 = vector.broadcast %411 : f32 to vector<16x16xf32>
    %414 = arith.mulf %413, %412 : vector<16x16xf32>
    %415 = arith.addf %410, %414 : vector<16x16xf32>
    %c60 = arith.constant 60 : index
    %416 = memref.load %arg4[%c60] : memref<98xf32, #tpu.memory_space<smem>>
    %417 = vector.extract_strided_slice %395 {offsets = [0, 4], sizes = [16, 16], strides = [1, 1]} : vector<16x22xf32> to vector<16x16xf32>
    %418 = vector.broadcast %416 : f32 to vector<16x16xf32>
    %419 = arith.mulf %418, %417 : vector<16x16xf32>
    %420 = arith.addf %415, %419 : vector<16x16xf32>
    %c61 = arith.constant 61 : index
    %421 = memref.load %arg4[%c61] : memref<98xf32, #tpu.memory_space<smem>>
    %422 = vector.extract_strided_slice %395 {offsets = [0, 5], sizes = [16, 16], strides = [1, 1]} : vector<16x22xf32> to vector<16x16xf32>
    %423 = vector.broadcast %421 : f32 to vector<16x16xf32>
    %424 = arith.mulf %423, %422 : vector<16x16xf32>
    %425 = arith.addf %420, %424 : vector<16x16xf32>
    %c62 = arith.constant 62 : index
    %426 = memref.load %arg4[%c62] : memref<98xf32, #tpu.memory_space<smem>>
    %427 = vector.extract_strided_slice %395 {offsets = [0, 6], sizes = [16, 16], strides = [1, 1]} : vector<16x22xf32> to vector<16x16xf32>
    %428 = vector.broadcast %426 : f32 to vector<16x16xf32>
    %429 = arith.mulf %428, %427 : vector<16x16xf32>
    %430 = arith.addf %425, %429 : vector<16x16xf32>
    %431 = vector.extract_strided_slice %106 {offsets = [2, 0], sizes = [16, 22], strides = [1, 1]} : vector<22x22xf32> to vector<16x22xf32>
    %c63 = arith.constant 63 : index
    %432 = memref.load %arg4[%c63] : memref<98xf32, #tpu.memory_space<smem>>
    %433 = vector.extract_strided_slice %431 {offsets = [0, 0], sizes = [16, 16], strides = [1, 1]} : vector<16x22xf32> to vector<16x16xf32>
    %434 = vector.broadcast %432 : f32 to vector<16x16xf32>
    %435 = arith.mulf %434, %433 : vector<16x16xf32>
    %436 = arith.addf %430, %435 : vector<16x16xf32>
    %c64 = arith.constant 64 : index
    %437 = memref.load %arg4[%c64] : memref<98xf32, #tpu.memory_space<smem>>
    %438 = vector.extract_strided_slice %431 {offsets = [0, 1], sizes = [16, 16], strides = [1, 1]} : vector<16x22xf32> to vector<16x16xf32>
    %439 = vector.broadcast %437 : f32 to vector<16x16xf32>
    %440 = arith.mulf %439, %438 : vector<16x16xf32>
    %441 = arith.addf %436, %440 : vector<16x16xf32>
    %c65 = arith.constant 65 : index
    %442 = memref.load %arg4[%c65] : memref<98xf32, #tpu.memory_space<smem>>
    %443 = vector.extract_strided_slice %431 {offsets = [0, 2], sizes = [16, 16], strides = [1, 1]} : vector<16x22xf32> to vector<16x16xf32>
    %444 = vector.broadcast %442 : f32 to vector<16x16xf32>
    %445 = arith.mulf %444, %443 : vector<16x16xf32>
    %446 = arith.addf %441, %445 : vector<16x16xf32>
    %c66 = arith.constant 66 : index
    %447 = memref.load %arg4[%c66] : memref<98xf32, #tpu.memory_space<smem>>
    %448 = vector.extract_strided_slice %431 {offsets = [0, 3], sizes = [16, 16], strides = [1, 1]} : vector<16x22xf32> to vector<16x16xf32>
    %449 = vector.broadcast %447 : f32 to vector<16x16xf32>
    %450 = arith.mulf %449, %448 : vector<16x16xf32>
    %451 = arith.addf %446, %450 : vector<16x16xf32>
    %c67 = arith.constant 67 : index
    %452 = memref.load %arg4[%c67] : memref<98xf32, #tpu.memory_space<smem>>
    %453 = vector.extract_strided_slice %431 {offsets = [0, 4], sizes = [16, 16], strides = [1, 1]} : vector<16x22xf32> to vector<16x16xf32>
    %454 = vector.broadcast %452 : f32 to vector<16x16xf32>
    %455 = arith.mulf %454, %453 : vector<16x16xf32>
    %456 = arith.addf %451, %455 : vector<16x16xf32>
    %c68 = arith.constant 68 : index
    %457 = memref.load %arg4[%c68] : memref<98xf32, #tpu.memory_space<smem>>
    %458 = vector.extract_strided_slice %431 {offsets = [0, 5], sizes = [16, 16], strides = [1, 1]} : vector<16x22xf32> to vector<16x16xf32>
    %459 = vector.broadcast %457 : f32 to vector<16x16xf32>
    %460 = arith.mulf %459, %458 : vector<16x16xf32>
    %461 = arith.addf %456, %460 : vector<16x16xf32>
    %c69 = arith.constant 69 : index
    %462 = memref.load %arg4[%c69] : memref<98xf32, #tpu.memory_space<smem>>
    %463 = vector.extract_strided_slice %431 {offsets = [0, 6], sizes = [16, 16], strides = [1, 1]} : vector<16x22xf32> to vector<16x16xf32>
    %464 = vector.broadcast %462 : f32 to vector<16x16xf32>
    %465 = arith.mulf %464, %463 : vector<16x16xf32>
    %466 = arith.addf %461, %465 : vector<16x16xf32>
    %467 = vector.extract_strided_slice %106 {offsets = [3, 0], sizes = [16, 22], strides = [1, 1]} : vector<22x22xf32> to vector<16x22xf32>
    %c70 = arith.constant 70 : index
    %468 = memref.load %arg4[%c70] : memref<98xf32, #tpu.memory_space<smem>>
    %469 = vector.extract_strided_slice %467 {offsets = [0, 0], sizes = [16, 16], strides = [1, 1]} : vector<16x22xf32> to vector<16x16xf32>
    %470 = vector.broadcast %468 : f32 to vector<16x16xf32>
    %471 = arith.mulf %470, %469 : vector<16x16xf32>
    %472 = arith.addf %466, %471 : vector<16x16xf32>
    %c71 = arith.constant 71 : index
    %473 = memref.load %arg4[%c71] : memref<98xf32, #tpu.memory_space<smem>>
    %474 = vector.extract_strided_slice %467 {offsets = [0, 1], sizes = [16, 16], strides = [1, 1]} : vector<16x22xf32> to vector<16x16xf32>
    %475 = vector.broadcast %473 : f32 to vector<16x16xf32>
    %476 = arith.mulf %475, %474 : vector<16x16xf32>
    %477 = arith.addf %472, %476 : vector<16x16xf32>
    %c72 = arith.constant 72 : index
    %478 = memref.load %arg4[%c72] : memref<98xf32, #tpu.memory_space<smem>>
    %479 = vector.extract_strided_slice %467 {offsets = [0, 2], sizes = [16, 16], strides = [1, 1]} : vector<16x22xf32> to vector<16x16xf32>
    %480 = vector.broadcast %478 : f32 to vector<16x16xf32>
    %481 = arith.mulf %480, %479 : vector<16x16xf32>
    %482 = arith.addf %477, %481 : vector<16x16xf32>
    %c73 = arith.constant 73 : index
    %483 = memref.load %arg4[%c73] : memref<98xf32, #tpu.memory_space<smem>>
    %484 = vector.extract_strided_slice %467 {offsets = [0, 3], sizes = [16, 16], strides = [1, 1]} : vector<16x22xf32> to vector<16x16xf32>
    %485 = vector.broadcast %483 : f32 to vector<16x16xf32>
    %486 = arith.mulf %485, %484 : vector<16x16xf32>
    %487 = arith.addf %482, %486 : vector<16x16xf32>
    %c74 = arith.constant 74 : index
    %488 = memref.load %arg4[%c74] : memref<98xf32, #tpu.memory_space<smem>>
    %489 = vector.extract_strided_slice %467 {offsets = [0, 4], sizes = [16, 16], strides = [1, 1]} : vector<16x22xf32> to vector<16x16xf32>
    %490 = vector.broadcast %488 : f32 to vector<16x16xf32>
    %491 = arith.mulf %490, %489 : vector<16x16xf32>
    %492 = arith.addf %487, %491 : vector<16x16xf32>
    %c75 = arith.constant 75 : index
    %493 = memref.load %arg4[%c75] : memref<98xf32, #tpu.memory_space<smem>>
    %494 = vector.extract_strided_slice %467 {offsets = [0, 5], sizes = [16, 16], strides = [1, 1]} : vector<16x22xf32> to vector<16x16xf32>
    %495 = vector.broadcast %493 : f32 to vector<16x16xf32>
    %496 = arith.mulf %495, %494 : vector<16x16xf32>
    %497 = arith.addf %492, %496 : vector<16x16xf32>
    %c76 = arith.constant 76 : index
    %498 = memref.load %arg4[%c76] : memref<98xf32, #tpu.memory_space<smem>>
    %499 = vector.extract_strided_slice %467 {offsets = [0, 6], sizes = [16, 16], strides = [1, 1]} : vector<16x22xf32> to vector<16x16xf32>
    %500 = vector.broadcast %498 : f32 to vector<16x16xf32>
    %501 = arith.mulf %500, %499 : vector<16x16xf32>
    %502 = arith.addf %497, %501 : vector<16x16xf32>
    %503 = vector.extract_strided_slice %106 {offsets = [4, 0], sizes = [16, 22], strides = [1, 1]} : vector<22x22xf32> to vector<16x22xf32>
    %c77 = arith.constant 77 : index
    %504 = memref.load %arg4[%c77] : memref<98xf32, #tpu.memory_space<smem>>
    %505 = vector.extract_strided_slice %503 {offsets = [0, 0], sizes = [16, 16], strides = [1, 1]} : vector<16x22xf32> to vector<16x16xf32>
    %506 = vector.broadcast %504 : f32 to vector<16x16xf32>
    %507 = arith.mulf %506, %505 : vector<16x16xf32>
    %508 = arith.addf %502, %507 : vector<16x16xf32>
    %c78 = arith.constant 78 : index
    %509 = memref.load %arg4[%c78] : memref<98xf32, #tpu.memory_space<smem>>
    %510 = vector.extract_strided_slice %503 {offsets = [0, 1], sizes = [16, 16], strides = [1, 1]} : vector<16x22xf32> to vector<16x16xf32>
    %511 = vector.broadcast %509 : f32 to vector<16x16xf32>
    %512 = arith.mulf %511, %510 : vector<16x16xf32>
    %513 = arith.addf %508, %512 : vector<16x16xf32>
    %c79 = arith.constant 79 : index
    %514 = memref.load %arg4[%c79] : memref<98xf32, #tpu.memory_space<smem>>
    %515 = vector.extract_strided_slice %503 {offsets = [0, 2], sizes = [16, 16], strides = [1, 1]} : vector<16x22xf32> to vector<16x16xf32>
    %516 = vector.broadcast %514 : f32 to vector<16x16xf32>
    %517 = arith.mulf %516, %515 : vector<16x16xf32>
    %518 = arith.addf %513, %517 : vector<16x16xf32>
    %c80 = arith.constant 80 : index
    %519 = memref.load %arg4[%c80] : memref<98xf32, #tpu.memory_space<smem>>
    %520 = vector.extract_strided_slice %503 {offsets = [0, 3], sizes = [16, 16], strides = [1, 1]} : vector<16x22xf32> to vector<16x16xf32>
    %521 = vector.broadcast %519 : f32 to vector<16x16xf32>
    %522 = arith.mulf %521, %520 : vector<16x16xf32>
    %523 = arith.addf %518, %522 : vector<16x16xf32>
    %c81 = arith.constant 81 : index
    %524 = memref.load %arg4[%c81] : memref<98xf32, #tpu.memory_space<smem>>
    %525 = vector.extract_strided_slice %503 {offsets = [0, 4], sizes = [16, 16], strides = [1, 1]} : vector<16x22xf32> to vector<16x16xf32>
    %526 = vector.broadcast %524 : f32 to vector<16x16xf32>
    %527 = arith.mulf %526, %525 : vector<16x16xf32>
    %528 = arith.addf %523, %527 : vector<16x16xf32>
    %c82 = arith.constant 82 : index
    %529 = memref.load %arg4[%c82] : memref<98xf32, #tpu.memory_space<smem>>
    %530 = vector.extract_strided_slice %503 {offsets = [0, 5], sizes = [16, 16], strides = [1, 1]} : vector<16x22xf32> to vector<16x16xf32>
    %531 = vector.broadcast %529 : f32 to vector<16x16xf32>
    %532 = arith.mulf %531, %530 : vector<16x16xf32>
    %533 = arith.addf %528, %532 : vector<16x16xf32>
    %c83 = arith.constant 83 : index
    %534 = memref.load %arg4[%c83] : memref<98xf32, #tpu.memory_space<smem>>
    %535 = vector.extract_strided_slice %503 {offsets = [0, 6], sizes = [16, 16], strides = [1, 1]} : vector<16x22xf32> to vector<16x16xf32>
    %536 = vector.broadcast %534 : f32 to vector<16x16xf32>
    %537 = arith.mulf %536, %535 : vector<16x16xf32>
    %538 = arith.addf %533, %537 : vector<16x16xf32>
    %539 = vector.extract_strided_slice %106 {offsets = [5, 0], sizes = [16, 22], strides = [1, 1]} : vector<22x22xf32> to vector<16x22xf32>
    %c84 = arith.constant 84 : index
    %540 = memref.load %arg4[%c84] : memref<98xf32, #tpu.memory_space<smem>>
    %541 = vector.extract_strided_slice %539 {offsets = [0, 0], sizes = [16, 16], strides = [1, 1]} : vector<16x22xf32> to vector<16x16xf32>
    %542 = vector.broadcast %540 : f32 to vector<16x16xf32>
    %543 = arith.mulf %542, %541 : vector<16x16xf32>
    %544 = arith.addf %538, %543 : vector<16x16xf32>
    %c85 = arith.constant 85 : index
    %545 = memref.load %arg4[%c85] : memref<98xf32, #tpu.memory_space<smem>>
    %546 = vector.extract_strided_slice %539 {offsets = [0, 1], sizes = [16, 16], strides = [1, 1]} : vector<16x22xf32> to vector<16x16xf32>
    %547 = vector.broadcast %545 : f32 to vector<16x16xf32>
    %548 = arith.mulf %547, %546 : vector<16x16xf32>
    %549 = arith.addf %544, %548 : vector<16x16xf32>
    %c86 = arith.constant 86 : index
    %550 = memref.load %arg4[%c86] : memref<98xf32, #tpu.memory_space<smem>>
    %551 = vector.extract_strided_slice %539 {offsets = [0, 2], sizes = [16, 16], strides = [1, 1]} : vector<16x22xf32> to vector<16x16xf32>
    %552 = vector.broadcast %550 : f32 to vector<16x16xf32>
    %553 = arith.mulf %552, %551 : vector<16x16xf32>
    %554 = arith.addf %549, %553 : vector<16x16xf32>
    %c87 = arith.constant 87 : index
    %555 = memref.load %arg4[%c87] : memref<98xf32, #tpu.memory_space<smem>>
    %556 = vector.extract_strided_slice %539 {offsets = [0, 3], sizes = [16, 16], strides = [1, 1]} : vector<16x22xf32> to vector<16x16xf32>
    %557 = vector.broadcast %555 : f32 to vector<16x16xf32>
    %558 = arith.mulf %557, %556 : vector<16x16xf32>
    %559 = arith.addf %554, %558 : vector<16x16xf32>
    %c88 = arith.constant 88 : index
    %560 = memref.load %arg4[%c88] : memref<98xf32, #tpu.memory_space<smem>>
    %561 = vector.extract_strided_slice %539 {offsets = [0, 4], sizes = [16, 16], strides = [1, 1]} : vector<16x22xf32> to vector<16x16xf32>
    %562 = vector.broadcast %560 : f32 to vector<16x16xf32>
    %563 = arith.mulf %562, %561 : vector<16x16xf32>
    %564 = arith.addf %559, %563 : vector<16x16xf32>
    %c89 = arith.constant 89 : index
    %565 = memref.load %arg4[%c89] : memref<98xf32, #tpu.memory_space<smem>>
    %566 = vector.extract_strided_slice %539 {offsets = [0, 5], sizes = [16, 16], strides = [1, 1]} : vector<16x22xf32> to vector<16x16xf32>
    %567 = vector.broadcast %565 : f32 to vector<16x16xf32>
    %568 = arith.mulf %567, %566 : vector<16x16xf32>
    %569 = arith.addf %564, %568 : vector<16x16xf32>
    %c90 = arith.constant 90 : index
    %570 = memref.load %arg4[%c90] : memref<98xf32, #tpu.memory_space<smem>>
    %571 = vector.extract_strided_slice %539 {offsets = [0, 6], sizes = [16, 16], strides = [1, 1]} : vector<16x22xf32> to vector<16x16xf32>
    %572 = vector.broadcast %570 : f32 to vector<16x16xf32>
    %573 = arith.mulf %572, %571 : vector<16x16xf32>
    %574 = arith.addf %569, %573 : vector<16x16xf32>
    %575 = vector.extract_strided_slice %106 {offsets = [6, 0], sizes = [16, 22], strides = [1, 1]} : vector<22x22xf32> to vector<16x22xf32>
    %c91 = arith.constant 91 : index
    %576 = memref.load %arg4[%c91] : memref<98xf32, #tpu.memory_space<smem>>
    %577 = vector.extract_strided_slice %575 {offsets = [0, 0], sizes = [16, 16], strides = [1, 1]} : vector<16x22xf32> to vector<16x16xf32>
    %578 = vector.broadcast %576 : f32 to vector<16x16xf32>
    %579 = arith.mulf %578, %577 : vector<16x16xf32>
    %580 = arith.addf %574, %579 : vector<16x16xf32>
    %c92 = arith.constant 92 : index
    %581 = memref.load %arg4[%c92] : memref<98xf32, #tpu.memory_space<smem>>
    %582 = vector.extract_strided_slice %575 {offsets = [0, 1], sizes = [16, 16], strides = [1, 1]} : vector<16x22xf32> to vector<16x16xf32>
    %583 = vector.broadcast %581 : f32 to vector<16x16xf32>
    %584 = arith.mulf %583, %582 : vector<16x16xf32>
    %585 = arith.addf %580, %584 : vector<16x16xf32>
    %c93 = arith.constant 93 : index
    %586 = memref.load %arg4[%c93] : memref<98xf32, #tpu.memory_space<smem>>
    %587 = vector.extract_strided_slice %575 {offsets = [0, 2], sizes = [16, 16], strides = [1, 1]} : vector<16x22xf32> to vector<16x16xf32>
    %588 = vector.broadcast %586 : f32 to vector<16x16xf32>
    %589 = arith.mulf %588, %587 : vector<16x16xf32>
    %590 = arith.addf %585, %589 : vector<16x16xf32>
    %c94 = arith.constant 94 : index
    %591 = memref.load %arg4[%c94] : memref<98xf32, #tpu.memory_space<smem>>
    %592 = vector.extract_strided_slice %575 {offsets = [0, 3], sizes = [16, 16], strides = [1, 1]} : vector<16x22xf32> to vector<16x16xf32>
    %593 = vector.broadcast %591 : f32 to vector<16x16xf32>
    %594 = arith.mulf %593, %592 : vector<16x16xf32>
    %595 = arith.addf %590, %594 : vector<16x16xf32>
    %c95 = arith.constant 95 : index
    %596 = memref.load %arg4[%c95] : memref<98xf32, #tpu.memory_space<smem>>
    %597 = vector.extract_strided_slice %575 {offsets = [0, 4], sizes = [16, 16], strides = [1, 1]} : vector<16x22xf32> to vector<16x16xf32>
    %598 = vector.broadcast %596 : f32 to vector<16x16xf32>
    %599 = arith.mulf %598, %597 : vector<16x16xf32>
    %600 = arith.addf %595, %599 : vector<16x16xf32>
    %c96 = arith.constant 96 : index
    %601 = memref.load %arg4[%c96] : memref<98xf32, #tpu.memory_space<smem>>
    %602 = vector.extract_strided_slice %575 {offsets = [0, 5], sizes = [16, 16], strides = [1, 1]} : vector<16x22xf32> to vector<16x16xf32>
    %603 = vector.broadcast %601 : f32 to vector<16x16xf32>
    %604 = arith.mulf %603, %602 : vector<16x16xf32>
    %605 = arith.addf %600, %604 : vector<16x16xf32>
    %c97 = arith.constant 97 : index
    %606 = memref.load %arg4[%c97] : memref<98xf32, #tpu.memory_space<smem>>
    %607 = vector.extract_strided_slice %575 {offsets = [0, 6], sizes = [16, 16], strides = [1, 1]} : vector<16x22xf32> to vector<16x16xf32>
    %608 = vector.broadcast %606 : f32 to vector<16x16xf32>
    %609 = arith.mulf %608, %607 : vector<16x16xf32>
    %610 = arith.addf %605, %609 : vector<16x16xf32>
    %611 = arith.negf %610 : vector<16x16xf32>
    %612 = math.exp %611 : vector<16x16xf32>
    %cst_23 = arith.constant 1.000000e+00 : f32
    %613 = vector.broadcast %cst_23 : f32 to vector<16x16xf32>
    %614 = arith.addf %613, %612 : vector<16x16xf32>
    %615 = arith.divf %613, %614 : vector<16x16xf32>
    %616 = vector.extract_strided_slice %615 {offsets = [0, 0], sizes = [1, 16], strides = [1, 1]} : vector<16x16xf32> to vector<1x16xf32>
    %617 = vector.extract_strided_slice %615 {offsets = [1, 0], sizes = [1, 16], strides = [1, 1]} : vector<16x16xf32> to vector<1x16xf32>
    %618 = vector.extract_strided_slice %615 {offsets = [2, 0], sizes = [1, 16], strides = [1, 1]} : vector<16x16xf32> to vector<1x16xf32>
    %619 = vector.extract_strided_slice %615 {offsets = [3, 0], sizes = [1, 16], strides = [1, 1]} : vector<16x16xf32> to vector<1x16xf32>
    %620 = vector.extract_strided_slice %615 {offsets = [4, 0], sizes = [1, 16], strides = [1, 1]} : vector<16x16xf32> to vector<1x16xf32>
    %621 = vector.extract_strided_slice %615 {offsets = [5, 0], sizes = [1, 16], strides = [1, 1]} : vector<16x16xf32> to vector<1x16xf32>
    %622 = vector.extract_strided_slice %615 {offsets = [6, 0], sizes = [1, 16], strides = [1, 1]} : vector<16x16xf32> to vector<1x16xf32>
    %623 = vector.extract_strided_slice %615 {offsets = [7, 0], sizes = [1, 16], strides = [1, 1]} : vector<16x16xf32> to vector<1x16xf32>
    %624 = vector.extract_strided_slice %615 {offsets = [8, 0], sizes = [1, 16], strides = [1, 1]} : vector<16x16xf32> to vector<1x16xf32>
    %625 = vector.extract_strided_slice %615 {offsets = [9, 0], sizes = [1, 16], strides = [1, 1]} : vector<16x16xf32> to vector<1x16xf32>
    %626 = vector.extract_strided_slice %615 {offsets = [10, 0], sizes = [1, 16], strides = [1, 1]} : vector<16x16xf32> to vector<1x16xf32>
    %627 = vector.extract_strided_slice %615 {offsets = [11, 0], sizes = [1, 16], strides = [1, 1]} : vector<16x16xf32> to vector<1x16xf32>
    %628 = vector.extract_strided_slice %615 {offsets = [12, 0], sizes = [1, 16], strides = [1, 1]} : vector<16x16xf32> to vector<1x16xf32>
    %629 = vector.extract_strided_slice %615 {offsets = [13, 0], sizes = [1, 16], strides = [1, 1]} : vector<16x16xf32> to vector<1x16xf32>
    %630 = vector.extract_strided_slice %615 {offsets = [14, 0], sizes = [1, 16], strides = [1, 1]} : vector<16x16xf32> to vector<1x16xf32>
    %631 = vector.extract_strided_slice %615 {offsets = [15, 0], sizes = [1, 16], strides = [1, 1]} : vector<16x16xf32> to vector<1x16xf32>
    %632 = tpu.concatenate %616, %617, %618, %619, %620, %621, %622, %623, %624, %625, %626, %627, %628, %629, %630, %631 in 1 : vector<1x16xf32>, vector<1x16xf32>, vector<1x16xf32>, vector<1x16xf32>, vector<1x16xf32>, vector<1x16xf32>, vector<1x16xf32>, vector<1x16xf32>, vector<1x16xf32>, vector<1x16xf32>, vector<1x16xf32>, vector<1x16xf32>, vector<1x16xf32>, vector<1x16xf32>, vector<1x16xf32>, vector<1x16xf32> -> vector<1x256xf32>
    %633 = vector.broadcast %632 : vector<1x256xf32> to vector<32x256xf32>
    %634 = arith.mulf %25, %633 : vector<32x256xf32>
    %635 = arith.truncf %634 : vector<32x256xf32> to vector<32x256xbf16>
    %c0_24 = arith.constant 0 : index
    %c0_25 = arith.constant 0 : index
    %c0_26 = arith.constant 0 : index
    %636 = vector.load %arg5[%c0_24, %c0_25, %c0_26] : memref<1x32x256xbf16, #tpu.memory_space<vmem>>, vector<1x32x256xbf16>
    %637 = vector.shape_cast %636 : vector<1x32x256xbf16> to vector<32x256xbf16>
    %638 = vector.shape_cast %635 : vector<32x256xbf16> to vector<1x32x256xbf16>
    tpu.vector_store %arg5[%c0_24, %c0_25, %c0_26], %638 {strides = array<i32>} : memref<1x32x256xbf16, #tpu.memory_space<vmem>>, vector<1x32x256xbf16>,
    return
  }
  func.func @transform_0(%arg0: i32) -> (i32, i32, i32) {
    %c0_i32 = arith.constant 0 : i32
    %c0_i32_0 = arith.constant 0 : i32
    %c0_i32_1 = arith.constant 0 : i32
    return %arg0, %c0_i32, %c0_i32_0 : i32, i32, i32
  }
  func.func @transform_1(%arg0: i32) -> (i32, i32) {
    %c0_i32 = arith.constant 0 : i32
    %c0_i32_0 = arith.constant 0 : i32
    %c0_i32_1 = arith.constant 0 : i32
    return %c0_i32, %c0_i32_0 : i32, i32
  }
  func.func @transform_2(%arg0: i32) -> (i32, i32) {
    %c0_i32 = arith.constant 0 : i32
    %c0_i32_0 = arith.constant 0 : i32
    %c0_i32_1 = arith.constant 0 : i32
    return %c0_i32, %c0_i32_0 : i32, i32
  }
  func.func @transform_3(%arg0: i32) -> i32 {
    %c0_i32 = arith.constant 0 : i32
    %c0_i32_0 = arith.constant 0 : i32
    return %c0_i32 : i32
  }
  func.func @transform_4(%arg0: i32) -> (i32, i32, i32) {
    %c0_i32 = arith.constant 0 : i32
    %c0_i32_0 = arith.constant 0 : i32
    %c0_i32_1 = arith.constant 0 : i32
    return %arg0, %c0_i32, %c0_i32_0 : i32, i32, i32
  }
}

</mosaic_0001>

<llo_original>
// kernel: tpu_custom_call.1
$region0: #{tpu_custom_call.1}
  #allocation0 [shape = 'u32[]', space=smem, size = 0x4, offset = 0x4, fixed_abs, tag = 'smem constant byte address 0x4 - core index']
  #allocation1 [shape = 'u32[144,128]{1,0:T(1,128)}', space=vmem, size = 0x12000, scoped, tag = 'internal scratch']
  %s0 = inlined_call_operand.hbm [shape: bf16[2,32,256], index: 0, kind: input, shape index: {}]
  %s1 = inlined_call_operand.hbm [shape: f32[2,32], index: 1, kind: input, shape index: {}]
  %s2 = inlined_call_operand.hbm [shape: f32[32,2], index: 2, kind: input, shape index: {}]
  %s3 = inlined_call_operand.hbm [shape: f32[98], index: 3, kind: input, shape index: {}]
  %s4 = inlined_call_operand.hbm [shape: bf16[2,32,256], index: 4, kind: output, shape index: {}]
  %s5 = sld [smem:[#allocation0]]
  $region65: #{tpu_custom_call.1} parent=0
    _
  %s7 = ssub.s32 1, %s5
  %s8 = scalar_select 0, %s7, %s5
  $region1: #{tpu_custom_call.1} parent=0
    #allocation2 [shape = 'u8[32768]{0}', space=vmem, size = 0x8000, scoped, tag = 'input window, operand 0']
    #allocation3 [shape = 's32[2]{0}', space=sflag, size = 0x8, scoped, tag = 'scoped memory for tpu_custom_call.1']
    #allocation4 [shape = 's32[2]{0}', space=sflag, size = 0x8, scoped, tag = 'scoped memory for tpu_custom_call.1']
    #allocation5 [shape = 's32[2]{0}', space=sflag, size = 0x8, scoped, tag = 'scoped memory for tpu_custom_call.1']
    #allocation6 [shape = 'u8[1024]{0}', space=vmem, size = 0x400, scoped, tag = 'input window, operand 1, single buffered']
    #allocation7 [shape = 's32[1]{0}', space=sflag, size = 0x4, scoped, tag = 'scoped memory for tpu_custom_call.1']
    #allocation8 [shape = 'u8[16384]{0}', space=vmem, size = 0x4000, scoped, tag = 'input window, operand 2, single buffered']
    #allocation9 [shape = 'u8[512]{0}', space=smem, size = 0x200, scoped, tag = 'input window, operand 3, single buffered']
    #allocation10 [shape = 'u8[32768]{0}', space=vmem, size = 0x8000, scoped, tag = 'output window, operand 0']
    %9 = vsyncpa [#allocation3], 0
    %s10 = scalar_lea.sflag [#allocation3], 1
    %11 = vsyncpa %s10, 0
    %12 = vsyncpa [#allocation7], 0
    %13 = vsyncpa [#allocation5], 0
    %14 = vsyncpa [#allocation4], 0
    %s15 = scalar_lea.sflag [#allocation4], 1
    %16 = vsyncpa %s15, 0
    loop: start=0, step=1, limit=4
    $region2: #{tpu_custom_call.1} parent=1 // loop_pre_header
      _
    $region3: #{tpu_custom_call.1} parent=1 // loop_header
      %s18 = sphi 0, %s22
      %p19 = scmp.ge.s32.totalorder %s18, 4
      %s28 = sphi 0, %s30
      %s31 = sphi 0, %s28
      %s32 = sphi 0, %s31
      %s48 = sphi 0, %s32
      %s52 = sphi 0, %s52
      %s54 = sphi 0, %s52
      %s55 = sphi 0, %s54
      %s69 = sphi 0, %s55
      %s73 = sphi 0, %s73
      %s75 = sphi 0, %s73
      %s76 = sphi 0, %s75
      %s90 = sphi 0, %s76
      %s94 = sphi 0, %s94
      %s96 = sphi 0, %s94
      %s97 = sphi 0, %s96
      %s111 = sphi 0, %s97
      %s117 = sphi 0, %s119
      %s120 = sphi 0, %s117
      %s121 = sphi 0, %s120
      %s137 = sphi 0, %s121
    $region4: #{tpu_custom_call.1} parent=1 // loop_header_branch
      %21 = sbr.rel (%p19) target = $region8
    $region5: #{tpu_custom_call.1} parent=1 // loop_body
      %s23 = ssub.s32 %s18, 1
      %s24 = ssub.s32 %s18, 2
      %s25 = sadd.s32 %s18, 1
      %s26 = ssub.s32 %s18, %s25
      %p27 = scmp.eq.s32.totalorder %s26, 0
      %s29 = sadd.s32 %s28, 1
      %s30 = scalar_select %p27, %s28, %s29
      %p33 = pneg %p27
      %p34 = scmp.eq.s32.totalorder %s18, 1
      %p35 = por %p33, %p34
      %p36 = scmp.ne.s32.totalorder %s28, %s31
      %p37 = scmp.eq.s32.totalorder %s18, 0
      %p38 = por %p36, %p37
      %p39 = scmp.ne.s32.totalorder %s28, %s31
      %p40 = scmp.eq.s32.totalorder %s23, 1
      %p41 = por %p39, %p40
      %p42 = scmp.ne.s32.totalorder %s31, %s32
      %p43 = scmp.eq.s32.totalorder %s23, 0
      %p44 = por %p42, %p43
      %p45 = scmp.ne.s32.totalorder %s31, %s32
      %p46 = scmp.eq.s32.totalorder %s24, 1
      %p47 = por %p45, %p46
      %p49 = scmp.ne.s32.totalorder %s32, %s48
      %p50 = scmp.eq.s32.totalorder %s24, 0
      %p51 = por %p49, %p50
      %s53 = sadd.s32 %s52, 1
      %p56 = scmp.eq.s32.totalorder %s18, 1
      %p57 = scmp.ne.s32.totalorder %s52, %s54
      %p58 = scmp.eq.s32.totalorder %s18, 0
      %p59 = por %p57, %p58
      %p60 = scmp.ne.s32.totalorder %s52, %s54
      %p61 = scmp.eq.s32.totalorder %s23, 1
      %p62 = por %p60, %p61
      %p63 = scmp.ne.s32.totalorder %s54, %s55
      %p64 = scmp.eq.s32.totalorder %s23, 0
      %p65 = por %p63, %p64
      %p66 = scmp.ne.s32.totalorder %s54, %s55
      %p67 = scmp.eq.s32.totalorder %s24, 1
      %p68 = por %p66, %p67
      %p70 = scmp.ne.s32.totalorder %s55, %s69
      %p71 = scmp.eq.s32.totalorder %s24, 0
      %p72 = por %p70, %p71
      %s74 = sadd.s32 %s73, 1
      %p77 = scmp.eq.s32.totalorder %s18, 1
      %p78 = scmp.ne.s32.totalorder %s73, %s75
      %p79 = scmp.eq.s32.totalorder %s18, 0
      %p80 = por %p78, %p79
      %p81 = scmp.ne.s32.totalorder %s73, %s75
      %p82 = scmp.eq.s32.totalorder %s23, 1
      %p83 = por %p81, %p82
      %p84 = scmp.ne.s32.totalorder %s75, %s76
      %p85 = scmp.eq.s32.totalorder %s23, 0
      %p86 = por %p84, %p85
      %p87 = scmp.ne.s32.totalorder %s75, %s76
      %p88 = scmp.eq.s32.totalorder %s24, 1
      %p89 = por %p87, %p88
      %p91 = scmp.ne.s32.totalorder %s76, %s90
      %p92 = scmp.eq.s32.totalorder %s24, 0
      %p93 = por %p91, %p92
      %s95 = sadd.s32 %s94, 1
      %p98 = scmp.eq.s32.totalorder %s18, 1
      %p99 = scmp.ne.s32.totalorder %s94, %s96
      %p100 = scmp.eq.s32.totalorder %s18, 0
      %p101 = por %p99, %p100
      %p102 = scmp.ne.s32.totalorder %s94, %s96
      %p103 = scmp.eq.s32.totalorder %s23, 1
      %p104 = por %p102, %p103
      %p105 = scmp.ne.s32.totalorder %s96, %s97
      %p106 = scmp.eq.s32.totalorder %s23, 0
      %p107 = por %p105, %p106
      %p108 = scmp.ne.s32.totalorder %s96, %s97
      %p109 = scmp.eq.s32.totalorder %s24, 1
      %p110 = por %p108, %p109
      %p112 = scmp.ne.s32.totalorder %s97, %s111
      %p113 = scmp.eq.s32.totalorder %s24, 0
      %p114 = por %p112, %p113
      %s115 = ssub.s32 %s18, %s25
      %p116 = scmp.eq.s32.totalorder %s115, 0
      %s118 = sadd.s32 %s117, 1
      %s119 = scalar_select %p116, %s117, %s118
      %p122 = pneg %p116
      %p123 = scmp.eq.s32.totalorder %s18, 1
      %p124 = por %p122, %p123
      %p125 = scmp.ne.s32.totalorder %s117, %s120
      %p126 = scmp.eq.s32.totalorder %s18, 0
      %p127 = por %p125, %p126
      %p128 = scmp.ne.s32.totalorder %s117, %s120
      %p129 = scmp.eq.s32.totalorder %s23, 1
      %p130 = por %p128, %p129
      %p131 = scmp.ne.s32.totalorder %s120, %s121
      %p132 = scmp.eq.s32.totalorder %s23, 0
      %p133 = por %p131, %p132
      %p134 = scmp.ne.s32.totalorder %s120, %s121
      %p135 = scmp.eq.s32.totalorder %s24, 1
      %p136 = por %p134, %p135
      %p138 = scmp.ne.s32.totalorder %s121, %s137
      %p139 = scmp.eq.s32.totalorder %s24, 0
      %p140 = por %p138, %p139
      %p141 = scmp.le.s32.totalorder 1, %s18
      %p142 = scmp.lt.s32.totalorder %s18, 3
      %p143 = pnand %p141, %p142
      %p144 = pneg %p143
      // Predicated region
      $region9: #{tpu_custom_call.1} parent=5 // pred_check
        _
      $region10: #{tpu_custom_call.1} parent=5 // pred_check_branch
        %146 = sbr.rel (%p143) target = $region12
      $region11: #{tpu_custom_call.1} parent=5 // pred_region
        %s147 = ssub.s32 %s18, 1
        // Predicated region
        $region13: #{tpu_custom_call.1} parent=11 // pred_check
          %p148 = pneg %p65
        $region14: #{tpu_custom_call.1} parent=11 // pred_check_branch
          %150 = sbr.rel (%p148) target = $region16
        $region15: #{tpu_custom_call.1} parent=11 // pred_region
          %s152 = ssub.s32 32, 32
          %153 = vsyncadd [#allocation7], %s152
          %s155 = sshll.u32 [#allocation6], 4
          %s156 = int_to_ptr.vmem [resolvable:$true] %s155
          %158 = dma.hbm_to_vmem [thread:$0]  %s1, 32, %s156, [#allocation7]
        $region16: #{tpu_custom_call.1} parent=11 // pred_fallthru
          _
        // Predicated region
        $region17: #{tpu_custom_call.1} parent=11 // pred_check
          %p159 = pneg %p86
        $region18: #{tpu_custom_call.1} parent=11 // pred_check_branch
          %161 = sbr.rel (%p159) target = $region20
        $region19: #{tpu_custom_call.1} parent=11 // pred_region
          %s163 = ssub.s32 512, 512
          %164 = vsyncadd [#allocation7], %s163
          %s165 = sshll.u32 [#allocation8], 4
          %s166 = int_to_ptr.vmem [resolvable:$true] %s165
          %171 = dma.hbm_to_vmem [thread:$0]  %s2, 512, %s166, [#allocation7], 128, 128, 8
        $region20: #{tpu_custom_call.1} parent=11 // pred_fallthru
          _
        // Predicated region
        $region21: #{tpu_custom_call.1} parent=11 // pred_check
          %p172 = pneg %p107
        $region22: #{tpu_custom_call.1} parent=11 // pred_check_branch
          %174 = sbr.rel (%p172) target = $region24
        $region23: #{tpu_custom_call.1} parent=11 // pred_region
          %s176 = ssub.s32 16, 16
          %177 = vsyncadd [#allocation5], %s176
          %180 = dma.hbm_to_smem %s3, 16, [#allocation9], [#allocation5]
        $region24: #{tpu_custom_call.1} parent=11 // pred_fallthru
          _
      $region12: #{tpu_custom_call.1} parent=5 // pred_fallthru
        _
      %p181 = scmp.lt.s32.totalorder %s18, 2
      // Predicated region
      $region25: #{tpu_custom_call.1} parent=5 // pred_check
        %p182 = pneg %p181
      $region26: #{tpu_custom_call.1} parent=5 // pred_check_branch
        %184 = sbr.rel (%p182) target = $region28
      $region27: #{tpu_custom_call.1} parent=5 // pred_region
        // Predicated region
        $region29: #{tpu_custom_call.1} parent=27 // pred_check
          %p185 = pneg %p38
        $region30: #{tpu_custom_call.1} parent=27 // pred_check_branch
          %187 = sbr.rel (%p185) target = $region32
        $region31: #{tpu_custom_call.1} parent=27 // pred_region
          %s188 = sand.u32 %s28, 1
          %s189 = scalar_lea.sflag [#allocation3], %s188
          %s190 = sand.u32 %s28, 1
          %s191 = smul.addr %s190, 32
          %s192 = scalar_lea.vmem [#allocation2], %s191
          %s194 = ssub.s32 512, 512
          %195 = vsyncadd %s189, %s194
          %s196 = smul.addr %s18, 8
          %s197 = smul.addr %s196, 64
          %s198 = scalar_lea.hbm %s0, %s197
          %s199 = sshll.u32 %s192, 4
          %s200 = int_to_ptr.vmem [resolvable:$true] %s199
          %205 = dma.hbm_to_vmem [thread:$0]  %s198, 512, %s200, %s189, 128, 128, 8
        $region32: #{tpu_custom_call.1} parent=27 // pred_fallthru
          _
      $region28: #{tpu_custom_call.1} parent=5 // pred_fallthru
        _
      %p206 = scmp.le.s32.totalorder 1, %s18
      %p207 = scmp.lt.s32.totalorder %s18, 3
      %p208 = pnand %p206, %p207
      %p209 = pneg %p208
      // Predicated region
      $region33: #{tpu_custom_call.1} parent=5 // pred_check
        _
      $region34: #{tpu_custom_call.1} parent=5 // pred_check_branch
        %211 = sbr.rel (%p208) target = $region36
      $region35: #{tpu_custom_call.1} parent=5 // pred_region
        %s212 = ssub.s32 %s18, 1
        %s213 = sand.u32 %s31, 1
        %s214 = scalar_lea.sflag [#allocation3], %s213
        %s215 = sand.u32 %s31, 1
        %s216 = smul.addr %s215, 32
        %s217 = scalar_lea.vmem [#allocation2], %s216
        // Predicated region
        $region37: #{tpu_custom_call.1} parent=35 // pred_check
          %p218 = pneg %p44
        $region38: #{tpu_custom_call.1} parent=35 // pred_check_branch
          %220 = sbr.rel (%p218) target = $region40
        $region39: #{tpu_custom_call.1} parent=35 // pred_region
          %221 = dma.done %s214, 512
        $region40: #{tpu_custom_call.1} parent=35 // pred_fallthru
          _
        // Predicated region
        $region41: #{tpu_custom_call.1} parent=35 // pred_check
          %p222 = pneg %p65
        $region42: #{tpu_custom_call.1} parent=35 // pred_check_branch
          %224 = sbr.rel (%p222) target = $region44
        $region43: #{tpu_custom_call.1} parent=35 // pred_region
          %225 = dma.done [#allocation7], 32
        $region44: #{tpu_custom_call.1} parent=35 // pred_fallthru
          _
        // Predicated region
        $region45: #{tpu_custom_call.1} parent=35 // pred_check
          %p226 = pneg %p86
        $region46: #{tpu_custom_call.1} parent=35 // pred_check_branch
          %228 = sbr.rel (%p226) target = $region48
        $region47: #{tpu_custom_call.1} parent=35 // pred_region
          %229 = dma.done [#allocation7], 512
        $region48: #{tpu_custom_call.1} parent=35 // pred_fallthru
          _
        // Predicated region
        $region49: #{tpu_custom_call.1} parent=35 // pred_check
          %p230 = pneg %p107
        $region50: #{tpu_custom_call.1} parent=35 // pred_check_branch
          %232 = sbr.rel (%p230) target = $region52
        $region51: #{tpu_custom_call.1} parent=35 // pred_region
          %233 = dma.done [#allocation5], 16
        $region52: #{tpu_custom_call.1} parent=35 // pred_fallthru
          _
        %234 = sfence
        %s235 = sand.u32 %s31, 1
        %s236 = scalar_lea.sflag [#allocation3], %s235
        %s237 = sand.u32 %s31, 1
        %s238 = smul.addr %s237, 32
        %s239 = scalar_lea.vmem [#allocation2], %s238
        %p240 = pneg %p44
        %p241 = pneg %p41
        %p242 = pneg %p65
        %p243 = pneg %p62
        %p244 = pneg %p86
        %p245 = pneg %p83
        %p246 = pneg %p107
        %p247 = pneg %p104
        %p248 = pneg %p133
        %p249 = pneg %p130
        %s250 = sand.u32 %s120, 1
        %s251 = scalar_lea.sflag [#allocation4], %s250
        %s252 = sand.u32 %s120, 1
        %s253 = smul.addr %s252, 32
        %s254 = scalar_lea.vmem [#allocation10], %s253
        %v255 = vld [vmem:[%s217] sm:$0xff]
        %v256 = vld [vmem:[%s217 + $0x8] sm:$0xff]
        %v257 = vld [vmem:[%s217 + $0x10] sm:$0xff]
        %v258 = vld [vmem:[%s217 + $0x18] sm:$0xff]
        %v259 = vunpack.c.l.bf16 %v255
        %v260 = vunpack.c.h.bf16 %v255
        %v261 = vunpack.c.l.bf16 %v256
        %v262 = vunpack.c.h.bf16 %v256
        %v263 = vunpack.c.l.bf16 %v257
        %v264 = vunpack.c.h.bf16 %v257
        %v265 = vunpack.c.l.bf16 %v258
        %v266 = vunpack.c.h.bf16 %v258
        %267 = vmatprep.subr.mxu0 0.0
        %268 = vmatpush1.msra.mxu0 1.0
        %269 = vmatprep.subr.mxu0 0.0
        %270 = vmatpush1.msra.mxu0 1.0
        %271 = vmatprep.subr.mxu0 0.0
        %272 = vmatpush1.msra.mxu0 1.0
        %273 = vmatprep.subr.mxu0 0.0
        %274 = vmatpush1.msra.mxu0 1.0
        %275 = vmatprep.subr.mxu0 0.0
        %276 = vmatpush1.msra.mxu0 1.0
        %277 = vmatprep.subr.mxu0 0.0
        %278 = vmatpush1.msra.mxu0 1.0
        %279 = vmatprep.subr.mxu0 0.0
        %280 = vmatpush1.msra.mxu0 1.0
        %281 = vmatprep.subr.mxu0 0.0
        %282 = vmatpush1.msra.mxu0 1.0
        %283 = vmatprep.subr.mxu0 0.0
        %284 = vmatpush1.msra.mxu0 1.0
        %285 = vmatprep.subr.mxu0 0.0
        %286 = vmatpush1.msra.mxu0 1.0
        %287 = vmatprep.subr.mxu0 0.0
        %288 = vmatpush1.msra.mxu0 1.0
        %289 = vmatprep.subr.mxu0 0.0
        %290 = vmatpush1.msra.mxu0 1.0
        %291 = vmatprep.subr.mxu0 0.0
        %292 = vmatpush1.msra.mxu0 1.0
        %293 = vmatprep.subr.mxu0 0.0
        %294 = vmatpush1.msra.mxu0 1.0
        %295 = vmatprep.subr.mxu0 0.0
        %296 = vmatpush1.msra.mxu0 1.0
        %297 = vmatprep.subr.mxu0 0.0
        %298 = vmatpush1.msra.mxu0 1.0
        %299 = vmatprep.subr.mxu0 0.0
        %300 = vmatpush1.msra.mxu0 1.0
        %301 = vmatprep.subr.mxu0 0.0
        %302 = vmatpush1.msra.mxu0 1.0
        %303 = vmatprep.subr.mxu0 0.0
        %304 = vmatpush1.msra.mxu0 1.0
        %305 = vmatprep.subr.mxu0 0.0
        %306 = vmatpush1.msra.mxu0 1.0
        %307 = vmatprep.subr.mxu0 0.0
        %308 = vmatpush1.msra.mxu0 1.0
        %309 = vmatprep.subr.mxu0 0.0
        %310 = vmatpush1.msra.mxu0 1.0
        %311 = vmatprep.subr.mxu0 0.0
        %312 = vmatpush1.msra.mxu0 1.0
        %313 = vmatprep.subr.mxu0 0.0
        %314 = vmatpush1.msra.mxu0 1.0
        %315 = vmatprep.subr.mxu0 0.0
        %316 = vmatpush1.msra.mxu0 1.0
        %317 = vmatprep.subr.mxu0 0.0
        %318 = vmatpush1.msra.mxu0 1.0
        %319 = vmatprep.subr.mxu0 0.0
        %320 = vmatpush1.msra.mxu0 1.0
        %321 = vmatprep.subr.mxu0 0.0
        %322 = vmatpush1.msra.mxu0 1.0
        %323 = vmatprep.subr.mxu0 0.0
        %324 = vmatpush1.msra.mxu0 1.0
        %325 = vmatprep.subr.mxu0 0.0
        %326 = vmatpush1.msra.mxu0 1.0
        %327 = vmatprep.subr.mxu0 0.0
        %328 = vmatpush1.msra.mxu0 1.0
        %329 = vmatprep.subr.mxu0 0.0
        %330 = vmatpush1.msra.mxu0 1.0
        %331 = vmatprep.mubr.f32.mxu0 %v260
        %332 = vmatmul.mubr.f32.gmra.mrb[0].mxu0 %v259
        %v333 = vpop.f32.mrb[0].mxu0
        %v334 = vadd.f32 0.0, %v333
        %v335 = vpop.f32.mrb[0].mxu0
        %336 = vmatprep.mubr.f32.mxu0 %v262
        %337 = vmatmul.mubr.f32.gmra.mrb[0].mxu0 %v261
        %v338 = vpop.f32.mrb[0].mxu0
        %v339 = vadd.f32 0.0, %v338
        %v340 = vpop.f32.mrb[0].mxu0
        %341 = vmatprep.mubr.f32.mxu0 %v264
        %342 = vmatmul.mubr.f32.gmra.mrb[0].mxu0 %v263
        %v343 = vpop.f32.mrb[0].mxu0
        %v344 = vadd.f32 0.0, %v343
        %v345 = vpop.f32.mrb[0].mxu0
        %346 = vmatprep.mubr.f32.mxu0 %v266
        %347 = vmatmul.mubr.f32.gmra.mrb[0].mxu0 %v265
        %v348 = vpop.f32.mrb[0].mxu0
        %v349 = vadd.f32 0.0, %v348
        %v350 = vpop.f32.mrb[0].mxu0
        %351 = vdwg.mxu0
        %v352 = vmul.f32 %v334, 0.00390625
        %v353 = vmul.f32 %v339, 0.00390625
        %v354 = vmul.f32 %v344, 0.00390625
        %v355 = vmul.f32 %v349, 0.00390625
        %v356 = vmax.f32 %v259, %v260
        %357 = vmax.xlane.f32.xlu0 %v356
        %v358 = vpop.xlane.xlu0 %357
        %v359 = vmax.f32 %v261, %v262
        %360 = vmax.xlane.f32.xlu0 %v359
        %v361 = vpop.xlane.xlu0 %360
        %v362 = vmax.f32 %v263, %v264
        %363 = vmax.xlane.f32.xlu0 %v362
        %v364 = vpop.xlane.xlu0 %363
        %v365 = vmax.f32 %v265, %v266
        %366 = vmax.xlane.f32.xlu0 %v365
        %v367 = vpop.xlane.xlu0 %366
        %vm368 = vcmask 7168
        %v369 = vsel %vm368, %v352, %v358
        %v370 = vsel %vm368, %v353, %v361
        %v371 = vsel %vm368, %v354, %v364
        %v372 = vsel %vm368, %v355, %v367
        %v373 = vld [vmem:[#allocation6] sm:$0x3]
        %vm374 = vcmask 261120
        %v376 = vsel %vm374, %v373, 0
        %378 = vmatprep.subr.mxu0 0.0
        %379 = vmatpush1.msra.mxu0 %v369
        %380 = vmatprep.subr.mxu0 0.0
        %381 = vmatpush1.msra.mxu0 %v370
        %382 = vmatprep.subr.mxu0 0.0
        %383 = vmatpush1.msra.mxu0 %v371
        %384 = vmatprep.subr.mxu0 0.0
        %385 = vmatpush1.msra.mxu0 %v372
        %386 = vmatprep.subr.mxu0 0.0
        %387 = vmatpush1.msra.mxu0 0.0
        %388 = vmatprep.subr.mxu0 0.0
        %389 = vmatpush1.msra.mxu0 0.0
        %390 = vmatprep.subr.mxu0 0.0
        %391 = vmatpush1.msra.mxu0 0.0
        %392 = vmatprep.subr.mxu0 0.0
        %393 = vmatpush1.msra.mxu0 0.0
        %394 = vmatprep.subr.mxu0 0.0
        %395 = vmatpush1.msra.mxu0 0.0
        %396 = vmatprep.subr.mxu0 0.0
        %397 = vmatpush1.msra.mxu0 0.0
        %398 = vmatprep.subr.mxu0 0.0
        %399 = vmatpush1.msra.mxu0 0.0
        %400 = vmatprep.subr.mxu0 0.0
        %401 = vmatpush1.msra.mxu0 0.0
        %402 = vmatprep.subr.mxu0 0.0
        %403 = vmatpush1.msra.mxu0 0.0
        %404 = vmatprep.subr.mxu0 0.0
        %405 = vmatpush1.msra.mxu0 0.0
        %406 = vmatprep.subr.mxu0 0.0
        %407 = vmatpush1.msra.mxu0 0.0
        %408 = vmatprep.subr.mxu0 0.0
        %409 = vmatpush1.msra.mxu0 0.0
        %410 = vmatprep.subr.mxu0 0.0
        %411 = vmatpush1.msra.mxu0 0.0
        %412 = vmatprep.subr.mxu0 0.0
        %413 = vmatpush1.msra.mxu0 0.0
        %414 = vmatprep.subr.mxu0 0.0
        %415 = vmatpush1.msra.mxu0 0.0
        %416 = vmatprep.subr.mxu0 0.0
        %417 = vmatpush1.msra.mxu0 0.0
        %418 = vmatprep.subr.mxu0 0.0
        %419 = vmatpush1.msra.mxu0 0.0
        %420 = vmatprep.subr.mxu0 0.0
        %421 = vmatpush1.msra.mxu0 0.0
        %422 = vmatprep.subr.mxu0 0.0
        %423 = vmatpush1.msra.mxu0 0.0
        %424 = vmatprep.subr.mxu0 0.0
        %425 = vmatpush1.msra.mxu0 0.0
        %426 = vmatprep.subr.mxu0 0.0
        %427 = vmatpush1.msra.mxu0 0.0
        %428 = vmatprep.subr.mxu0 0.0
        %429 = vmatpush1.msra.mxu0 0.0
        %430 = vmatprep.subr.mxu0 0.0
        %431 = vmatpush1.msra.mxu0 0.0
        %432 = vmatprep.subr.mxu0 0.0
        %433 = vmatpush1.msra.mxu0 0.0
        %434 = vmatprep.subr.mxu0 0.0
        %435 = vmatpush1.msra.mxu0 0.0
        %436 = vmatprep.subr.mxu0 0.0
        %437 = vmatpush1.msra.mxu0 0.0
        %438 = vmatprep.subr.mxu0 0.0
        %439 = vmatpush1.msra.mxu0 0.0
        %440 = vmatprep.subr.mxu0 0.0
        %441 = vmatpush1.msra.mxu0 0.0
        %442 = vmatprep.mubr.f32.mxu0 0.0
        %443 = vmatmul.mubr.f32.gmra.mrb[0].mxu0 %v376
        %v444 = vpop.f32.mrb[0].mxu0
        %v445 = vadd.f32 0.0, %v444
        %v446 = vpop.f32.mrb[0].mxu0
        %447 = vdwg.mxu0
        %v448 = vmax.f32 %v445, 0.0
        %v449 = vld [vmem:[#allocation8] sm:$0xff]
        %v450 = vld [vmem:[#allocation8 + $0x8] sm:$0xff]
        %v451 = vld [vmem:[#allocation8 + $0x10] sm:$0xff]
        %v452 = vld [vmem:[#allocation8 + $0x18] sm:$0xff]
        %vm453 = vcmask 15360
        %v455 = vsel %vm453, %v449, 0
        %v458 = vsel %vm453, %v450, 0
        %v461 = vsel %vm453, %v451, 0
        %v464 = vsel %vm453, %v452, 0
        %vm466 = vcmask 1041408
        %v468 = vsel %vm466, %v448, 0
        %470 = vmatprep.subr.mxu0 0.0
        %471 = vmatpush1.msra.mxu0 %v468
        %472 = vmatprep.subr.mxu0 0.0
        %473 = vmatpush1.msra.mxu0 0.0
        %474 = vmatprep.subr.mxu0 0.0
        %475 = vmatpush1.msra.mxu0 0.0
        %476 = vmatprep.subr.mxu0 0.0
        %477 = vmatpush1.msra.mxu0 0.0
        %478 = vmatprep.subr.mxu0 0.0
        %479 = vmatpush1.msra.mxu0 0.0
        %480 = vmatprep.subr.mxu0 0.0
        %481 = vmatpush1.msra.mxu0 0.0
        %482 = vmatprep.subr.mxu0 0.0
        %483 = vmatpush1.msra.mxu0 0.0
        %484 = vmatprep.subr.mxu0 0.0
        %485 = vmatpush1.msra.mxu0 0.0
        %486 = vmatprep.subr.mxu0 0.0
        %487 = vmatpush1.msra.mxu0 0.0
        %488 = vmatprep.subr.mxu0 0.0
        %489 = vmatpush1.msra.mxu0 0.0
        %490 = vmatprep.subr.mxu0 0.0
        %491 = vmatpush1.msra.mxu0 0.0
        %492 = vmatprep.subr.mxu0 0.0
        %493 = vmatpush1.msra.mxu0 0.0
        %494 = vmatprep.subr.mxu0 0.0
        %495 = vmatpush1.msra.mxu0 0.0
        %496 = vmatprep.subr.mxu0 0.0
        %497 = vmatpush1.msra.mxu0 0.0
        %498 = vmatprep.subr.mxu0 0.0
        %499 = vmatpush1.msra.mxu0 0.0
        %500 = vmatprep.subr.mxu0 0.0
        %501 = vmatpush1.msra.mxu0 0.0
        %502 = vmatprep.subr.mxu0 0.0
        %503 = vmatpush1.msra.mxu0 0.0
        %504 = vmatprep.subr.mxu0 0.0
        %505 = vmatpush1.msra.mxu0 0.0
        %506 = vmatprep.subr.mxu0 0.0
        %507 = vmatpush1.msra.mxu0 0.0
        %508 = vmatprep.subr.mxu0 0.0
        %509 = vmatpush1.msra.mxu0 0.0
        %510 = vmatprep.subr.mxu0 0.0
        %511 = vmatpush1.msra.mxu0 0.0
        %512 = vmatprep.subr.mxu0 0.0
        %513 = vmatpush1.msra.mxu0 0.0
        %514 = vmatprep.subr.mxu0 0.0
        %515 = vmatpush1.msra.mxu0 0.0
        %516 = vmatprep.subr.mxu0 0.0
        %517 = vmatpush1.msra.mxu0 0.0
        %518 = vmatprep.subr.mxu0 0.0
        %519 = vmatpush1.msra.mxu0 0.0
        %520 = vmatprep.subr.mxu0 0.0
        %521 = vmatpush1.msra.mxu0 0.0
        %522 = vmatprep.subr.mxu0 0.0
        %523 = vmatpush1.msra.mxu0 0.0
        %524 = vmatprep.subr.mxu0 0.0
        %525 = vmatpush1.msra.mxu0 0.0
        %526 = vmatprep.subr.mxu0 0.0
        %527 = vmatpush1.msra.mxu0 0.0
        %528 = vmatprep.subr.mxu0 0.0
        %529 = vmatpush1.msra.mxu0 0.0
        %530 = vmatprep.subr.mxu0 0.0
        %531 = vmatpush1.msra.mxu0 0.0
        %532 = vmatprep.subr.mxu0 0.0
        %533 = vmatpush1.msra.mxu0 0.0
        %534 = vmatprep.mubr.f32.mxu0 0.0
        %535 = vmatmul.mubr.f32.gmra.mrb[0].mxu0 %v455
        %v536 = vpop.f32.mrb[0].mxu0
        %v537 = vadd.f32 0.0, %v536
        %v538 = vpop.f32.mrb[0].mxu0
        %539 = vmatprep.mubr.f32.mxu0 0.0
        %540 = vmatmul.mubr.f32.gmra.mrb[0].mxu0 %v458
        %v541 = vpop.f32.mrb[0].mxu0
        %v542 = vadd.f32 0.0, %v541
        %v543 = vpop.f32.mrb[0].mxu0
        %544 = vmatprep.mubr.f32.mxu0 0.0
        %545 = vmatmul.mubr.f32.gmra.mrb[0].mxu0 %v461
        %v546 = vpop.f32.mrb[0].mxu0
        %v547 = vadd.f32 0.0, %v546
        %v548 = vpop.f32.mrb[0].mxu0
        %549 = vmatprep.mubr.f32.mxu0 0.0
        %550 = vmatmul.mubr.f32.gmra.mrb[0].mxu0 %v464
        %v551 = vpop.f32.mrb[0].mxu0
        %v552 = vadd.f32 0.0, %v551
        %v553 = vpop.f32.mrb[0].mxu0
        %554 = vdwg.mxu0
        %559 = vrot.lane.b32.xlu0 %v537, 127
        %v560 = vpop.permute.xlu0 %559
        %561 = vrot.lane.b32.xlu0 %v542, 127
        %v562 = vpop.permute.xlu0 %561
        %563 = vrot.lane.b32.xlu0 %v547, 127
        %v564 = vpop.permute.xlu0 %563
        %565 = vrot.lane.b32.xlu0 %v552, 127
        %v566 = vpop.permute.xlu0 %565
        %v571 = vadd.f32 %v537, %v560
        %v572 = vadd.f32 %v542, %v562
        %v573 = vadd.f32 %v547, %v564
        %v574 = vadd.f32 %v552, %v566
        %v575 = vxor.u32 %v571, 2147483648
        %v576 = vxor.u32 %v572, 2147483648
        %v577 = vxor.u32 %v573, 2147483648
        %v578 = vxor.u32 %v574, 2147483648
        %v579 = vmul.f32 %v575, 1.442695
        %v580 = vpow.pop %v579
        %v581 = vmul.f32 %v576, 1.442695
        %v582 = vpow.pop %v581
        %v583 = vmul.f32 %v577, 1.442695
        %v584 = vpow.pop %v583
        %v585 = vmul.f32 %v578, 1.442695
        %v586 = vpow.pop %v585
        %v587 = vadd.f32 %v580, 1.0
        %v588 = vadd.f32 %v582, 1.0
        %v589 = vadd.f32 %v584, 1.0
        %v590 = vadd.f32 %v586, 1.0
        %v591 = vrcp.pop %v587
        %v592 = vmul.f32 1.0, %v591
        %v593 = vrcp.pop %v588
        %v594 = vmul.f32 1.0, %v593
        %v595 = vrcp.pop %v589
        %v596 = vmul.f32 1.0, %v595
        %v597 = vrcp.pop %v590
        %v598 = vmul.f32 1.0, %v597
        %600 = vset.pattern.permute.xlu0 0
        %601 = vperm.xlu0 %600, %v592
        %v602 = vpop.permute.xlu0 %601
        %605 = vset.pattern.permute.xlu0 0
        %606 = vperm.xlu0 %605, %v594
        %v607 = vpop.permute.xlu0 %606
        %610 = vset.pattern.permute.xlu0 0
        %611 = vperm.xlu0 %610, %v596
        %v612 = vpop.permute.xlu0 %611
        %615 = vset.pattern.permute.xlu0 0
        %616 = vperm.xlu0 %615, %v598
        %v617 = vpop.permute.xlu0 %616
        %v619 = vmul.f32 %v259, %v602
        %v620 = vmul.f32 %v260, %v602
        %v621 = vmul.f32 %v261, %v607
        %v622 = vmul.f32 %v262, %v607
        %v623 = vmul.f32 %v263, %v612
        %v624 = vmul.f32 %v264, %v612
        %v625 = vmul.f32 %v265, %v617
        %v626 = vmul.f32 %v266, %v617
        %v628 = vsel %vm374, 1.0, 0
        %630 = vmatprep.subr.mxu0 %v620
        %631 = vmatpush1.msra.mxu0 %v619
        %632 = vmatprep.subr.mxu0 %v622
        %633 = vmatpush1.msra.mxu0 %v621
        %634 = vmatprep.subr.mxu0 %v624
        %635 = vmatpush1.msra.mxu0 %v623
        %636 = vmatprep.subr.mxu0 %v626
        %637 = vmatpush1.msra.mxu0 %v625
        %638 = vmatprep.subr.mxu0 0.0
        %639 = vmatpush1.msra.mxu0 0.0
        %640 = vmatprep.subr.mxu0 0.0
        %641 = vmatpush1.msra.mxu0 0.0
        %642 = vmatprep.subr.mxu0 0.0
        %643 = vmatpush1.msra.mxu0 0.0
        %644 = vmatprep.subr.mxu0 0.0
        %645 = vmatpush1.msra.mxu0 0.0
        %646 = vmatprep.subr.mxu0 0.0
        %647 = vmatpush1.msra.mxu0 0.0
        %648 = vmatprep.subr.mxu0 0.0
        %649 = vmatpush1.msra.mxu0 0.0
        %650 = vmatprep.subr.mxu0 0.0
        %651 = vmatpush1.msra.mxu0 0.0
        %652 = vmatprep.subr.mxu0 0.0
        %653 = vmatpush1.msra.mxu0 0.0
        %654 = vmatprep.subr.mxu0 0.0
        %655 = vmatpush1.msra.mxu0 0.0
        %656 = vmatprep.subr.mxu0 0.0
        %657 = vmatpush1.msra.mxu0 0.0
        %658 = vmatprep.subr.mxu0 0.0
        %659 = vmatpush1.msra.mxu0 0.0
        %660 = vmatprep.subr.mxu0 0.0
        %661 = vmatpush1.msra.mxu0 0.0
        %662 = vmatprep.subr.mxu0 0.0
        %663 = vmatpush1.msra.mxu0 0.0
        %664 = vmatprep.subr.mxu0 0.0
        %665 = vmatpush1.msra.mxu0 0.0
        %666 = vmatprep.subr.mxu0 0.0
        %667 = vmatpush1.msra.mxu0 0.0
        %668 = vmatprep.subr.mxu0 0.0
        %669 = vmatpush1.msra.mxu0 0.0
        %670 = vmatprep.subr.mxu0 0.0
        %671 = vmatpush1.msra.mxu0 0.0
        %672 = vmatprep.subr.mxu0 0.0
        %673 = vmatpush1.msra.mxu0 0.0
        %674 = vmatprep.subr.mxu0 0.0
        %675 = vmatpush1.msra.mxu0 0.0
        %676 = vmatprep.subr.mxu0 0.0
        %677 = vmatpush1.msra.mxu0 0.0
        %678 = vmatprep.subr.mxu0 0.0
        %679 = vmatpush1.msra.mxu0 0.0
        %680 = vmatprep.subr.mxu0 0.0
        %681 = vmatpush1.msra.mxu0 0.0
        %682 = vmatprep.subr.mxu0 0.0
        %683 = vmatpush1.msra.mxu0 0.0
        %684 = vmatprep.subr.mxu0 0.0
        %685 = vmatpush1.msra.mxu0 0.0
        %686 = vmatprep.subr.mxu0 0.0
        %687 = vmatpush1.msra.mxu0 0.0
        %688 = vmatprep.subr.mxu0 0.0
        %689 = vmatpush1.msra.mxu0 0.0
        %690 = vmatprep.subr.mxu0 0.0
        %691 = vmatpush1.msra.mxu0 0.0
        %692 = vmatprep.subr.mxu0 0.0
        %693 = vmatpush1.msra.mxu0 0.0
        %694 = vmatprep.mubr.f32.mxu0 0.0
        %695 = vmatmul.mubr.f32.gmra.mrb[0].mxu0 %v628
        %v696 = vpop.f32.mrb[0].mxu0
        %v697 = vadd.f32 0.0, %v696
        %v698 = vpop.f32.mrb[0].mxu0
        %v699 = vadd.f32 0.0, %v698
        %700 = vdwg.mxu0
        %v701 = vmul.f32 %v697, 0.03125
        %v702 = vmul.f32 %v699, 0.03125
        %v703 = vmax.f32 %v619, %v623
        %v704 = vmax.f32 %v621, %v625
        %v705 = vmax.f32 %v703, %v704
        %v706 = vrot.slane %v705, 4
        %v707 = vmax.f32 %v705, %v706
        %v708 = vrot.slane %v707, 2
        %v709 = vmax.f32 %v707, %v708
        %v710 = vrot.slane %v709, 1
        %v711 = vmax.f32 %v709, %v710
        %v712 = vmax.f32 %v620, %v624
        %v713 = vmax.f32 %v622, %v626
        %v714 = vmax.f32 %v712, %v713
        %v715 = vrot.slane %v714, 4
        %v716 = vmax.f32 %v714, %v715
        %v717 = vrot.slane %v716, 2
        %v718 = vmax.f32 %v716, %v717
        %v719 = vrot.slane %v718, 1
        %v720 = vmax.f32 %v718, %v719
        %722 = vrot.lane.b32.xlu0 %v701, 3
        %v723 = vpop.permute.xlu0 %722
        %vm725 = vcmask 23552
        %v726 = vsel %vm725, 0.0, %v723
        %vm727 = vcmask 154624
        %v728 = vsel %vm727, %v726, 0.0
        %729 = vrot.lane.b32.xlu0 %v701, 115
        %v730 = vpop.permute.xlu0 %729
        %v732 = vsel %vm725, 0.0, %v730
        %v733 = vsel %vm727, %v732, 0.0
        %734 = vrot.lane.b32.xlu0 %v701, 99
        %v735 = vpop.permute.xlu0 %734
        %v737 = vsel %vm725, 0.0, %v735
        %v738 = vsel %vm727, %v737, 0.0
        %739 = vrot.lane.b32.xlu0 %v701, 83
        %v740 = vpop.permute.xlu0 %739
        %v742 = vsel %vm725, 0.0, %v740
        %v743 = vsel %vm727, %v742, 0.0
        %744 = vrot.lane.b32.xlu0 %v701, 67
        %v745 = vpop.permute.xlu0 %744
        %v747 = vsel %vm725, 0.0, %v745
        %v748 = vsel %vm727, %v747, 0.0
        %749 = vrot.lane.b32.xlu0 %v701, 51
        %v750 = vpop.permute.xlu0 %749
        %v752 = vsel %vm725, 0.0, %v750
        %v753 = vsel %vm727, %v752, 0.0
        %754 = vrot.lane.b32.xlu0 %v701, 35
        %v755 = vpop.permute.xlu0 %754
        %v757 = vsel %vm725, 0.0, %v755
        %v758 = vsel %vm727, %v757, 0.0
        %759 = vrot.lane.b32.xlu0 %v701, 19
        %v760 = vpop.permute.xlu0 %759
        %v762 = vsel %vm725, 0.0, %v760
        %v763 = vsel %vm727, %v762, 0.0
        %765 = vrot.lane.b32.xlu0 %v702, 3
        %v766 = vpop.permute.xlu0 %765
        %v768 = vsel %vm725, 0.0, %v766
        %v769 = vsel %vm727, %v768, 0.0
        %770 = vrot.lane.b32.xlu0 %v702, 115
        %v771 = vpop.permute.xlu0 %770
        %v773 = vsel %vm725, 0.0, %v771
        %v774 = vsel %vm727, %v773, 0.0
        %775 = vrot.lane.b32.xlu0 %v702, 99
        %v776 = vpop.permute.xlu0 %775
        %v778 = vsel %vm725, 0.0, %v776
        %v779 = vsel %vm727, %v778, 0.0
        %780 = vrot.lane.b32.xlu0 %v702, 83
        %v781 = vpop.permute.xlu0 %780
        %v783 = vsel %vm725, 0.0, %v781
        %v784 = vsel %vm727, %v783, 0.0
        %785 = vrot.lane.b32.xlu0 %v702, 67
        %v786 = vpop.permute.xlu0 %785
        %v788 = vsel %vm725, 0.0, %v786
        %v789 = vsel %vm727, %v788, 0.0
        %790 = vrot.lane.b32.xlu0 %v702, 51
        %v791 = vpop.permute.xlu0 %790
        %v793 = vsel %vm725, 0.0, %v791
        %v794 = vsel %vm727, %v793, 0.0
        %795 = vrot.lane.b32.xlu0 %v702, 35
        %v796 = vpop.permute.xlu0 %795
        %v798 = vsel %vm725, 0.0, %v796
        %v799 = vsel %vm727, %v798, 0.0
        %800 = vrot.lane.b32.xlu0 %v702, 19
        %v801 = vpop.permute.xlu0 %800
        %v803 = vsel %vm725, 0.0, %v801
        %v804 = vsel %vm727, %v803, 0.0
        %v806 = vrot.slane %v728, 5
        %v809 = vrot.slane %v733, 4
        %v812 = vrot.slane %v738, 3
        %v815 = vrot.slane %v743, 2
        %v818 = vrot.slane %v748, 1
        %v821 = vrot.slane %v758, 7
        %v824 = vrot.slane %v763, 6
        %v827 = vrot.slane %v769, 5
        %v830 = vrot.slane %v774, 4
        %v833 = vrot.slane %v779, 3
        %v836 = vrot.slane %v784, 2
        %v839 = vrot.slane %v789, 1
        %v842 = vrot.slane %v799, 7
        %vm844 = vcmask 1042432
        %v845 = vsel %vm844, 0.0, %v806
        %vm846 = vcmask 1043456
        %v847 = vsel %vm846, %v845, %v809
        %vm848 = vcmask 1044480
        %v849 = vsel %vm848, %v847, %v812
        %vm850 = vcmask 1045504
        %v851 = vsel %vm850, %v849, %v815
        %vm852 = vcmask 1046528
        %v853 = vsel %vm852, %v851, %v818
        %vm854 = vcmask 1040384
        %v855 = vsel %vm854, %v753, %v821
        %v856 = vsel %vm466, %v855, %v824
        %v857 = vsel %vm844, %v856, %v827
        %v858 = vsel %vm846, %v857, %v830
        %v859 = vsel %vm848, %v858, %v833
        %v860 = vsel %vm850, %v859, %v836
        %v861 = vsel %vm852, %v860, %v839
        %v862 = vsel %vm854, %v794, %v842
        %v863 = vsel %vm854, %v804, 0.0
        %v865 = vrot.slane %v863, 6
        %v867 = vsel %vm466, %v862, %v865
        %869 = vrot.lane.b32.xlu0 %v711, 3
        %v870 = vpop.permute.xlu0 %869
        %v872 = vsel %vm725, 0.0, %v870
        %v873 = vsel %vm727, %v872, 0.0
        %874 = vrot.lane.b32.xlu0 %v711, 115
        %v875 = vpop.permute.xlu0 %874
        %v877 = vsel %vm725, 0.0, %v875
        %v878 = vsel %vm727, %v877, 0.0
        %879 = vrot.lane.b32.xlu0 %v711, 99
        %v880 = vpop.permute.xlu0 %879
        %v882 = vsel %vm725, 0.0, %v880
        %v883 = vsel %vm727, %v882, 0.0
        %884 = vrot.lane.b32.xlu0 %v711, 83
        %v885 = vpop.permute.xlu0 %884
        %v887 = vsel %vm725, 0.0, %v885
        %v888 = vsel %vm727, %v887, 0.0
        %889 = vrot.lane.b32.xlu0 %v711, 67
        %v890 = vpop.permute.xlu0 %889
        %v892 = vsel %vm725, 0.0, %v890
        %v893 = vsel %vm727, %v892, 0.0
        %894 = vrot.lane.b32.xlu0 %v711, 51
        %v895 = vpop.permute.xlu0 %894
        %v897 = vsel %vm725, 0.0, %v895
        %v898 = vsel %vm727, %v897, 0.0
        %899 = vrot.lane.b32.xlu0 %v711, 35
        %v900 = vpop.permute.xlu0 %899
        %v902 = vsel %vm725, 0.0, %v900
        %v903 = vsel %vm727, %v902, 0.0
        %904 = vrot.lane.b32.xlu0 %v711, 19
        %v905 = vpop.permute.xlu0 %904
        %v907 = vsel %vm725, 0.0, %v905
        %v908 = vsel %vm727, %v907, 0.0
        %910 = vrot.lane.b32.xlu0 %v720, 3
        %v911 = vpop.permute.xlu0 %910
        %v913 = vsel %vm725, 0.0, %v911
        %v914 = vsel %vm727, %v913, 0.0
        %915 = vrot.lane.b32.xlu0 %v720, 115
        %v916 = vpop.permute.xlu0 %915
        %v918 = vsel %vm725, 0.0, %v916
        %v919 = vsel %vm727, %v918, 0.0
        %920 = vrot.lane.b32.xlu0 %v720, 99
        %v921 = vpop.permute.xlu0 %920
        %v923 = vsel %vm725, 0.0, %v921
        %v924 = vsel %vm727, %v923, 0.0
        %925 = vrot.lane.b32.xlu0 %v720, 83
        %v926 = vpop.permute.xlu0 %925
        %v928 = vsel %vm725, 0.0, %v926
        %v929 = vsel %vm727, %v928, 0.0
        %930 = vrot.lane.b32.xlu0 %v720, 67
        %v931 = vpop.permute.xlu0 %930
        %v933 = vsel %vm725, 0.0, %v931
        %v934 = vsel %vm727, %v933, 0.0
        %935 = vrot.lane.b32.xlu0 %v720, 51
        %v936 = vpop.permute.xlu0 %935
        %v938 = vsel %vm725, 0.0, %v936
        %v939 = vsel %vm727, %v938, 0.0
        %940 = vrot.lane.b32.xlu0 %v720, 35
        %v941 = vpop.permute.xlu0 %940
        %v943 = vsel %vm725, 0.0, %v941
        %v944 = vsel %vm727, %v943, 0.0
        %945 = vrot.lane.b32.xlu0 %v720, 19
        %v946 = vpop.permute.xlu0 %945
        %v948 = vsel %vm725, 0.0, %v946
        %v949 = vsel %vm727, %v948, 0.0
        %v951 = vrot.slane %v873, 5
        %v954 = vrot.slane %v878, 4
        %v957 = vrot.slane %v883, 3
        %v960 = vrot.slane %v888, 2
        %v963 = vrot.slane %v893, 1
        %v966 = vrot.slane %v903, 7
        %v969 = vrot.slane %v908, 6
        %v972 = vrot.slane %v914, 5
        %v975 = vrot.slane %v919, 4
        %v978 = vrot.slane %v924, 3
        %v981 = vrot.slane %v929, 2
        %v984 = vrot.slane %v934, 1
        %v987 = vrot.slane %v944, 7
        %v989 = vsel %vm844, 0.0, %v951
        %v990 = vsel %vm846, %v989, %v954
        %v991 = vsel %vm848, %v990, %v957
        %v992 = vsel %vm850, %v991, %v960
        %v993 = vsel %vm852, %v992, %v963
        %v994 = vsel %vm854, %v898, %v966
        %v995 = vsel %vm466, %v994, %v969
        %v996 = vsel %vm844, %v995, %v972
        %v997 = vsel %vm846, %v996, %v975
        %v998 = vsel %vm848, %v997, %v978
        %v999 = vsel %vm850, %v998, %v981
        %v1000 = vsel %vm852, %v999, %v984
        %v1001 = vsel %vm854, %v939, %v987
        %v1002 = vsel %vm854, %v949, 0.0
        %v1004 = vrot.slane %v1002, 6
        %v1006 = vsel %vm466, %v1001, %v1004
        %s1007 = sld [smem:[#allocation9]]
        %v1008 = vstv %s1007
        %v1009 = vmul.f32 %v1008, %v853
        %v1010 = vmul.f32 %v1008, %v861
        %v1011 = vadd.f32 %v1009, 0.0
        %v1012 = vadd.f32 %v1010, 0.0
        %s1013 = sld [smem:[#allocation9 + $0x1]]
        %v1014 = vstv %s1013
        %v1015 = vmul.f32 %v1014, %v853
        %v1016 = vmul.f32 %v1014, %v861
        %1019 = vrot.lane.b32.xlu0 %v1015, 127
        %v1020 = vpop.permute.xlu0 %1019
        %1021 = vrot.lane.b32.xlu0 %v1016, 127
        %v1022 = vpop.permute.xlu0 %1021
        %v1025 = vadd.f32 %v1011, %v1020
        %v1026 = vadd.f32 %v1012, %v1022
        %s1027 = sld [smem:[#allocation9 + $0x2]]
        %v1028 = vstv %s1027
        %v1029 = vmul.f32 %v1028, %v853
        %v1030 = vmul.f32 %v1028, %v861
        %1033 = vrot.lane.b32.xlu0 %v1029, 126
        %v1034 = vpop.permute.xlu0 %1033
        %1035 = vrot.lane.b32.xlu0 %v1030, 126
        %v1036 = vpop.permute.xlu0 %1035
        %v1039 = vadd.f32 %v1025, %v1034
        %v1040 = vadd.f32 %v1026, %v1036
        %s1041 = sld [smem:[#allocation9 + $0x3]]
        %v1042 = vstv %s1041
        %v1043 = vmul.f32 %v1042, %v853
        %v1044 = vmul.f32 %v1042, %v861
        %1047 = vrot.lane.b32.xlu0 %v1043, 125
        %v1048 = vpop.permute.xlu0 %1047
        %1049 = vrot.lane.b32.xlu0 %v1044, 125
        %v1050 = vpop.permute.xlu0 %1049
        %v1053 = vadd.f32 %v1039, %v1048
        %v1054 = vadd.f32 %v1040, %v1050
        %s1055 = sld [smem:[#allocation9 + $0x4]]
        %v1056 = vstv %s1055
        %v1057 = vmul.f32 %v1056, %v853
        %v1058 = vmul.f32 %v1056, %v861
        %1061 = vrot.lane.b32.xlu0 %v1057, 124
        %v1062 = vpop.permute.xlu0 %1061
        %1063 = vrot.lane.b32.xlu0 %v1058, 124
        %v1064 = vpop.permute.xlu0 %1063
        %v1067 = vadd.f32 %v1053, %v1062
        %v1068 = vadd.f32 %v1054, %v1064
        %s1069 = sld [smem:[#allocation9 + $0x5]]
        %v1070 = vstv %s1069
        %v1071 = vmul.f32 %v1070, %v853
        %v1072 = vmul.f32 %v1070, %v861
        %1075 = vrot.lane.b32.xlu0 %v1071, 123
        %v1076 = vpop.permute.xlu0 %1075
        %1077 = vrot.lane.b32.xlu0 %v1072, 123
        %v1078 = vpop.permute.xlu0 %1077
        %v1081 = vadd.f32 %v1067, %v1076
        %v1082 = vadd.f32 %v1068, %v1078
        %s1083 = sld [smem:[#allocation9 + $0x6]]
        %v1084 = vstv %s1083
        %v1085 = vmul.f32 %v1084, %v853
        %v1086 = vmul.f32 %v1084, %v861
        %1089 = vrot.lane.b32.xlu0 %v1085, 122
        %v1090 = vpop.permute.xlu0 %1089
        %1091 = vrot.lane.b32.xlu0 %v1086, 122
        %v1092 = vpop.permute.xlu0 %1091
        %v1095 = vadd.f32 %v1081, %v1090
        %v1096 = vadd.f32 %v1082, %v1092
        %s1097 = sld [smem:[#allocation9 + $0x7]]
        %v1098 = vstv %s1097
        %v1099 = vmul.f32 %v1098, %v853
        %v1100 = vmul.f32 %v1098, %v861
        %v1101 = vmul.f32 %v1098, %v867
        %v1105 = vrot.slane %v1099, 1
        %v1106 = vrot.slane %v1100, 1
        %v1107 = vsel %vm852, %v1105, %v1106
        %v1108 = vrot.slane %v1101, 1
        %v1109 = vsel %vm852, %v1106, %v1108
        %v1112 = vadd.f32 %v1095, %v1107
        %v1113 = vadd.f32 %v1096, %v1109
        %s1114 = sld [smem:[#allocation9 + $0x8]]
        %v1115 = vstv %s1114
        %v1116 = vmul.f32 %v1115, %v853
        %v1117 = vmul.f32 %v1115, %v861
        %v1118 = vmul.f32 %v1115, %v867
        %v1122 = vrot.slane %v1116, 1
        %v1123 = vrot.slane %v1117, 1
        %v1124 = vsel %vm852, %v1122, %v1123
        %v1125 = vrot.slane %v1118, 1
        %v1126 = vsel %vm852, %v1123, %v1125
        %1127 = vrot.lane.b32.xlu0 %v1124, 127
        %v1128 = vpop.permute.xlu0 %1127
        %1129 = vrot.lane.b32.xlu0 %v1126, 127
        %v1130 = vpop.permute.xlu0 %1129
        %v1133 = vadd.f32 %v1112, %v1128
        %v1134 = vadd.f32 %v1113, %v1130
        %s1135 = sld [smem:[#allocation9 + $0x9]]
        %v1136 = vstv %s1135
        %v1137 = vmul.f32 %v1136, %v853
        %v1138 = vmul.f32 %v1136, %v861
        %v1139 = vmul.f32 %v1136, %v867
        %v1143 = vrot.slane %v1137, 1
        %v1144 = vrot.slane %v1138, 1
        %v1145 = vsel %vm852, %v1143, %v1144
        %v1146 = vrot.slane %v1139, 1
        %v1147 = vsel %vm852, %v1144, %v1146
        %1148 = vrot.lane.b32.xlu0 %v1145, 126
        %v1149 = vpop.permute.xlu0 %1148
        %1150 = vrot.lane.b32.xlu0 %v1147, 126
        %v1151 = vpop.permute.xlu0 %1150
        %v1154 = vadd.f32 %v1133, %v1149
        %v1155 = vadd.f32 %v1134, %v1151
        %s1156 = sld [smem:[#allocation9 + $0xa]]
        %v1157 = vstv %s1156
        %v1158 = vmul.f32 %v1157, %v853
        %v1159 = vmul.f32 %v1157, %v861
        %v1160 = vmul.f32 %v1157, %v867
        %v1164 = vrot.slane %v1158, 1
        %v1165 = vrot.slane %v1159, 1
        %v1166 = vsel %vm852, %v1164, %v1165
        %v1167 = vrot.slane %v1160, 1
        %v1168 = vsel %vm852, %v1165, %v1167
        %1169 = vrot.lane.b32.xlu0 %v1166, 125
        %v1170 = vpop.permute.xlu0 %1169
        %1171 = vrot.lane.b32.xlu0 %v1168, 125
        %v1172 = vpop.permute.xlu0 %1171
        %v1175 = vadd.f32 %v1154, %v1170
        %v1176 = vadd.f32 %v1155, %v1172
        %s1177 = sld [smem:[#allocation9 + $0xb]]
        %v1178 = vstv %s1177
        %v1179 = vmul.f32 %v1178, %v853
        %v1180 = vmul.f32 %v1178, %v861
        %v1181 = vmul.f32 %v1178, %v867
        %v1185 = vrot.slane %v1179, 1
        %v1186 = vrot.slane %v1180, 1
        %v1187 = vsel %vm852, %v1185, %v1186
        %v1188 = vrot.slane %v1181, 1
        %v1189 = vsel %vm852, %v1186, %v1188
        %1190 = vrot.lane.b32.xlu0 %v1187, 124
        %v1191 = vpop.permute.xlu0 %1190
        %1192 = vrot.lane.b32.xlu0 %v1189, 124
        %v1193 = vpop.permute.xlu0 %1192
        %v1196 = vadd.f32 %v1175, %v1191
        %v1197 = vadd.f32 %v1176, %v1193
        %s1198 = sld [smem:[#allocation9 + $0xc]]
        %v1199 = vstv %s1198
        %v1200 = vmul.f32 %v1199, %v853
        %v1201 = vmul.f32 %v1199, %v861
        %v1202 = vmul.f32 %v1199, %v867
        %v1206 = vrot.slane %v1200, 1
        %v1207 = vrot.slane %v1201, 1
        %v1208 = vsel %vm852, %v1206, %v1207
        %v1209 = vrot.slane %v1202, 1
        %v1210 = vsel %vm852, %v1207, %v1209
        %1211 = vrot.lane.b32.xlu0 %v1208, 123
        %v1212 = vpop.permute.xlu0 %1211
        %1213 = vrot.lane.b32.xlu0 %v1210, 123
        %v1214 = vpop.permute.xlu0 %1213
        %v1217 = vadd.f32 %v1196, %v1212
        %v1218 = vadd.f32 %v1197, %v1214
        %s1219 = sld [smem:[#allocation9 + $0xd]]
        %v1220 = vstv %s1219
        %v1221 = vmul.f32 %v1220, %v853
        %v1222 = vmul.f32 %v1220, %v861
        %v1223 = vmul.f32 %v1220, %v867
        %v1227 = vrot.slane %v1221, 1
        %v1228 = vrot.slane %v1222, 1
        %v1229 = vsel %vm852, %v1227, %v1228
        %v1230 = vrot.slane %v1223, 1
        %v1231 = vsel %vm852, %v1228, %v1230
        %1232 = vrot.lane.b32.xlu0 %v1229, 122
        %v1233 = vpop.permute.xlu0 %1232
        %1234 = vrot.lane.b32.xlu0 %v1231, 122
        %v1235 = vpop.permute.xlu0 %1234
        %v1238 = vadd.f32 %v1217, %v1233
        %v1239 = vadd.f32 %v1218, %v1235
        %s1240 = sld [smem:[#allocation9 + $0xe]]
        %v1241 = vstv %s1240
        %v1242 = vmul.f32 %v1241, %v853
        %v1243 = vmul.f32 %v1241, %v861
        %v1244 = vmul.f32 %v1241, %v867
        %v1248 = vrot.slane %v1242, 2
        %v1249 = vrot.slane %v1243, 2
        %v1250 = vsel %vm850, %v1248, %v1249
        %v1251 = vrot.slane %v1244, 2
        %v1252 = vsel %vm850, %v1249, %v1251
        %v1255 = vadd.f32 %v1238, %v1250
        %v1256 = vadd.f32 %v1239, %v1252
        %s1257 = sld [smem:[#allocation9 + $0xf]]
        %v1258 = vstv %s1257
        %v1259 = vmul.f32 %v1258, %v853
        %v1260 = vmul.f32 %v1258, %v861
        %v1261 = vmul.f32 %v1258, %v867
        %v1265 = vrot.slane %v1259, 2
        %v1266 = vrot.slane %v1260, 2
        %v1267 = vsel %vm850, %v1265, %v1266
        %v1268 = vrot.slane %v1261, 2
        %v1269 = vsel %vm850, %v1266, %v1268
        %1270 = vrot.lane.b32.xlu0 %v1267, 127
        %v1271 = vpop.permute.xlu0 %1270
        %1272 = vrot.lane.b32.xlu0 %v1269, 127
        %v1273 = vpop.permute.xlu0 %1272
        %v1276 = vadd.f32 %v1255, %v1271
        %v1277 = vadd.f32 %v1256, %v1273
        %s1278 = sld [smem:[#allocation9 + $0x10]]
        %v1279 = vstv %s1278
        %v1280 = vmul.f32 %v1279, %v853
        %v1281 = vmul.f32 %v1279, %v861
        %v1282 = vmul.f32 %v1279, %v867
        %v1286 = vrot.slane %v1280, 2
        %v1287 = vrot.slane %v1281, 2
        %v1288 = vsel %vm850, %v1286, %v1287
        %v1289 = vrot.slane %v1282, 2
        %v1290 = vsel %vm850, %v1287, %v1289
        %1291 = vrot.lane.b32.xlu0 %v1288, 126
        %v1292 = vpop.permute.xlu0 %1291
        %1293 = vrot.lane.b32.xlu0 %v1290, 126
        %v1294 = vpop.permute.xlu0 %1293
        %v1297 = vadd.f32 %v1276, %v1292
        %v1298 = vadd.f32 %v1277, %v1294
        %s1299 = sld [smem:[#allocation9 + $0x11]]
        %v1300 = vstv %s1299
        %v1301 = vmul.f32 %v1300, %v853
        %v1302 = vmul.f32 %v1300, %v861
        %v1303 = vmul.f32 %v1300, %v867
        %v1307 = vrot.slane %v1301, 2
        %v1308 = vrot.slane %v1302, 2
        %v1309 = vsel %vm850, %v1307, %v1308
        %v1310 = vrot.slane %v1303, 2
        %v1311 = vsel %vm850, %v1308, %v1310
        %1312 = vrot.lane.b32.xlu0 %v1309, 125
        %v1313 = vpop.permute.xlu0 %1312
        %1314 = vrot.lane.b32.xlu0 %v1311, 125
        %v1315 = vpop.permute.xlu0 %1314
        %v1318 = vadd.f32 %v1297, %v1313
        %v1319 = vadd.f32 %v1298, %v1315
        %s1320 = sld [smem:[#allocation9 + $0x12]]
        %v1321 = vstv %s1320
        %v1322 = vmul.f32 %v1321, %v853
        %v1323 = vmul.f32 %v1321, %v861
        %v1324 = vmul.f32 %v1321, %v867
        %v1328 = vrot.slane %v1322, 2
        %v1329 = vrot.slane %v1323, 2
        %v1330 = vsel %vm850, %v1328, %v1329
        %v1331 = vrot.slane %v1324, 2
        %v1332 = vsel %vm850, %v1329, %v1331
        %1333 = vrot.lane.b32.xlu0 %v1330, 124
        %v1334 = vpop.permute.xlu0 %1333
        %1335 = vrot.lane.b32.xlu0 %v1332, 124
        %v1336 = vpop.permute.xlu0 %1335
        %v1339 = vadd.f32 %v1318, %v1334
        %v1340 = vadd.f32 %v1319, %v1336
        %s1341 = sld [smem:[#allocation9 + $0x13]]
        %v1342 = vstv %s1341
        %v1343 = vmul.f32 %v1342, %v853
        %v1344 = vmul.f32 %v1342, %v861
        %v1345 = vmul.f32 %v1342, %v867
        %v1349 = vrot.slane %v1343, 2
        %v1350 = vrot.slane %v1344, 2
        %v1351 = vsel %vm850, %v1349, %v1350
        %v1352 = vrot.slane %v1345, 2
        %v1353 = vsel %vm850, %v1350, %v1352
        %1354 = vrot.lane.b32.xlu0 %v1351, 123
        %v1355 = vpop.permute.xlu0 %1354
        %1356 = vrot.lane.b32.xlu0 %v1353, 123
        %v1357 = vpop.permute.xlu0 %1356
        %v1360 = vadd.f32 %v1339, %v1355
        %v1361 = vadd.f32 %v1340, %v1357
        %s1362 = sld [smem:[#allocation9 + $0x14]]
        %v1363 = vstv %s1362
        %v1364 = vmul.f32 %v1363, %v853
        %v1365 = vmul.f32 %v1363, %v861
        %v1366 = vmul.f32 %v1363, %v867
        %v1370 = vrot.slane %v1364, 2
        %v1371 = vrot.slane %v1365, 2
        %v1372 = vsel %vm850, %v1370, %v1371
        %v1373 = vrot.slane %v1366, 2
        %v1374 = vsel %vm850, %v1371, %v1373
        %1375 = vrot.lane.b32.xlu0 %v1372, 122
        %v1376 = vpop.permute.xlu0 %1375
        %1377 = vrot.lane.b32.xlu0 %v1374, 122
        %v1378 = vpop.permute.xlu0 %1377
        %v1381 = vadd.f32 %v1360, %v1376
        %v1382 = vadd.f32 %v1361, %v1378
        %s1383 = sld [smem:[#allocation9 + $0x15]]
        %v1384 = vstv %s1383
        %v1385 = vmul.f32 %v1384, %v853
        %v1386 = vmul.f32 %v1384, %v861
        %v1387 = vmul.f32 %v1384, %v867
        %v1391 = vrot.slane %v1385, 3
        %v1392 = vrot.slane %v1386, 3
        %v1393 = vsel %vm848, %v1391, %v1392
        %v1394 = vrot.slane %v1387, 3
        %v1395 = vsel %vm848, %v1392, %v1394
        %v1398 = vadd.f32 %v1381, %v1393
        %v1399 = vadd.f32 %v1382, %v1395
        %s1400 = sld [smem:[#allocation9 + $0x16]]
        %v1401 = vstv %s1400
        %v1402 = vmul.f32 %v1401, %v853
        %v1403 = vmul.f32 %v1401, %v861
        %v1404 = vmul.f32 %v1401, %v867
        %v1408 = vrot.slane %v1402, 3
        %v1409 = vrot.slane %v1403, 3
        %v1410 = vsel %vm848, %v1408, %v1409
        %v1411 = vrot.slane %v1404, 3
        %v1412 = vsel %vm848, %v1409, %v1411
        %1413 = vrot.lane.b32.xlu0 %v1410, 127
        %v1414 = vpop.permute.xlu0 %1413
        %1415 = vrot.lane.b32.xlu0 %v1412, 127
        %v1416 = vpop.permute.xlu0 %1415
        %v1419 = vadd.f32 %v1398, %v1414
        %v1420 = vadd.f32 %v1399, %v1416
        %s1421 = sld [smem:[#allocation9 + $0x17]]
        %v1422 = vstv %s1421
        %v1423 = vmul.f32 %v1422, %v853
        %v1424 = vmul.f32 %v1422, %v861
        %v1425 = vmul.f32 %v1422, %v867
        %v1429 = vrot.slane %v1423, 3
        %v1430 = vrot.slane %v1424, 3
        %v1431 = vsel %vm848, %v1429, %v1430
        %v1432 = vrot.slane %v1425, 3
        %v1433 = vsel %vm848, %v1430, %v1432
        %1434 = vrot.lane.b32.xlu0 %v1431, 126
        %v1435 = vpop.permute.xlu0 %1434
        %1436 = vrot.lane.b32.xlu0 %v1433, 126
        %v1437 = vpop.permute.xlu0 %1436
        %v1440 = vadd.f32 %v1419, %v1435
        %v1441 = vadd.f32 %v1420, %v1437
        %s1442 = sld [smem:[#allocation9 + $0x18]]
        %v1443 = vstv %s1442
        %v1444 = vmul.f32 %v1443, %v853
        %v1445 = vmul.f32 %v1443, %v861
        %v1446 = vmul.f32 %v1443, %v867
        %v1450 = vrot.slane %v1444, 3
        %v1451 = vrot.slane %v1445, 3
        %v1452 = vsel %vm848, %v1450, %v1451
        %v1453 = vrot.slane %v1446, 3
        %v1454 = vsel %vm848, %v1451, %v1453
        %1455 = vrot.lane.b32.xlu0 %v1452, 125
        %v1456 = vpop.permute.xlu0 %1455
        %1457 = vrot.lane.b32.xlu0 %v1454, 125
        %v1458 = vpop.permute.xlu0 %1457
        %v1461 = vadd.f32 %v1440, %v1456
        %v1462 = vadd.f32 %v1441, %v1458
        %s1463 = sld [smem:[#allocation9 + $0x19]]
        %v1464 = vstv %s1463
        %v1465 = vmul.f32 %v1464, %v853
        %v1466 = vmul.f32 %v1464, %v861
        %v1467 = vmul.f32 %v1464, %v867
        %v1471 = vrot.slane %v1465, 3
        %v1472 = vrot.slane %v1466, 3
        %v1473 = vsel %vm848, %v1471, %v1472
        %v1474 = vrot.slane %v1467, 3
        %v1475 = vsel %vm848, %v1472, %v1474
        %1476 = vrot.lane.b32.xlu0 %v1473, 124
        %v1477 = vpop.permute.xlu0 %1476
        %1478 = vrot.lane.b32.xlu0 %v1475, 124
        %v1479 = vpop.permute.xlu0 %1478
        %v1482 = vadd.f32 %v1461, %v1477
        %v1483 = vadd.f32 %v1462, %v1479
        %s1484 = sld [smem:[#allocation9 + $0x1a]]
        %v1485 = vstv %s1484
        %v1486 = vmul.f32 %v1485, %v853
        %v1487 = vmul.f32 %v1485, %v861
        %v1488 = vmul.f32 %v1485, %v867
        %v1492 = vrot.slane %v1486, 3
        %v1493 = vrot.slane %v1487, 3
        %v1494 = vsel %vm848, %v1492, %v1493
        %v1495 = vrot.slane %v1488, 3
        %v1496 = vsel %vm848, %v1493, %v1495
        %1497 = vrot.lane.b32.xlu0 %v1494, 123
        %v1498 = vpop.permute.xlu0 %1497
        %1499 = vrot.lane.b32.xlu0 %v1496, 123
        %v1500 = vpop.permute.xlu0 %1499
        %v1503 = vadd.f32 %v1482, %v1498
        %v1504 = vadd.f32 %v1483, %v1500
        %s1505 = sld [smem:[#allocation9 + $0x1b]]
        %v1506 = vstv %s1505
        %v1507 = vmul.f32 %v1506, %v853
        %v1508 = vmul.f32 %v1506, %v861
        %v1509 = vmul.f32 %v1506, %v867
        %v1513 = vrot.slane %v1507, 3
        %v1514 = vrot.slane %v1508, 3
        %v1515 = vsel %vm848, %v1513, %v1514
        %v1516 = vrot.slane %v1509, 3
        %v1517 = vsel %vm848, %v1514, %v1516
        %1518 = vrot.lane.b32.xlu0 %v1515, 122
        %v1519 = vpop.permute.xlu0 %1518
        %1520 = vrot.lane.b32.xlu0 %v1517, 122
        %v1521 = vpop.permute.xlu0 %1520
        %v1524 = vadd.f32 %v1503, %v1519
        %v1525 = vadd.f32 %v1504, %v1521
        %s1526 = sld [smem:[#allocation9 + $0x1c]]
        %v1527 = vstv %s1526
        %v1528 = vmul.f32 %v1527, %v853
        %v1529 = vmul.f32 %v1527, %v861
        %v1530 = vmul.f32 %v1527, %v867
        %v1534 = vrot.slane %v1528, 4
        %v1535 = vrot.slane %v1529, 4
        %v1536 = vsel %vm846, %v1534, %v1535
        %v1537 = vrot.slane %v1530, 4
        %v1538 = vsel %vm846, %v1535, %v1537
        %v1541 = vadd.f32 %v1524, %v1536
        %v1542 = vadd.f32 %v1525, %v1538
        %s1543 = sld [smem:[#allocation9 + $0x1d]]
        %v1544 = vstv %s1543
        %v1545 = vmul.f32 %v1544, %v853
        %v1546 = vmul.f32 %v1544, %v861
        %v1547 = vmul.f32 %v1544, %v867
        %v1551 = vrot.slane %v1545, 4
        %v1552 = vrot.slane %v1546, 4
        %v1553 = vsel %vm846, %v1551, %v1552
        %v1554 = vrot.slane %v1547, 4
        %v1555 = vsel %vm846, %v1552, %v1554
        %1556 = vrot.lane.b32.xlu0 %v1553, 127
        %v1557 = vpop.permute.xlu0 %1556
        %1558 = vrot.lane.b32.xlu0 %v1555, 127
        %v1559 = vpop.permute.xlu0 %1558
        %v1562 = vadd.f32 %v1541, %v1557
        %v1563 = vadd.f32 %v1542, %v1559
        %s1564 = sld [smem:[#allocation9 + $0x1e]]
        %v1565 = vstv %s1564
        %v1566 = vmul.f32 %v1565, %v853
        %v1567 = vmul.f32 %v1565, %v861
        %v1568 = vmul.f32 %v1565, %v867
        %v1572 = vrot.slane %v1566, 4
        %v1573 = vrot.slane %v1567, 4
        %v1574 = vsel %vm846, %v1572, %v1573
        %v1575 = vrot.slane %v1568, 4
        %v1576 = vsel %vm846, %v1573, %v1575
        %1577 = vrot.lane.b32.xlu0 %v1574, 126
        %v1578 = vpop.permute.xlu0 %1577
        %1579 = vrot.lane.b32.xlu0 %v1576, 126
        %v1580 = vpop.permute.xlu0 %1579
        %v1583 = vadd.f32 %v1562, %v1578
        %v1584 = vadd.f32 %v1563, %v1580
        %s1585 = sld [smem:[#allocation9 + $0x1f]]
        %v1586 = vstv %s1585
        %v1587 = vmul.f32 %v1586, %v853
        %v1588 = vmul.f32 %v1586, %v861
        %v1589 = vmul.f32 %v1586, %v867
        %v1593 = vrot.slane %v1587, 4
        %v1594 = vrot.slane %v1588, 4
        %v1595 = vsel %vm846, %v1593, %v1594
        %v1596 = vrot.slane %v1589, 4
        %v1597 = vsel %vm846, %v1594, %v1596
        %1598 = vrot.lane.b32.xlu0 %v1595, 125
        %v1599 = vpop.permute.xlu0 %1598
        %1600 = vrot.lane.b32.xlu0 %v1597, 125
        %v1601 = vpop.permute.xlu0 %1600
        %v1604 = vadd.f32 %v1583, %v1599
        %v1605 = vadd.f32 %v1584, %v1601
        %s1606 = sld [smem:[#allocation9 + $0x20]]
        %v1607 = vstv %s1606
        %v1608 = vmul.f32 %v1607, %v853
        %v1609 = vmul.f32 %v1607, %v861
        %v1610 = vmul.f32 %v1607, %v867
        %v1614 = vrot.slane %v1608, 4
        %v1615 = vrot.slane %v1609, 4
        %v1616 = vsel %vm846, %v1614, %v1615
        %v1617 = vrot.slane %v1610, 4
        %v1618 = vsel %vm846, %v1615, %v1617
        %1619 = vrot.lane.b32.xlu0 %v1616, 124
        %v1620 = vpop.permute.xlu0 %1619
        %1621 = vrot.lane.b32.xlu0 %v1618, 124
        %v1622 = vpop.permute.xlu0 %1621
        %v1625 = vadd.f32 %v1604, %v1620
        %v1626 = vadd.f32 %v1605, %v1622
        %s1627 = sld [smem:[#allocation9 + $0x21]]
        %v1628 = vstv %s1627
        %v1629 = vmul.f32 %v1628, %v853
        %v1630 = vmul.f32 %v1628, %v861
        %v1631 = vmul.f32 %v1628, %v867
        %v1635 = vrot.slane %v1629, 4
        %v1636 = vrot.slane %v1630, 4
        %v1637 = vsel %vm846, %v1635, %v1636
        %v1638 = vrot.slane %v1631, 4
        %v1639 = vsel %vm846, %v1636, %v1638
        %1640 = vrot.lane.b32.xlu0 %v1637, 123
        %v1641 = vpop.permute.xlu0 %1640
        %1642 = vrot.lane.b32.xlu0 %v1639, 123
        %v1643 = vpop.permute.xlu0 %1642
        %v1646 = vadd.f32 %v1625, %v1641
        %v1647 = vadd.f32 %v1626, %v1643
        %s1648 = sld [smem:[#allocation9 + $0x22]]
        %v1649 = vstv %s1648
        %v1650 = vmul.f32 %v1649, %v853
        %v1651 = vmul.f32 %v1649, %v861
        %v1652 = vmul.f32 %v1649, %v867
        %v1656 = vrot.slane %v1650, 4
        %v1657 = vrot.slane %v1651, 4
        %v1658 = vsel %vm846, %v1656, %v1657
        %v1659 = vrot.slane %v1652, 4
        %v1660 = vsel %vm846, %v1657, %v1659
        %1661 = vrot.lane.b32.xlu0 %v1658, 122
        %v1662 = vpop.permute.xlu0 %1661
        %1663 = vrot.lane.b32.xlu0 %v1660, 122
        %v1664 = vpop.permute.xlu0 %1663
        %v1667 = vadd.f32 %v1646, %v1662
        %v1668 = vadd.f32 %v1647, %v1664
        %s1669 = sld [smem:[#allocation9 + $0x23]]
        %v1670 = vstv %s1669
        %v1671 = vmul.f32 %v1670, %v853
        %v1672 = vmul.f32 %v1670, %v861
        %v1673 = vmul.f32 %v1670, %v867
        %v1677 = vrot.slane %v1671, 5
        %v1678 = vrot.slane %v1672, 5
        %v1679 = vsel %vm844, %v1677, %v1678
        %v1680 = vrot.slane %v1673, 5
        %v1681 = vsel %vm844, %v1678, %v1680
        %v1684 = vadd.f32 %v1667, %v1679
        %v1685 = vadd.f32 %v1668, %v1681
        %s1686 = sld [smem:[#allocation9 + $0x24]]
        %v1687 = vstv %s1686
        %v1688 = vmul.f32 %v1687, %v853
        %v1689 = vmul.f32 %v1687, %v861
        %v1690 = vmul.f32 %v1687, %v867
        %v1694 = vrot.slane %v1688, 5
        %v1695 = vrot.slane %v1689, 5
        %v1696 = vsel %vm844, %v1694, %v1695
        %v1697 = vrot.slane %v1690, 5
        %v1698 = vsel %vm844, %v1695, %v1697
        %1699 = vrot.lane.b32.xlu0 %v1696, 127
        %v1700 = vpop.permute.xlu0 %1699
        %1701 = vrot.lane.b32.xlu0 %v1698, 127
        %v1702 = vpop.permute.xlu0 %1701
        %v1705 = vadd.f32 %v1684, %v1700
        %v1706 = vadd.f32 %v1685, %v1702
        %s1707 = sld [smem:[#allocation9 + $0x25]]
        %v1708 = vstv %s1707
        %v1709 = vmul.f32 %v1708, %v853
        %v1710 = vmul.f32 %v1708, %v861
        %v1711 = vmul.f32 %v1708, %v867
        %v1715 = vrot.slane %v1709, 5
        %v1716 = vrot.slane %v1710, 5
        %v1717 = vsel %vm844, %v1715, %v1716
        %v1718 = vrot.slane %v1711, 5
        %v1719 = vsel %vm844, %v1716, %v1718
        %1720 = vrot.lane.b32.xlu0 %v1717, 126
        %v1721 = vpop.permute.xlu0 %1720
        %1722 = vrot.lane.b32.xlu0 %v1719, 126
        %v1723 = vpop.permute.xlu0 %1722
        %v1726 = vadd.f32 %v1705, %v1721
        %v1727 = vadd.f32 %v1706, %v1723
        %s1728 = sld [smem:[#allocation9 + $0x26]]
        %v1729 = vstv %s1728
        %v1730 = vmul.f32 %v1729, %v853
        %v1731 = vmul.f32 %v1729, %v861
        %v1732 = vmul.f32 %v1729, %v867
        %v1736 = vrot.slane %v1730, 5
        %v1737 = vrot.slane %v1731, 5
        %v1738 = vsel %vm844, %v1736, %v1737
        %v1739 = vrot.slane %v1732, 5
        %v1740 = vsel %vm844, %v1737, %v1739
        %1741 = vrot.lane.b32.xlu0 %v1738, 125
        %v1742 = vpop.permute.xlu0 %1741
        %1743 = vrot.lane.b32.xlu0 %v1740, 125
        %v1744 = vpop.permute.xlu0 %1743
        %v1747 = vadd.f32 %v1726, %v1742
        %v1748 = vadd.f32 %v1727, %v1744
        %s1749 = sld [smem:[#allocation9 + $0x27]]
        %v1750 = vstv %s1749
        %v1751 = vmul.f32 %v1750, %v853
        %v1752 = vmul.f32 %v1750, %v861
        %v1753 = vmul.f32 %v1750, %v867
        %v1757 = vrot.slane %v1751, 5
        %v1758 = vrot.slane %v1752, 5
        %v1759 = vsel %vm844, %v1757, %v1758
        %v1760 = vrot.slane %v1753, 5
        %v1761 = vsel %vm844, %v1758, %v1760
        %1762 = vrot.lane.b32.xlu0 %v1759, 124
        %v1763 = vpop.permute.xlu0 %1762
        %1764 = vrot.lane.b32.xlu0 %v1761, 124
        %v1765 = vpop.permute.xlu0 %1764
        %v1768 = vadd.f32 %v1747, %v1763
        %v1769 = vadd.f32 %v1748, %v1765
        %s1770 = sld [smem:[#allocation9 + $0x28]]
        %v1771 = vstv %s1770
        %v1772 = vmul.f32 %v1771, %v853
        %v1773 = vmul.f32 %v1771, %v861
        %v1774 = vmul.f32 %v1771, %v867
        %v1778 = vrot.slane %v1772, 5
        %v1779 = vrot.slane %v1773, 5
        %v1780 = vsel %vm844, %v1778, %v1779
        %v1781 = vrot.slane %v1774, 5
        %v1782 = vsel %vm844, %v1779, %v1781
        %1783 = vrot.lane.b32.xlu0 %v1780, 123
        %v1784 = vpop.permute.xlu0 %1783
        %1785 = vrot.lane.b32.xlu0 %v1782, 123
        %v1786 = vpop.permute.xlu0 %1785
        %v1789 = vadd.f32 %v1768, %v1784
        %v1790 = vadd.f32 %v1769, %v1786
        %s1791 = sld [smem:[#allocation9 + $0x29]]
        %v1792 = vstv %s1791
        %v1793 = vmul.f32 %v1792, %v853
        %v1794 = vmul.f32 %v1792, %v861
        %v1795 = vmul.f32 %v1792, %v867
        %v1799 = vrot.slane %v1793, 5
        %v1800 = vrot.slane %v1794, 5
        %v1801 = vsel %vm844, %v1799, %v1800
        %v1802 = vrot.slane %v1795, 5
        %v1803 = vsel %vm844, %v1800, %v1802
        %1804 = vrot.lane.b32.xlu0 %v1801, 122
        %v1805 = vpop.permute.xlu0 %1804
        %1806 = vrot.lane.b32.xlu0 %v1803, 122
        %v1807 = vpop.permute.xlu0 %1806
        %v1810 = vadd.f32 %v1789, %v1805
        %v1811 = vadd.f32 %v1790, %v1807
        %s1812 = sld [smem:[#allocation9 + $0x2a]]
        %v1813 = vstv %s1812
        %v1814 = vmul.f32 %v1813, %v853
        %v1815 = vmul.f32 %v1813, %v861
        %v1816 = vmul.f32 %v1813, %v867
        %v1820 = vrot.slane %v1814, 6
        %v1821 = vrot.slane %v1815, 6
        %v1822 = vsel %vm466, %v1820, %v1821
        %v1823 = vrot.slane %v1816, 6
        %v1824 = vsel %vm466, %v1821, %v1823
        %v1827 = vadd.f32 %v1810, %v1822
        %v1828 = vadd.f32 %v1811, %v1824
        %s1829 = sld [smem:[#allocation9 + $0x2b]]
        %v1830 = vstv %s1829
        %v1831 = vmul.f32 %v1830, %v853
        %v1832 = vmul.f32 %v1830, %v861
        %v1833 = vmul.f32 %v1830, %v867
        %v1837 = vrot.slane %v1831, 6
        %v1838 = vrot.slane %v1832, 6
        %v1839 = vsel %vm466, %v1837, %v1838
        %v1840 = vrot.slane %v1833, 6
        %v1841 = vsel %vm466, %v1838, %v1840
        %1842 = vrot.lane.b32.xlu0 %v1839, 127
        %v1843 = vpop.permute.xlu0 %1842
        %1844 = vrot.lane.b32.xlu0 %v1841, 127
        %v1845 = vpop.permute.xlu0 %1844
        %v1848 = vadd.f32 %v1827, %v1843
        %v1849 = vadd.f32 %v1828, %v1845
        %s1850 = sld [smem:[#allocation9 + $0x2c]]
        %v1851 = vstv %s1850
        %v1852 = vmul.f32 %v1851, %v853
        %v1853 = vmul.f32 %v1851, %v861
        %v1854 = vmul.f32 %v1851, %v867
        %v1858 = vrot.slane %v1852, 6
        %v1859 = vrot.slane %v1853, 6
        %v1860 = vsel %vm466, %v1858, %v1859
        %v1861 = vrot.slane %v1854, 6
        %v1862 = vsel %vm466, %v1859, %v1861
        %1863 = vrot.lane.b32.xlu0 %v1860, 126
        %v1864 = vpop.permute.xlu0 %1863
        %1865 = vrot.lane.b32.xlu0 %v1862, 126
        %v1866 = vpop.permute.xlu0 %1865
        %v1869 = vadd.f32 %v1848, %v1864
        %v1870 = vadd.f32 %v1849, %v1866
        %s1871 = sld [smem:[#allocation9 + $0x2d]]
        %v1872 = vstv %s1871
        %v1873 = vmul.f32 %v1872, %v853
        %v1874 = vmul.f32 %v1872, %v861
        %v1875 = vmul.f32 %v1872, %v867
        %v1879 = vrot.slane %v1873, 6
        %v1880 = vrot.slane %v1874, 6
        %v1881 = vsel %vm466, %v1879, %v1880
        %v1882 = vrot.slane %v1875, 6
        %v1883 = vsel %vm466, %v1880, %v1882
        %1884 = vrot.lane.b32.xlu0 %v1881, 125
        %v1885 = vpop.permute.xlu0 %1884
        %1886 = vrot.lane.b32.xlu0 %v1883, 125
        %v1887 = vpop.permute.xlu0 %1886
        %v1890 = vadd.f32 %v1869, %v1885
        %v1891 = vadd.f32 %v1870, %v1887
        %s1892 = sld [smem:[#allocation9 + $0x2e]]
        %v1893 = vstv %s1892
        %v1894 = vmul.f32 %v1893, %v853
        %v1895 = vmul.f32 %v1893, %v861
        %v1896 = vmul.f32 %v1893, %v867
        %v1900 = vrot.slane %v1894, 6
        %v1901 = vrot.slane %v1895, 6
        %v1902 = vsel %vm466, %v1900, %v1901
        %v1903 = vrot.slane %v1896, 6
        %v1904 = vsel %vm466, %v1901, %v1903
        %1905 = vrot.lane.b32.xlu0 %v1902, 124
        %v1906 = vpop.permute.xlu0 %1905
        %1907 = vrot.lane.b32.xlu0 %v1904, 124
        %v1908 = vpop.permute.xlu0 %1907
        %v1911 = vadd.f32 %v1890, %v1906
        %v1912 = vadd.f32 %v1891, %v1908
        %s1913 = sld [smem:[#allocation9 + $0x2f]]
        %v1914 = vstv %s1913
        %v1915 = vmul.f32 %v1914, %v853
        %v1916 = vmul.f32 %v1914, %v861
        %v1917 = vmul.f32 %v1914, %v867
        %v1921 = vrot.slane %v1915, 6
        %v1922 = vrot.slane %v1916, 6
        %v1923 = vsel %vm466, %v1921, %v1922
        %v1924 = vrot.slane %v1917, 6
        %v1925 = vsel %vm466, %v1922, %v1924
        %1926 = vrot.lane.b32.xlu0 %v1923, 123
        %v1927 = vpop.permute.xlu0 %1926
        %1928 = vrot.lane.b32.xlu0 %v1925, 123
        %v1929 = vpop.permute.xlu0 %1928
        %v1932 = vadd.f32 %v1911, %v1927
        %v1933 = vadd.f32 %v1912, %v1929
        %s1934 = sld [smem:[#allocation9 + $0x30]]
        %v1935 = vstv %s1934
        %v1936 = vmul.f32 %v1935, %v853
        %v1937 = vmul.f32 %v1935, %v861
        %v1938 = vmul.f32 %v1935, %v867
        %v1942 = vrot.slane %v1936, 6
        %v1943 = vrot.slane %v1937, 6
        %v1944 = vsel %vm466, %v1942, %v1943
        %v1945 = vrot.slane %v1938, 6
        %v1946 = vsel %vm466, %v1943, %v1945
        %1947 = vrot.lane.b32.xlu0 %v1944, 122
        %v1948 = vpop.permute.xlu0 %1947
        %1949 = vrot.lane.b32.xlu0 %v1946, 122
        %v1950 = vpop.permute.xlu0 %1949
        %v1953 = vadd.f32 %v1932, %v1948
        %v1954 = vadd.f32 %v1933, %v1950
        %s1955 = sld [smem:[#allocation9 + $0x31]]
        %v1956 = vstv %s1955
        %v1957 = vmul.f32 %v1956, %v993
        %v1958 = vmul.f32 %v1956, %v1000
        %v1959 = vadd.f32 %v1953, %v1957
        %v1960 = vadd.f32 %v1954, %v1958
        %s1961 = sld [smem:[#allocation9 + $0x32]]
        %v1962 = vstv %s1961
        %v1963 = vmul.f32 %v1962, %v993
        %v1964 = vmul.f32 %v1962, %v1000
        %1967 = vrot.lane.b32.xlu0 %v1963, 127
        %v1968 = vpop.permute.xlu0 %1967
        %1969 = vrot.lane.b32.xlu0 %v1964, 127
        %v1970 = vpop.permute.xlu0 %1969
        %v1973 = vadd.f32 %v1959, %v1968
        %v1974 = vadd.f32 %v1960, %v1970
        %s1975 = sld [smem:[#allocation9 + $0x33]]
        %v1976 = vstv %s1975
        %v1977 = vmul.f32 %v1976, %v993
        %v1978 = vmul.f32 %v1976, %v1000
        %1981 = vrot.lane.b32.xlu0 %v1977, 126
        %v1982 = vpop.permute.xlu0 %1981
        %1983 = vrot.lane.b32.xlu0 %v1978, 126
        %v1984 = vpop.permute.xlu0 %1983
        %v1987 = vadd.f32 %v1973, %v1982
        %v1988 = vadd.f32 %v1974, %v1984
        %s1989 = sld [smem:[#allocation9 + $0x34]]
        %v1990 = vstv %s1989
        %v1991 = vmul.f32 %v1990, %v993
        %v1992 = vmul.f32 %v1990, %v1000
        %1995 = vrot.lane.b32.xlu0 %v1991, 125
        %v1996 = vpop.permute.xlu0 %1995
        %1997 = vrot.lane.b32.xlu0 %v1992, 125
        %v1998 = vpop.permute.xlu0 %1997
        %v2001 = vadd.f32 %v1987, %v1996
        %v2002 = vadd.f32 %v1988, %v1998
        %s2003 = sld [smem:[#allocation9 + $0x35]]
        %v2004 = vstv %s2003
        %v2005 = vmul.f32 %v2004, %v993
        %v2006 = vmul.f32 %v2004, %v1000
        %2009 = vrot.lane.b32.xlu0 %v2005, 124
        %v2010 = vpop.permute.xlu0 %2009
        %2011 = vrot.lane.b32.xlu0 %v2006, 124
        %v2012 = vpop.permute.xlu0 %2011
        %v2015 = vadd.f32 %v2001, %v2010
        %v2016 = vadd.f32 %v2002, %v2012
        %s2017 = sld [smem:[#allocation9 + $0x36]]
        %v2018 = vstv %s2017
        %v2019 = vmul.f32 %v2018, %v993
        %v2020 = vmul.f32 %v2018, %v1000
        %2023 = vrot.lane.b32.xlu0 %v2019, 123
        %v2024 = vpop.permute.xlu0 %2023
        %2025 = vrot.lane.b32.xlu0 %v2020, 123
        %v2026 = vpop.permute.xlu0 %2025
        %v2029 = vadd.f32 %v2015, %v2024
        %v2030 = vadd.f32 %v2016, %v2026
        %s2031 = sld [smem:[#allocation9 + $0x37]]
        %v2032 = vstv %s2031
        %v2033 = vmul.f32 %v2032, %v993
        %v2034 = vmul.f32 %v2032, %v1000
        %2037 = vrot.lane.b32.xlu0 %v2033, 122
        %v2038 = vpop.permute.xlu0 %2037
        %2039 = vrot.lane.b32.xlu0 %v2034, 122
        %v2040 = vpop.permute.xlu0 %2039
        %v2043 = vadd.f32 %v2029, %v2038
        %v2044 = vadd.f32 %v2030, %v2040
        %s2045 = sld [smem:[#allocation9 + $0x38]]
        %v2046 = vstv %s2045
        %v2047 = vmul.f32 %v2046, %v993
        %v2048 = vmul.f32 %v2046, %v1000
        %v2049 = vmul.f32 %v2046, %v1006
        %v2053 = vrot.slane %v2047, 1
        %v2054 = vrot.slane %v2048, 1
        %v2055 = vsel %vm852, %v2053, %v2054
        %v2056 = vrot.slane %v2049, 1
        %v2057 = vsel %vm852, %v2054, %v2056
        %v2060 = vadd.f32 %v2043, %v2055
        %v2061 = vadd.f32 %v2044, %v2057
        %s2062 = sld [smem:[#allocation9 + $0x39]]
        %v2063 = vstv %s2062
        %v2064 = vmul.f32 %v2063, %v993
        %v2065 = vmul.f32 %v2063, %v1000
        %v2066 = vmul.f32 %v2063, %v1006
        %v2070 = vrot.slane %v2064, 1
        %v2071 = vrot.slane %v2065, 1
        %v2072 = vsel %vm852, %v2070, %v2071
        %v2073 = vrot.slane %v2066, 1
        %v2074 = vsel %vm852, %v2071, %v2073
        %2075 = vrot.lane.b32.xlu0 %v2072, 127
        %v2076 = vpop.permute.xlu0 %2075
        %2077 = vrot.lane.b32.xlu0 %v2074, 127
        %v2078 = vpop.permute.xlu0 %2077
        %v2081 = vadd.f32 %v2060, %v2076
        %v2082 = vadd.f32 %v2061, %v2078
        %s2083 = sld [smem:[#allocation9 + $0x3a]]
        %v2084 = vstv %s2083
        %v2085 = vmul.f32 %v2084, %v993
        %v2086 = vmul.f32 %v2084, %v1000
        %v2087 = vmul.f32 %v2084, %v1006
        %v2091 = vrot.slane %v2085, 1
        %v2092 = vrot.slane %v2086, 1
        %v2093 = vsel %vm852, %v2091, %v2092
        %v2094 = vrot.slane %v2087, 1
        %v2095 = vsel %vm852, %v2092, %v2094
        %2096 = vrot.lane.b32.xlu0 %v2093, 126
        %v2097 = vpop.permute.xlu0 %2096
        %2098 = vrot.lane.b32.xlu0 %v2095, 126
        %v2099 = vpop.permute.xlu0 %2098
        %v2102 = vadd.f32 %v2081, %v2097
        %v2103 = vadd.f32 %v2082, %v2099
        %s2104 = sld [smem:[#allocation9 + $0x3b]]
        %v2105 = vstv %s2104
        %v2106 = vmul.f32 %v2105, %v993
        %v2107 = vmul.f32 %v2105, %v1000
        %v2108 = vmul.f32 %v2105, %v1006
        %v2112 = vrot.slane %v2106, 1
        %v2113 = vrot.slane %v2107, 1
        %v2114 = vsel %vm852, %v2112, %v2113
        %v2115 = vrot.slane %v2108, 1
        %v2116 = vsel %vm852, %v2113, %v2115
        %2117 = vrot.lane.b32.xlu0 %v2114, 125
        %v2118 = vpop.permute.xlu0 %2117
        %2119 = vrot.lane.b32.xlu0 %v2116, 125
        %v2120 = vpop.permute.xlu0 %2119
        %v2123 = vadd.f32 %v2102, %v2118
        %v2124 = vadd.f32 %v2103, %v2120
        %s2125 = sld [smem:[#allocation9 + $0x3c]]
        %v2126 = vstv %s2125
        %v2127 = vmul.f32 %v2126, %v993
        %v2128 = vmul.f32 %v2126, %v1000
        %v2129 = vmul.f32 %v2126, %v1006
        %v2133 = vrot.slane %v2127, 1
        %v2134 = vrot.slane %v2128, 1
        %v2135 = vsel %vm852, %v2133, %v2134
        %v2136 = vrot.slane %v2129, 1
        %v2137 = vsel %vm852, %v2134, %v2136
        %2138 = vrot.lane.b32.xlu0 %v2135, 124
        %v2139 = vpop.permute.xlu0 %2138
        %2140 = vrot.lane.b32.xlu0 %v2137, 124
        %v2141 = vpop.permute.xlu0 %2140
        %v2144 = vadd.f32 %v2123, %v2139
        %v2145 = vadd.f32 %v2124, %v2141
        %s2146 = sld [smem:[#allocation9 + $0x3d]]
        %v2147 = vstv %s2146
        %v2148 = vmul.f32 %v2147, %v993
        %v2149 = vmul.f32 %v2147, %v1000
        %v2150 = vmul.f32 %v2147, %v1006
        %v2154 = vrot.slane %v2148, 1
        %v2155 = vrot.slane %v2149, 1
        %v2156 = vsel %vm852, %v2154, %v2155
        %v2157 = vrot.slane %v2150, 1
        %v2158 = vsel %vm852, %v2155, %v2157
        %2159 = vrot.lane.b32.xlu0 %v2156, 123
        %v2160 = vpop.permute.xlu0 %2159
        %2161 = vrot.lane.b32.xlu0 %v2158, 123
        %v2162 = vpop.permute.xlu0 %2161
        %v2165 = vadd.f32 %v2144, %v2160
        %v2166 = vadd.f32 %v2145, %v2162
        %s2167 = sld [smem:[#allocation9 + $0x3e]]
        %v2168 = vstv %s2167
        %v2169 = vmul.f32 %v2168, %v993
        %v2170 = vmul.f32 %v2168, %v1000
        %v2171 = vmul.f32 %v2168, %v1006
        %v2175 = vrot.slane %v2169, 1
        %v2176 = vrot.slane %v2170, 1
        %v2177 = vsel %vm852, %v2175, %v2176
        %v2178 = vrot.slane %v2171, 1
        %v2179 = vsel %vm852, %v2176, %v2178
        %2180 = vrot.lane.b32.xlu0 %v2177, 122
        %v2181 = vpop.permute.xlu0 %2180
        %2182 = vrot.lane.b32.xlu0 %v2179, 122
        %v2183 = vpop.permute.xlu0 %2182
        %v2186 = vadd.f32 %v2165, %v2181
        %v2187 = vadd.f32 %v2166, %v2183
        %s2188 = sld [smem:[#allocation9 + $0x3f]]
        %v2189 = vstv %s2188
        %v2190 = vmul.f32 %v2189, %v993
        %v2191 = vmul.f32 %v2189, %v1000
        %v2192 = vmul.f32 %v2189, %v1006
        %v2196 = vrot.slane %v2190, 2
        %v2197 = vrot.slane %v2191, 2
        %v2198 = vsel %vm850, %v2196, %v2197
        %v2199 = vrot.slane %v2192, 2
        %v2200 = vsel %vm850, %v2197, %v2199
        %v2203 = vadd.f32 %v2186, %v2198
        %v2204 = vadd.f32 %v2187, %v2200
        %s2205 = sld [smem:[#allocation9 + $0x40]]
        %v2206 = vstv %s2205
        %v2207 = vmul.f32 %v2206, %v993
        %v2208 = vmul.f32 %v2206, %v1000
        %v2209 = vmul.f32 %v2206, %v1006
        %v2213 = vrot.slane %v2207, 2
        %v2214 = vrot.slane %v2208, 2
        %v2215 = vsel %vm850, %v2213, %v2214
        %v2216 = vrot.slane %v2209, 2
        %v2217 = vsel %vm850, %v2214, %v2216
        %2218 = vrot.lane.b32.xlu0 %v2215, 127
        %v2219 = vpop.permute.xlu0 %2218
        %2220 = vrot.lane.b32.xlu0 %v2217, 127
        %v2221 = vpop.permute.xlu0 %2220
        %v2224 = vadd.f32 %v2203, %v2219
        %v2225 = vadd.f32 %v2204, %v2221
        %s2226 = sld [smem:[#allocation9 + $0x41]]
        %v2227 = vstv %s2226
        %v2228 = vmul.f32 %v2227, %v993
        %v2229 = vmul.f32 %v2227, %v1000
        %v2230 = vmul.f32 %v2227, %v1006
        %v2234 = vrot.slane %v2228, 2
        %v2235 = vrot.slane %v2229, 2
        %v2236 = vsel %vm850, %v2234, %v2235
        %v2237 = vrot.slane %v2230, 2
        %v2238 = vsel %vm850, %v2235, %v2237
        %2239 = vrot.lane.b32.xlu0 %v2236, 126
        %v2240 = vpop.permute.xlu0 %2239
        %2241 = vrot.lane.b32.xlu0 %v2238, 126
        %v2242 = vpop.permute.xlu0 %2241
        %v2245 = vadd.f32 %v2224, %v2240
        %v2246 = vadd.f32 %v2225, %v2242
        %s2247 = sld [smem:[#allocation9 + $0x42]]
        %v2248 = vstv %s2247
        %v2249 = vmul.f32 %v2248, %v993
        %v2250 = vmul.f32 %v2248, %v1000
        %v2251 = vmul.f32 %v2248, %v1006
        %v2255 = vrot.slane %v2249, 2
        %v2256 = vrot.slane %v2250, 2
        %v2257 = vsel %vm850, %v2255, %v2256
        %v2258 = vrot.slane %v2251, 2
        %v2259 = vsel %vm850, %v2256, %v2258
        %2260 = vrot.lane.b32.xlu0 %v2257, 125
        %v2261 = vpop.permute.xlu0 %2260
        %2262 = vrot.lane.b32.xlu0 %v2259, 125
        %v2263 = vpop.permute.xlu0 %2262
        %v2266 = vadd.f32 %v2245, %v2261
        %v2267 = vadd.f32 %v2246, %v2263
        %s2268 = sld [smem:[#allocation9 + $0x43]]
        %v2269 = vstv %s2268
        %v2270 = vmul.f32 %v2269, %v993
        %v2271 = vmul.f32 %v2269, %v1000
        %v2272 = vmul.f32 %v2269, %v1006
        %v2276 = vrot.slane %v2270, 2
        %v2277 = vrot.slane %v2271, 2
        %v2278 = vsel %vm850, %v2276, %v2277
        %v2279 = vrot.slane %v2272, 2
        %v2280 = vsel %vm850, %v2277, %v2279
        %2281 = vrot.lane.b32.xlu0 %v2278, 124
        %v2282 = vpop.permute.xlu0 %2281
        %2283 = vrot.lane.b32.xlu0 %v2280, 124
        %v2284 = vpop.permute.xlu0 %2283
        %v2287 = vadd.f32 %v2266, %v2282
        %v2288 = vadd.f32 %v2267, %v2284
        %s2289 = sld [smem:[#allocation9 + $0x44]]
        %v2290 = vstv %s2289
        %v2291 = vmul.f32 %v2290, %v993
        %v2292 = vmul.f32 %v2290, %v1000
        %v2293 = vmul.f32 %v2290, %v1006
        %v2297 = vrot.slane %v2291, 2
        %v2298 = vrot.slane %v2292, 2
        %v2299 = vsel %vm850, %v2297, %v2298
        %v2300 = vrot.slane %v2293, 2
        %v2301 = vsel %vm850, %v2298, %v2300
        %2302 = vrot.lane.b32.xlu0 %v2299, 123
        %v2303 = vpop.permute.xlu0 %2302
        %2304 = vrot.lane.b32.xlu0 %v2301, 123
        %v2305 = vpop.permute.xlu0 %2304
        %v2308 = vadd.f32 %v2287, %v2303
        %v2309 = vadd.f32 %v2288, %v2305
        %s2310 = sld [smem:[#allocation9 + $0x45]]
        %v2311 = vstv %s2310
        %v2312 = vmul.f32 %v2311, %v993
        %v2313 = vmul.f32 %v2311, %v1000
        %v2314 = vmul.f32 %v2311, %v1006
        %v2318 = vrot.slane %v2312, 2
        %v2319 = vrot.slane %v2313, 2
        %v2320 = vsel %vm850, %v2318, %v2319
        %v2321 = vrot.slane %v2314, 2
        %v2322 = vsel %vm850, %v2319, %v2321
        %2323 = vrot.lane.b32.xlu0 %v2320, 122
        %v2324 = vpop.permute.xlu0 %2323
        %2325 = vrot.lane.b32.xlu0 %v2322, 122
        %v2326 = vpop.permute.xlu0 %2325
        %v2329 = vadd.f32 %v2308, %v2324
        %v2330 = vadd.f32 %v2309, %v2326
        %s2331 = sld [smem:[#allocation9 + $0x46]]
        %v2332 = vstv %s2331
        %v2333 = vmul.f32 %v2332, %v993
        %v2334 = vmul.f32 %v2332, %v1000
        %v2335 = vmul.f32 %v2332, %v1006
        %v2339 = vrot.slane %v2333, 3
        %v2340 = vrot.slane %v2334, 3
        %v2341 = vsel %vm848, %v2339, %v2340
        %v2342 = vrot.slane %v2335, 3
        %v2343 = vsel %vm848, %v2340, %v2342
        %v2346 = vadd.f32 %v2329, %v2341
        %v2347 = vadd.f32 %v2330, %v2343
        %s2348 = sld [smem:[#allocation9 + $0x47]]
        %v2349 = vstv %s2348
        %v2350 = vmul.f32 %v2349, %v993
        %v2351 = vmul.f32 %v2349, %v1000
        %v2352 = vmul.f32 %v2349, %v1006
        %v2356 = vrot.slane %v2350, 3
        %v2357 = vrot.slane %v2351, 3
        %v2358 = vsel %vm848, %v2356, %v2357
        %v2359 = vrot.slane %v2352, 3
        %v2360 = vsel %vm848, %v2357, %v2359
        %2361 = vrot.lane.b32.xlu0 %v2358, 127
        %v2362 = vpop.permute.xlu0 %2361
        %2363 = vrot.lane.b32.xlu0 %v2360, 127
        %v2364 = vpop.permute.xlu0 %2363
        %v2367 = vadd.f32 %v2346, %v2362
        %v2368 = vadd.f32 %v2347, %v2364
        %s2369 = sld [smem:[#allocation9 + $0x48]]
        %v2370 = vstv %s2369
        %v2371 = vmul.f32 %v2370, %v993
        %v2372 = vmul.f32 %v2370, %v1000
        %v2373 = vmul.f32 %v2370, %v1006
        %v2377 = vrot.slane %v2371, 3
        %v2378 = vrot.slane %v2372, 3
        %v2379 = vsel %vm848, %v2377, %v2378
        %v2380 = vrot.slane %v2373, 3
        %v2381 = vsel %vm848, %v2378, %v2380
        %2382 = vrot.lane.b32.xlu0 %v2379, 126
        %v2383 = vpop.permute.xlu0 %2382
        %2384 = vrot.lane.b32.xlu0 %v2381, 126
        %v2385 = vpop.permute.xlu0 %2384
        %v2388 = vadd.f32 %v2367, %v2383
        %v2389 = vadd.f32 %v2368, %v2385
        %s2390 = sld [smem:[#allocation9 + $0x49]]
        %v2391 = vstv %s2390
        %v2392 = vmul.f32 %v2391, %v993
        %v2393 = vmul.f32 %v2391, %v1000
        %v2394 = vmul.f32 %v2391, %v1006
        %v2398 = vrot.slane %v2392, 3
        %v2399 = vrot.slane %v2393, 3
        %v2400 = vsel %vm848, %v2398, %v2399
        %v2401 = vrot.slane %v2394, 3
        %v2402 = vsel %vm848, %v2399, %v2401
        %2403 = vrot.lane.b32.xlu0 %v2400, 125
        %v2404 = vpop.permute.xlu0 %2403
        %2405 = vrot.lane.b32.xlu0 %v2402, 125
        %v2406 = vpop.permute.xlu0 %2405
        %v2409 = vadd.f32 %v2388, %v2404
        %v2410 = vadd.f32 %v2389, %v2406
        %s2411 = sld [smem:[#allocation9 + $0x4a]]
        %v2412 = vstv %s2411
        %v2413 = vmul.f32 %v2412, %v993
        %v2414 = vmul.f32 %v2412, %v1000
        %v2415 = vmul.f32 %v2412, %v1006
        %v2419 = vrot.slane %v2413, 3
        %v2420 = vrot.slane %v2414, 3
        %v2421 = vsel %vm848, %v2419, %v2420
        %v2422 = vrot.slane %v2415, 3
        %v2423 = vsel %vm848, %v2420, %v2422
        %2424 = vrot.lane.b32.xlu0 %v2421, 124
        %v2425 = vpop.permute.xlu0 %2424
        %2426 = vrot.lane.b32.xlu0 %v2423, 124
        %v2427 = vpop.permute.xlu0 %2426
        %v2430 = vadd.f32 %v2409, %v2425
        %v2431 = vadd.f32 %v2410, %v2427
        %s2432 = sld [smem:[#allocation9 + $0x4b]]
        %v2433 = vstv %s2432
        %v2434 = vmul.f32 %v2433, %v993
        %v2435 = vmul.f32 %v2433, %v1000
        %v2436 = vmul.f32 %v2433, %v1006
        %v2440 = vrot.slane %v2434, 3
        %v2441 = vrot.slane %v2435, 3
        %v2442 = vsel %vm848, %v2440, %v2441
        %v2443 = vrot.slane %v2436, 3
        %v2444 = vsel %vm848, %v2441, %v2443
        %2445 = vrot.lane.b32.xlu0 %v2442, 123
        %v2446 = vpop.permute.xlu0 %2445
        %2447 = vrot.lane.b32.xlu0 %v2444, 123
        %v2448 = vpop.permute.xlu0 %2447
        %v2451 = vadd.f32 %v2430, %v2446
        %v2452 = vadd.f32 %v2431, %v2448
        %s2453 = sld [smem:[#allocation9 + $0x4c]]
        %v2454 = vstv %s2453
        %v2455 = vmul.f32 %v2454, %v993
        %v2456 = vmul.f32 %v2454, %v1000
        %v2457 = vmul.f32 %v2454, %v1006
        %v2461 = vrot.slane %v2455, 3
        %v2462 = vrot.slane %v2456, 3
        %v2463 = vsel %vm848, %v2461, %v2462
        %v2464 = vrot.slane %v2457, 3
        %v2465 = vsel %vm848, %v2462, %v2464
        %2466 = vrot.lane.b32.xlu0 %v2463, 122
        %v2467 = vpop.permute.xlu0 %2466
        %2468 = vrot.lane.b32.xlu0 %v2465, 122
        %v2469 = vpop.permute.xlu0 %2468
        %v2472 = vadd.f32 %v2451, %v2467
        %v2473 = vadd.f32 %v2452, %v2469
        %s2474 = sld [smem:[#allocation9 + $0x4d]]
        %v2475 = vstv %s2474
        %v2476 = vmul.f32 %v2475, %v993
        %v2477 = vmul.f32 %v2475, %v1000
        %v2478 = vmul.f32 %v2475, %v1006
        %v2482 = vrot.slane %v2476, 4
        %v2483 = vrot.slane %v2477, 4
        %v2484 = vsel %vm846, %v2482, %v2483
        %v2485 = vrot.slane %v2478, 4
        %v2486 = vsel %vm846, %v2483, %v2485
        %v2489 = vadd.f32 %v2472, %v2484
        %v2490 = vadd.f32 %v2473, %v2486
        %s2491 = sld [smem:[#allocation9 + $0x4e]]
        %v2492 = vstv %s2491
        %v2493 = vmul.f32 %v2492, %v993
        %v2494 = vmul.f32 %v2492, %v1000
        %v2495 = vmul.f32 %v2492, %v1006
        %v2499 = vrot.slane %v2493, 4
        %v2500 = vrot.slane %v2494, 4
        %v2501 = vsel %vm846, %v2499, %v2500
        %v2502 = vrot.slane %v2495, 4
        %v2503 = vsel %vm846, %v2500, %v2502
        %2504 = vrot.lane.b32.xlu0 %v2501, 127
        %v2505 = vpop.permute.xlu0 %2504
        %2506 = vrot.lane.b32.xlu0 %v2503, 127
        %v2507 = vpop.permute.xlu0 %2506
        %v2510 = vadd.f32 %v2489, %v2505
        %v2511 = vadd.f32 %v2490, %v2507
        %s2512 = sld [smem:[#allocation9 + $0x4f]]
        %v2513 = vstv %s2512
        %v2514 = vmul.f32 %v2513, %v993
        %v2515 = vmul.f32 %v2513, %v1000
        %v2516 = vmul.f32 %v2513, %v1006
        %v2520 = vrot.slane %v2514, 4
        %v2521 = vrot.slane %v2515, 4
        %v2522 = vsel %vm846, %v2520, %v2521
        %v2523 = vrot.slane %v2516, 4
        %v2524 = vsel %vm846, %v2521, %v2523
        %2525 = vrot.lane.b32.xlu0 %v2522, 126
        %v2526 = vpop.permute.xlu0 %2525
        %2527 = vrot.lane.b32.xlu0 %v2524, 126
        %v2528 = vpop.permute.xlu0 %2527
        %v2531 = vadd.f32 %v2510, %v2526
        %v2532 = vadd.f32 %v2511, %v2528
        %s2533 = sld [smem:[#allocation9 + $0x50]]
        %v2534 = vstv %s2533
        %v2535 = vmul.f32 %v2534, %v993
        %v2536 = vmul.f32 %v2534, %v1000
        %v2537 = vmul.f32 %v2534, %v1006
        %v2541 = vrot.slane %v2535, 4
        %v2542 = vrot.slane %v2536, 4
        %v2543 = vsel %vm846, %v2541, %v2542
        %v2544 = vrot.slane %v2537, 4
        %v2545 = vsel %vm846, %v2542, %v2544
        %2546 = vrot.lane.b32.xlu0 %v2543, 125
        %v2547 = vpop.permute.xlu0 %2546
        %2548 = vrot.lane.b32.xlu0 %v2545, 125
        %v2549 = vpop.permute.xlu0 %2548
        %v2552 = vadd.f32 %v2531, %v2547
        %v2553 = vadd.f32 %v2532, %v2549
        %s2554 = sld [smem:[#allocation9 + $0x51]]
        %v2555 = vstv %s2554
        %v2556 = vmul.f32 %v2555, %v993
        %v2557 = vmul.f32 %v2555, %v1000
        %v2558 = vmul.f32 %v2555, %v1006
        %v2562 = vrot.slane %v2556, 4
        %v2563 = vrot.slane %v2557, 4
        %v2564 = vsel %vm846, %v2562, %v2563
        %v2565 = vrot.slane %v2558, 4
        %v2566 = vsel %vm846, %v2563, %v2565
        %2567 = vrot.lane.b32.xlu0 %v2564, 124
        %v2568 = vpop.permute.xlu0 %2567
        %2569 = vrot.lane.b32.xlu0 %v2566, 124
        %v2570 = vpop.permute.xlu0 %2569
        %v2573 = vadd.f32 %v2552, %v2568
        %v2574 = vadd.f32 %v2553, %v2570
        %s2575 = sld [smem:[#allocation9 + $0x52]]
        %v2576 = vstv %s2575
        %v2577 = vmul.f32 %v2576, %v993
        %v2578 = vmul.f32 %v2576, %v1000
        %v2579 = vmul.f32 %v2576, %v1006
        %v2583 = vrot.slane %v2577, 4
        %v2584 = vrot.slane %v2578, 4
        %v2585 = vsel %vm846, %v2583, %v2584
        %v2586 = vrot.slane %v2579, 4
        %v2587 = vsel %vm846, %v2584, %v2586
        %2588 = vrot.lane.b32.xlu0 %v2585, 123
        %v2589 = vpop.permute.xlu0 %2588
        %2590 = vrot.lane.b32.xlu0 %v2587, 123
        %v2591 = vpop.permute.xlu0 %2590
        %v2594 = vadd.f32 %v2573, %v2589
        %v2595 = vadd.f32 %v2574, %v2591
        %s2596 = sld [smem:[#allocation9 + $0x53]]
        %v2597 = vstv %s2596
        %v2598 = vmul.f32 %v2597, %v993
        %v2599 = vmul.f32 %v2597, %v1000
        %v2600 = vmul.f32 %v2597, %v1006
        %v2604 = vrot.slane %v2598, 4
        %v2605 = vrot.slane %v2599, 4
        %v2606 = vsel %vm846, %v2604, %v2605
        %v2607 = vrot.slane %v2600, 4
        %v2608 = vsel %vm846, %v2605, %v2607
        %2609 = vrot.lane.b32.xlu0 %v2606, 122
        %v2610 = vpop.permute.xlu0 %2609
        %2611 = vrot.lane.b32.xlu0 %v2608, 122
        %v2612 = vpop.permute.xlu0 %2611
        %v2615 = vadd.f32 %v2594, %v2610
        %v2616 = vadd.f32 %v2595, %v2612
        %s2617 = sld [smem:[#allocation9 + $0x54]]
        %v2618 = vstv %s2617
        %v2619 = vmul.f32 %v2618, %v993
        %v2620 = vmul.f32 %v2618, %v1000
        %v2621 = vmul.f32 %v2618, %v1006
        %v2625 = vrot.slane %v2619, 5
        %v2626 = vrot.slane %v2620, 5
        %v2627 = vsel %vm844, %v2625, %v2626
        %v2628 = vrot.slane %v2621, 5
        %v2629 = vsel %vm844, %v2626, %v2628
        %v2632 = vadd.f32 %v2615, %v2627
        %v2633 = vadd.f32 %v2616, %v2629
        %s2634 = sld [smem:[#allocation9 + $0x55]]
        %v2635 = vstv %s2634
        %v2636 = vmul.f32 %v2635, %v993
        %v2637 = vmul.f32 %v2635, %v1000
        %v2638 = vmul.f32 %v2635, %v1006
        %v2642 = vrot.slane %v2636, 5
        %v2643 = vrot.slane %v2637, 5
        %v2644 = vsel %vm844, %v2642, %v2643
        %v2645 = vrot.slane %v2638, 5
        %v2646 = vsel %vm844, %v2643, %v2645
        %2647 = vrot.lane.b32.xlu0 %v2644, 127
        %v2648 = vpop.permute.xlu0 %2647
        %2649 = vrot.lane.b32.xlu0 %v2646, 127
        %v2650 = vpop.permute.xlu0 %2649
        %v2653 = vadd.f32 %v2632, %v2648
        %v2654 = vadd.f32 %v2633, %v2650
        %s2655 = sld [smem:[#allocation9 + $0x56]]
        %v2656 = vstv %s2655
        %v2657 = vmul.f32 %v2656, %v993
        %v2658 = vmul.f32 %v2656, %v1000
        %v2659 = vmul.f32 %v2656, %v1006
        %v2663 = vrot.slane %v2657, 5
        %v2664 = vrot.slane %v2658, 5
        %v2665 = vsel %vm844, %v2663, %v2664
        %v2666 = vrot.slane %v2659, 5
        %v2667 = vsel %vm844, %v2664, %v2666
        %2668 = vrot.lane.b32.xlu0 %v2665, 126
        %v2669 = vpop.permute.xlu0 %2668
        %2670 = vrot.lane.b32.xlu0 %v2667, 126
        %v2671 = vpop.permute.xlu0 %2670
        %v2674 = vadd.f32 %v2653, %v2669
        %v2675 = vadd.f32 %v2654, %v2671
        %s2676 = sld [smem:[#allocation9 + $0x57]]
        %v2677 = vstv %s2676
        %v2678 = vmul.f32 %v2677, %v993
        %v2679 = vmul.f32 %v2677, %v1000
        %v2680 = vmul.f32 %v2677, %v1006
        %v2684 = vrot.slane %v2678, 5
        %v2685 = vrot.slane %v2679, 5
        %v2686 = vsel %vm844, %v2684, %v2685
        %v2687 = vrot.slane %v2680, 5
        %v2688 = vsel %vm844, %v2685, %v2687
        %2689 = vrot.lane.b32.xlu0 %v2686, 125
        %v2690 = vpop.permute.xlu0 %2689
        %2691 = vrot.lane.b32.xlu0 %v2688, 125
        %v2692 = vpop.permute.xlu0 %2691
        %v2695 = vadd.f32 %v2674, %v2690
        %v2696 = vadd.f32 %v2675, %v2692
        %s2697 = sld [smem:[#allocation9 + $0x58]]
        %v2698 = vstv %s2697
        %v2699 = vmul.f32 %v2698, %v993
        %v2700 = vmul.f32 %v2698, %v1000
        %v2701 = vmul.f32 %v2698, %v1006
        %v2705 = vrot.slane %v2699, 5
        %v2706 = vrot.slane %v2700, 5
        %v2707 = vsel %vm844, %v2705, %v2706
        %v2708 = vrot.slane %v2701, 5
        %v2709 = vsel %vm844, %v2706, %v2708
        %2710 = vrot.lane.b32.xlu0 %v2707, 124
        %v2711 = vpop.permute.xlu0 %2710
        %2712 = vrot.lane.b32.xlu0 %v2709, 124
        %v2713 = vpop.permute.xlu0 %2712
        %v2716 = vadd.f32 %v2695, %v2711
        %v2717 = vadd.f32 %v2696, %v2713
        %s2718 = sld [smem:[#allocation9 + $0x59]]
        %v2719 = vstv %s2718
        %v2720 = vmul.f32 %v2719, %v993
        %v2721 = vmul.f32 %v2719, %v1000
        %v2722 = vmul.f32 %v2719, %v1006
        %v2726 = vrot.slane %v2720, 5
        %v2727 = vrot.slane %v2721, 5
        %v2728 = vsel %vm844, %v2726, %v2727
        %v2729 = vrot.slane %v2722, 5
        %v2730 = vsel %vm844, %v2727, %v2729
        %2731 = vrot.lane.b32.xlu0 %v2728, 123
        %v2732 = vpop.permute.xlu0 %2731
        %2733 = vrot.lane.b32.xlu0 %v2730, 123
        %v2734 = vpop.permute.xlu0 %2733
        %v2737 = vadd.f32 %v2716, %v2732
        %v2738 = vadd.f32 %v2717, %v2734
        %s2739 = sld [smem:[#allocation9 + $0x5a]]
        %v2740 = vstv %s2739
        %v2741 = vmul.f32 %v2740, %v993
        %v2742 = vmul.f32 %v2740, %v1000
        %v2743 = vmul.f32 %v2740, %v1006
        %v2747 = vrot.slane %v2741, 5
        %v2748 = vrot.slane %v2742, 5
        %v2749 = vsel %vm844, %v2747, %v2748
        %v2750 = vrot.slane %v2743, 5
        %v2751 = vsel %vm844, %v2748, %v2750
        %2752 = vrot.lane.b32.xlu0 %v2749, 122
        %v2753 = vpop.permute.xlu0 %2752
        %2754 = vrot.lane.b32.xlu0 %v2751, 122
        %v2755 = vpop.permute.xlu0 %2754
        %v2758 = vadd.f32 %v2737, %v2753
        %v2759 = vadd.f32 %v2738, %v2755
        %s2760 = sld [smem:[#allocation9 + $0x5b]]
        %v2761 = vstv %s2760
        %v2762 = vmul.f32 %v2761, %v993
        %v2763 = vmul.f32 %v2761, %v1000
        %v2764 = vmul.f32 %v2761, %v1006
        %v2768 = vrot.slane %v2762, 6
        %v2769 = vrot.slane %v2763, 6
        %v2770 = vsel %vm466, %v2768, %v2769
        %v2771 = vrot.slane %v2764, 6
        %v2772 = vsel %vm466, %v2769, %v2771
        %v2775 = vadd.f32 %v2758, %v2770
        %v2776 = vadd.f32 %v2759, %v2772
        %s2777 = sld [smem:[#allocation9 + $0x5c]]
        %v2778 = vstv %s2777
        %v2779 = vmul.f32 %v2778, %v993
        %v2780 = vmul.f32 %v2778, %v1000
        %v2781 = vmul.f32 %v2778, %v1006
        %v2785 = vrot.slane %v2779, 6
        %v2786 = vrot.slane %v2780, 6
        %v2787 = vsel %vm466, %v2785, %v2786
        %v2788 = vrot.slane %v2781, 6
        %v2789 = vsel %vm466, %v2786, %v2788
        %2790 = vrot.lane.b32.xlu0 %v2787, 127
        %v2791 = vpop.permute.xlu0 %2790
        %2792 = vrot.lane.b32.xlu0 %v2789, 127
        %v2793 = vpop.permute.xlu0 %2792
        %v2796 = vadd.f32 %v2775, %v2791
        %v2797 = vadd.f32 %v2776, %v2793
        %s2798 = sld [smem:[#allocation9 + $0x5d]]
        %v2799 = vstv %s2798
        %v2800 = vmul.f32 %v2799, %v993
        %v2801 = vmul.f32 %v2799, %v1000
        %v2802 = vmul.f32 %v2799, %v1006
        %v2806 = vrot.slane %v2800, 6
        %v2807 = vrot.slane %v2801, 6
        %v2808 = vsel %vm466, %v2806, %v2807
        %v2809 = vrot.slane %v2802, 6
        %v2810 = vsel %vm466, %v2807, %v2809
        %2811 = vrot.lane.b32.xlu0 %v2808, 126
        %v2812 = vpop.permute.xlu0 %2811
        %2813 = vrot.lane.b32.xlu0 %v2810, 126
        %v2814 = vpop.permute.xlu0 %2813
        %v2817 = vadd.f32 %v2796, %v2812
        %v2818 = vadd.f32 %v2797, %v2814
        %s2819 = sld [smem:[#allocation9 + $0x5e]]
        %v2820 = vstv %s2819
        %v2821 = vmul.f32 %v2820, %v993
        %v2822 = vmul.f32 %v2820, %v1000
        %v2823 = vmul.f32 %v2820, %v1006
        %v2827 = vrot.slane %v2821, 6
        %v2828 = vrot.slane %v2822, 6
        %v2829 = vsel %vm466, %v2827, %v2828
        %v2830 = vrot.slane %v2823, 6
        %v2831 = vsel %vm466, %v2828, %v2830
        %2832 = vrot.lane.b32.xlu0 %v2829, 125
        %v2833 = vpop.permute.xlu0 %2832
        %2834 = vrot.lane.b32.xlu0 %v2831, 125
        %v2835 = vpop.permute.xlu0 %2834
        %v2838 = vadd.f32 %v2817, %v2833
        %v2839 = vadd.f32 %v2818, %v2835
        %s2840 = sld [smem:[#allocation9 + $0x5f]]
        %v2841 = vstv %s2840
        %v2842 = vmul.f32 %v2841, %v993
        %v2843 = vmul.f32 %v2841, %v1000
        %v2844 = vmul.f32 %v2841, %v1006
        %v2848 = vrot.slane %v2842, 6
        %v2849 = vrot.slane %v2843, 6
        %v2850 = vsel %vm466, %v2848, %v2849
        %v2851 = vrot.slane %v2844, 6
        %v2852 = vsel %vm466, %v2849, %v2851
        %2853 = vrot.lane.b32.xlu0 %v2850, 124
        %v2854 = vpop.permute.xlu0 %2853
        %2855 = vrot.lane.b32.xlu0 %v2852, 124
        %v2856 = vpop.permute.xlu0 %2855
        %v2859 = vadd.f32 %v2838, %v2854
        %v2860 = vadd.f32 %v2839, %v2856
        %s2861 = sld [smem:[#allocation9 + $0x60]]
        %v2862 = vstv %s2861
        %v2863 = vmul.f32 %v2862, %v993
        %v2864 = vmul.f32 %v2862, %v1000
        %v2865 = vmul.f32 %v2862, %v1006
        %v2869 = vrot.slane %v2863, 6
        %v2870 = vrot.slane %v2864, 6
        %v2871 = vsel %vm466, %v2869, %v2870
        %v2872 = vrot.slane %v2865, 6
        %v2873 = vsel %vm466, %v2870, %v2872
        %2874 = vrot.lane.b32.xlu0 %v2871, 123
        %v2875 = vpop.permute.xlu0 %2874
        %2876 = vrot.lane.b32.xlu0 %v2873, 123
        %v2877 = vpop.permute.xlu0 %2876
        %v2880 = vadd.f32 %v2859, %v2875
        %v2881 = vadd.f32 %v2860, %v2877
        %s2882 = sld [smem:[#allocation9 + $0x61]]
        %v2883 = vstv %s2882
        %v2884 = vmul.f32 %v2883, %v993
        %v2885 = vmul.f32 %v2883, %v1000
        %v2886 = vmul.f32 %v2883, %v1006
        %v2890 = vrot.slane %v2884, 6
        %v2891 = vrot.slane %v2885, 6
        %v2892 = vsel %vm466, %v2890, %v2891
        %v2893 = vrot.slane %v2886, 6
        %v2894 = vsel %vm466, %v2891, %v2893
        %2895 = vrot.lane.b32.xlu0 %v2892, 122
        %v2896 = vpop.permute.xlu0 %2895
        %2897 = vrot.lane.b32.xlu0 %v2894, 122
        %v2898 = vpop.permute.xlu0 %2897
        %v2901 = vadd.f32 %v2880, %v2896
        %v2902 = vadd.f32 %v2881, %v2898
        %v2903 = vxor.u32 %v2901, 2147483648
        %v2904 = vxor.u32 %v2902, 2147483648
        %v2905 = vmul.f32 %v2903, 1.442695
        %v2906 = vpow.pop %v2905
        %v2907 = vmul.f32 %v2904, 1.442695
        %v2908 = vpow.pop %v2907
        %v2909 = vadd.f32 %v2906, 1.0
        %v2910 = vadd.f32 %v2908, 1.0
        %v2911 = vrcp.pop %v2909
        %v2912 = vmul.f32 1.0, %v2911
        %v2913 = vrcp.pop %v2910
        %v2914 = vmul.f32 1.0, %v2913
        %v2916 = vrot.slane %v2912, 1
        %2917 = vrot.lane.b32.xlu0 %v2916, 16
        %v2918 = vpop.permute.xlu0 %2917
        %v2920 = vrot.slane %v2912, 2
        %2921 = vrot.lane.b32.xlu0 %v2920, 32
        %v2922 = vpop.permute.xlu0 %2921
        %v2924 = vrot.slane %v2912, 3
        %2925 = vrot.lane.b32.xlu0 %v2924, 48
        %v2926 = vpop.permute.xlu0 %2925
        %v2928 = vrot.slane %v2912, 4
        %2929 = vrot.lane.b32.xlu0 %v2928, 64
        %v2930 = vpop.permute.xlu0 %2929
        %v2932 = vrot.slane %v2912, 5
        %2933 = vrot.lane.b32.xlu0 %v2932, 80
        %v2934 = vpop.permute.xlu0 %2933
        %v2936 = vrot.slane %v2912, 6
        %2937 = vrot.lane.b32.xlu0 %v2936, 96
        %v2938 = vpop.permute.xlu0 %2937
        %v2940 = vrot.slane %v2912, 7
        %2941 = vrot.lane.b32.xlu0 %v2940, 112
        %v2942 = vpop.permute.xlu0 %2941
        %v2945 = vrot.slane %v2914, 1
        %2946 = vrot.lane.b32.xlu0 %v2945, 16
        %v2947 = vpop.permute.xlu0 %2946
        %v2949 = vrot.slane %v2914, 2
        %2950 = vrot.lane.b32.xlu0 %v2949, 32
        %v2951 = vpop.permute.xlu0 %2950
        %v2953 = vrot.slane %v2914, 3
        %2954 = vrot.lane.b32.xlu0 %v2953, 48
        %v2955 = vpop.permute.xlu0 %2954
        %v2957 = vrot.slane %v2914, 4
        %2958 = vrot.lane.b32.xlu0 %v2957, 64
        %v2959 = vpop.permute.xlu0 %2958
        %v2961 = vrot.slane %v2914, 5
        %2962 = vrot.lane.b32.xlu0 %v2961, 80
        %v2963 = vpop.permute.xlu0 %2962
        %v2965 = vrot.slane %v2914, 6
        %2966 = vrot.lane.b32.xlu0 %v2965, 96
        %v2967 = vpop.permute.xlu0 %2966
        %v2969 = vrot.slane %v2914, 7
        %2970 = vrot.lane.b32.xlu0 %v2969, 112
        %v2971 = vpop.permute.xlu0 %2970
        %vm2973 = vcmask 130048
        %v2974 = vsel %vm2973, %v2912, %v2918
        %v2975 = vsel %vm374, %v2974, %v2922
        %vm2976 = vcmask 392192
        %v2977 = vsel %vm2976, %v2975, %v2926
        %vm2978 = vcmask 523264
        %v2979 = vsel %vm2978, %v2977, %v2930
        %vm2980 = vcmask 654336
        %v2981 = vsel %vm2980, %v2979, %v2934
        %vm2982 = vcmask 785408
        %v2983 = vsel %vm2982, %v2981, %v2938
        %vm2984 = vcmask 916480
        %v2985 = vsel %vm2984, %v2983, %v2942
        %v2986 = vsel %vm2973, %v2914, %v2947
        %v2987 = vsel %vm374, %v2986, %v2951
        %v2988 = vsel %vm2976, %v2987, %v2955
        %v2989 = vsel %vm2978, %v2988, %v2959
        %v2990 = vsel %vm2980, %v2989, %v2963
        %v2991 = vsel %vm2982, %v2990, %v2967
        %v2992 = vsel %vm2984, %v2991, %v2971
        %v2993 = vlaneseq
        %v2994 = vshrl.u32 %v2993, 7
        %v2995 = vsub.s32 0, %v2994
        %v2996 = vrot.slane %v2985, %v2995
        %v2997 = vlaneseq
        %v2998 = vshrl.u32 %v2997, 7
        %v2999 = vsub.s32 0, %v2998
        %v3000 = vrot.slane %v2992, %v2999
        %v3001 = vmul.f32 %v619, %v2996
        %v3002 = vmul.f32 %v620, %v3000
        %v3003 = vmul.f32 %v621, %v2996
        %v3004 = vmul.f32 %v622, %v3000
        %v3005 = vmul.f32 %v623, %v2996
        %v3006 = vmul.f32 %v624, %v3000
        %v3007 = vmul.f32 %v625, %v2996
        %v3008 = vmul.f32 %v626, %v3000
        %v3009 = vpack.c.bf16 %v3003, %v3001
        %v3010 = vpack.c.bf16 %v3004, %v3002
        %v3011 = vpack.c.bf16 %v3007, %v3005
        %v3012 = vpack.c.bf16 %v3008, %v3006
        %v3017 = vunpack.c.l.b16 %v3009
        %v3018 = vunpack.c.l.b16 %v3010
        %v3019 = vunpack.c.h.b16 %v3009
        %v3020 = vunpack.c.h.b16 %v3010
        %v3021 = vunpack.c.l.b16 %v3011
        %v3022 = vunpack.c.l.b16 %v3012
        %v3023 = vunpack.c.h.b16 %v3011
        %v3024 = vunpack.c.h.b16 %v3012
        %v3025 = vpack.c.b16 %v3018, %v3017
        %v3026 = vpack.c.b16 %v3020, %v3019
        %v3027 = vpack.c.b16 %v3022, %v3021
        %v3028 = vpack.c.b16 %v3024, %v3023
        %3033 = vst [vmem:[%s254] sm:$0xff] %v3025
        %3034 = vst [vmem:[%s254 + $0x8] sm:$0xff] %v3026
        %3035 = vst [vmem:[%s254 + $0x10] sm:$0xff] %v3027
        %3036 = vst [vmem:[%s254 + $0x18] sm:$0xff] %v3028
        %s3037 = sand.u32 %s120, 1
        %s3038 = scalar_lea.sflag [#allocation4], %s3037
        %s3039 = sand.u32 %s120, 1
        %s3040 = smul.addr %s3039, 32
        %s3041 = scalar_lea.vmem [#allocation10], %s3040
        // Predicated region
        $region53: #{tpu_custom_call.1} parent=35 // pred_check
          %p3042 = pneg %p130
        $region54: #{tpu_custom_call.1} parent=35 // pred_check_branch
          %3044 = sbr.rel (%p3042) target = $region56
        $region55: #{tpu_custom_call.1} parent=35 // pred_region
          %s3046 = ssub.s32 512, 512
          %3047 = vsyncadd %s3038, %s3046
          %s3048 = smul.addr %s23, 8
          %s3049 = smul.addr %s3048, 64
          %s3050 = scalar_lea.hbm %s4, %s3049
          %s3051 = sshll.u32 %s3041, 4
          %s3052 = int_to_ptr.vmem [resolvable:$true] %s3051
          %3057 = dma.vmem_to_hbm [thread:$0]  %s3052, 512, %s3050, %s3038, 128, 128, 8
        $region56: #{tpu_custom_call.1} parent=35 // pred_fallthru
          _
      $region36: #{tpu_custom_call.1} parent=5 // pred_fallthru
        _
      %p3058 = scmp.le.s32.totalorder 2, %s18
      // Predicated region
      $region57: #{tpu_custom_call.1} parent=5 // pred_check
        %p3059 = pneg %p3058
      $region58: #{tpu_custom_call.1} parent=5 // pred_check_branch
        %3061 = sbr.rel (%p3059) target = $region60
      $region59: #{tpu_custom_call.1} parent=5 // pred_region
        %s3062 = ssub.s32 %s18, 2
        // Predicated region
        $region61: #{tpu_custom_call.1} parent=59 // pred_check
          %p3063 = pneg %p136
        $region62: #{tpu_custom_call.1} parent=59 // pred_check_branch
          %3065 = sbr.rel (%p3063) target = $region64
        $region63: #{tpu_custom_call.1} parent=59 // pred_region
          %s3066 = sand.u32 %s121, 1
          %s3067 = scalar_lea.sflag [#allocation4], %s3066
          %s3068 = sand.u32 %s121, 1
          %s3069 = smul.addr %s3068, 32
          %s3070 = scalar_lea.vmem [#allocation10], %s3069
          %3071 = dma.done %s3067, 512
        $region64: #{tpu_custom_call.1} parent=59 // pred_fallthru
          _
      $region60: #{tpu_custom_call.1} parent=5 // pred_fallthru
        _
    $region6: #{tpu_custom_call.1} parent=1 // loop_footer
      %s22 = sadd.s32 1, %s18
    $region7: #{tpu_custom_call.1} parent=1 // loop_footer_branch
      %17 = sbr.rel target = $region3
    $region8: #{tpu_custom_call.1} parent=1 // loop_exit
      _
    %3072 = vsyncpa [#allocation3], 1
    %s3073 = scalar_lea.sflag [#allocation3], 1
    %3074 = vsyncpa %s3073, 1
    %3075 = vsyncpa [#allocation7], 1
    %3076 = vsyncpa [#allocation4], 1
    %s3077 = scalar_lea.sflag [#allocation4], 1
    %3078 = vsyncpa %s3077, 1
    %3079 = vsyncpa [#allocation5], 1
    %s3080 = scalar_lea.sflag [#allocation5], 1
    %3081 = vsyncpa %s3080, 1

</llo_original>
